<compile_context>
chip_gen: v7x
topology: tpu7x:2x2x1
jax: 0.10.0
libtpu: 0.0.40
codegen_flags: <defaults>
</compile_context>

<pallas_src>
import math

import numpy as np
import jax
import jax.numpy as jnp
from jax import lax
from jax.experimental import pallas as pl
from jax.experimental.pallas import tpu as pltpu

# ------------------------- hyperparameters ("args") -------------------------
STATE_DIM = 16            # per-limb observation size
ACTION_DIM = 1            # per-limb action size (== decoder output size)
NUM_LIMBS = 8             # sequence length S (set via change_morphology)
BATCH_SIZE = 8            # B
EMBED = 32                # args.attention_embedding_size (ninp)
NUM_HEADS = 2             # args.attention_heads
FFN_HIDDEN = 64           # args.attention_hidden_size (nhid)
NUM_LAYERS = 2            # args.attention_layers
CONDITION_DECODER = True  # args.condition_decoder_on_features
TRANSFORMER_NORM = True   # args.transformer_norm

FEAT = STATE_DIM + ACTION_DIM
HEAD_DIM = EMBED // NUM_HEADS
LN_EPS = 1e-5
MASK_NEG = -1e30          # additive bias for cross-batch attention entries

# packed (kernel-layout) parameter names, all with a leading critic axis of 2
PACKED_ORDER = [
    "enc_w", "enc_b",
    "wq", "bq", "wk", "bk", "wv", "bv",
    "wo", "bo",
    "norm1_w", "norm1_b",
    "lin1_w", "lin1_b", "lin2_w", "lin2_b",
    "norm2_w", "norm2_b",
    "fnorm_w", "fnorm_b",
    "dec_wx", "dec_wtok", "dec_b",
]


# ------------------------------- Pallas kernel ------------------------------
def _layer_norm(x, w, b):
    # LayerNorm over last dim, biased variance, eps=1e-5 (PyTorch default). f32.
    mu = jnp.mean(x, axis=-1, keepdims=True)
    xc = x - mu
    var = jnp.mean(xc * xc, axis=-1, keepdims=True)
    return xc * lax.rsqrt(var + LN_EPS) * w + b


def _fused_critic_kernel(
    src_ref,                                   # (B, S, F)              f32
    bias_ref,                                  # (B*S, B*S)             f32 (0 / -1e30)
    enc_w_ref, enc_b_ref,                      # (F, E) bf16, (1, E) f32  [sqrt(E) folded]
    wq_ref, bq_ref,                            # (L*H, E, Dh) bf16, (L*H, 1, Dh) f32 [1/sqrt(Dh) folded]
    wk_ref, bk_ref,                            # (L*H, E, Dh) bf16, (L*H, 1, Dh) f32
    wv_ref, bv_ref,                            # (L*H, E, Dh) bf16, (L*H, 1, Dh) f32
    wo_ref, bo_ref,                            # (L*H, Dh, E) bf16, (L, 1, E) f32
    norm1_w_ref, norm1_b_ref,                  # (L, 1, E) f32
    lin1_w_ref, lin1_b_ref,                    # (L, E, nhid) bf16, (L, 1, nhid) f32
    lin2_w_ref, lin2_b_ref,                    # (L, nhid, E) bf16, (L, 1, E) f32
    norm2_w_ref, norm2_b_ref,                  # (L, 1, E) f32
    fnorm_w_ref, fnorm_b_ref,                  # (1, E) f32
    dec_wx_ref, dec_wtok_ref, dec_b_ref,       # (1, E), (1, F), (1, 1) f32
    out_ref,                                   # (B, S)                 f32
):
    B, S, F = src_ref.shape
    E = enc_w_ref.shape[1]
    L = norm1_w_ref.shape[0]
    H = NUM_HEADS

    src = src_ref[...]                          # (B, S, F) f32 (raw features)
    tok = src.reshape(B * S, F)
    bias = bias_ref[...]                        # (B*S, B*S) block-diag additive mask

    # encoder: Linear(F, E) with sqrt(ninp) pre-folded into the weights.
    x = jnp.dot(tok.astype(jnp.bfloat16), enc_w_ref[...],
                preferred_element_type=jnp.float32) + enc_b_ref[...]   # (B*S, E) f32

    # q @ k^T  (contract last dims of both operands)
    qk_dims = (((1,), (1,)), ((), ()))

    for l in range(L):                          # static unroll over layers
        xb = x.astype(jnp.bfloat16)

        # ---- multi-head self attention (post-norm encoder layer) ----
        # Batch is flattened into rows; cross-batch pairs are masked out with
        # the precomputed additive bias, so everything is plain 2-D matmuls.
        attn = jnp.zeros((B * S, E), jnp.float32)
        for h in range(H):                      # static unroll; per-head weight blocks
            idx = l * H + h
            q = jnp.dot(xb, wq_ref[idx], preferred_element_type=jnp.float32) + bq_ref[idx]
            k = jnp.dot(xb, wk_ref[idx], preferred_element_type=jnp.float32) + bk_ref[idx]
            v = jnp.dot(xb, wv_ref[idx], preferred_element_type=jnp.float32) + bv_ref[idx]

            sc = lax.dot_general(q.astype(jnp.bfloat16), k.astype(jnp.bfloat16),
                                 qk_dims, preferred_element_type=jnp.float32)
            sc = sc + bias                                           # (B*S, B*S)
            sc = sc - jnp.max(sc, axis=-1, keepdims=True)
            p = jnp.exp(sc)                                          # masked entries -> 0
            p = p * pl.reciprocal(jnp.sum(p, axis=-1, keepdims=True), approx=True)

            oh = jnp.dot(p.astype(jnp.bfloat16), v.astype(jnp.bfloat16),
                         preferred_element_type=jnp.float32)         # (B*S, Dh)
            attn = attn + jnp.dot(oh.astype(jnp.bfloat16), wo_ref[idx],
                                  preferred_element_type=jnp.float32)
        attn = attn + bo_ref[l]

        x = _layer_norm(x + attn, norm1_w_ref[l], norm1_b_ref[l])

        # ---- feed-forward (ReLU) ----
        ff = jnp.dot(x.astype(jnp.bfloat16), lin1_w_ref[l],
                     preferred_element_type=jnp.float32) + lin1_b_ref[l]
        ff = jnp.maximum(ff, 0.0)
        ff = jnp.dot(ff.astype(jnp.bfloat16), lin2_w_ref[l],
                     preferred_element_type=jnp.float32) + lin2_b_ref[l]

        x = _layer_norm(x + ff, norm2_w_ref[l], norm2_b_ref[l])

    if TRANSFORMER_NORM:
        x = _layer_norm(x, fnorm_w_ref[...], fnorm_b_ref[...])

    # decoder: ACTION_DIM == 1 -> VPU multiply + lane reduce (no concat, no N=1 MXU pass).
    x3 = x.reshape(B, S, E)
    y = jnp.sum(x3 * dec_wx_ref[...], axis=-1)                 # (B, S)
    if CONDITION_DECODER:
        y = y + jnp.sum(src * dec_wtok_ref[...], axis=-1)
    out_ref[...] = y + dec_b_ref[...]                          # (1,1) broadcasts


def _critic_param_spec(arr):
    """BlockSpec selecting one critic (leading axis) per grid point, rest full."""
    nd = arr.ndim
    return pl.BlockSpec((None,) + tuple(arr.shape[1:]),
                        lambda c, _nd=nd: (c,) + (0,) * (_nd - 1))


def run_fused_critics(inpt, attn_bias, packed):
    """inpt: (B, S, F) f32; attn_bias: (B*S, B*S) f32 block-diag mask;
    packed: dict of weights with leading critic axis (=2).
    Returns (2, B, S) f32 — critic1 and critic2 outputs."""
    B, S, F = inpt.shape
    args = [inpt, attn_bias] + [packed[k] for k in PACKED_ORDER]
    in_specs = [pl.BlockSpec((B, S, F), lambda c: (0, 0, 0)),          # shared input
                pl.BlockSpec((B * S, B * S), lambda c: (0, 0))]        # shared mask
    in_specs += [_critic_param_spec(packed[k]) for k in PACKED_ORDER]
    return pl.pallas_call(
        _fused_critic_kernel,
        grid=(2,),
        out_shape=jax.ShapeDtypeStruct((2, B, S), jnp.float32),
        in_specs=in_specs,
        out_specs=pl.BlockSpec((None, B, S), lambda c: (c, 0, 0)),
        compiler_params=pltpu.CompilerParams(
            dimension_semantics=("parallel",)),   # v7x: one critic per TensorCore
    )(*args)


def make_attn_bias(batch, seq):
    """Block-diagonal additive attention mask: 0 within a batch element,
    MASK_NEG across batch elements.  Built once on the host."""
    r = np.arange(batch * seq) // seq
    bias = np.where(r[:, None] == r[None, :], 0.0, MASK_NEG).astype(np.float32)
    return jnp.asarray(bias)


# ------------------------------ parameter init ------------------------------
def init_critic_params(key):
    """Deterministic synthetic weights in PyTorch-equivalent layout
    (Linear weights pre-transposed to (in, out))."""
    ks = jax.random.split(key, 12)

    def w(k, shape, scale=0.1):
        return scale * jax.random.normal(k, shape, dtype=jnp.float32)

    dec_in = EMBED + (FEAT if CONDITION_DECODER else 0)
    return {
        "enc_w": w(ks[0], (FEAT, EMBED)),
        "enc_b": w(ks[1], (1, EMBED)),
        "in_proj_w": w(ks[2], (NUM_LAYERS, EMBED, 3 * EMBED)),
        "in_proj_b": w(ks[3], (NUM_LAYERS, 1, 3 * EMBED)),
        "out_proj_w": w(ks[4], (NUM_LAYERS, EMBED, EMBED)),
        "out_proj_b": w(ks[5], (NUM_LAYERS, 1, EMBED)),
        "norm1_w": jnp.ones((NUM_LAYERS, 1, EMBED), jnp.float32),
        "norm1_b": jnp.zeros((NUM_LAYERS, 1, EMBED), jnp.float32),
        "lin1_w": w(ks[6], (NUM_LAYERS, EMBED, FFN_HIDDEN)),
        "lin1_b": w(ks[7], (NUM_LAYERS, 1, FFN_HIDDEN)),
        "lin2_w": w(ks[8], (NUM_LAYERS, FFN_HIDDEN, EMBED)),
        "lin2_b": w(ks[9], (NUM_LAYERS, 1, EMBED)),
        "norm2_w": jnp.ones((NUM_LAYERS, 1, EMBED), jnp.float32),
        "norm2_b": jnp.zeros((NUM_LAYERS, 1, EMBED), jnp.float32),
        "fnorm_w": jnp.ones((1, EMBED), jnp.float32),
        "fnorm_b": jnp.zeros((1, EMBED), jnp.float32),
        "dec_w": w(ks[10], (dec_in, ACTION_DIM)),
        "dec_b": w(ks[11], (1, ACTION_DIM)),
    }


def pack_critic_params(p1, p2):
    """One-time transform: stack the two critics, fold constant scalars into
    weights, split per-head blocks, split the decoder concat, cast MXU operands
    to bfloat16."""
    E, H, Dh, L = EMBED, NUM_HEADS, HEAD_DIM, NUM_LAYERS

    def stack(k):
        return jnp.stack([p1[k], p2[k]], axis=0)

    sqrt_e = np.float32(math.sqrt(E))
    scale = np.float32(1.0 / math.sqrt(Dh))

    enc_w = stack("enc_w") * sqrt_e                       # (2, F, E)
    enc_b = stack("enc_b") * sqrt_e                       # (2, 1, E)

    ipw = stack("in_proj_w")                              # (2, L, E, 3E)
    ipb = stack("in_proj_b")                              # (2, L, 1, 3E)
    wq_full = ipw[..., 0 * E:1 * E] * scale
    wk_full = ipw[..., 1 * E:2 * E]
    wv_full = ipw[..., 2 * E:3 * E]
    bq_full = ipb[..., 0 * E:1 * E] * scale
    bk_full = ipb[..., 1 * E:2 * E]
    bv_full = ipb[..., 2 * E:3 * E]

    def split_heads_w(wf):   # (2, L, E, H*Dh) -> (2, L*H, E, Dh)
        wf = wf.reshape(2, L, E, H, Dh)
        wf = jnp.transpose(wf, (0, 1, 3, 2, 4))
        return wf.reshape(2, L * H, E, Dh)

    def split_heads_b(bf):   # (2, L, 1, H*Dh) -> (2, L*H, 1, Dh)
        bf = bf.reshape(2, L, 1, H, Dh)
        bf = jnp.transpose(bf, (0, 1, 3, 2, 4))
        return bf.reshape(2, L * H, 1, Dh)

    opw = stack("out_proj_w")                             # (2, L, E, E)
    wo = opw.reshape(2, L * H, Dh, E)                     # per-head contraction blocks
    bo = stack("out_proj_b")                              # (2, L, 1, E)

    dec_w = stack("dec_w")                                # (2, dec_in, 1)
    if CONDITION_DECODER:
        dec_wx = jnp.transpose(dec_w[:, :E, :], (0, 2, 1))        # (2, 1, E)
        dec_wtok = jnp.transpose(dec_w[:, E:, :], (0, 2, 1))      # (2, 1, F)
    else:
        dec_wx = jnp.transpose(dec_w, (0, 2, 1))
        dec_wtok = jnp.zeros((2, 1, FEAT), jnp.float32)
    dec_b = stack("dec_b").reshape(2, 1, 1)

    bf16 = lambda a: a.astype(jnp.bfloat16)
    return {
        "enc_w": bf16(enc_w), "enc_b": enc_b,
        "wq": bf16(split_heads_w(wq_full)), "bq": split_heads_b(bq_full),
        "wk": bf16(split_heads_w(wk_full)), "bk": split_heads_b(bk_full),
        "wv": bf16(split_heads_w(wv_full)), "bv": split_heads_b(bv_full),
        "wo": bf16(wo), "bo": bo,
        "norm1_w": stack("norm1_w"), "norm1_b": stack("norm1_b"),
        "lin1_w": bf16(stack("lin1_w")), "lin1_b": stack("lin1_b"),
        "lin2_w": bf16(stack("lin2_w")), "lin2_b": stack("lin2_b"),
        "norm2_w": stack("norm2_w"), "norm2_b": stack("norm2_b"),
        "fnorm_w": stack("fnorm_w"), "fnorm_b": stack("fnorm_b"),
        "dec_wx": dec_wx, "dec_wtok": dec_wtok, "dec_b": dec_b,
    }


# --------------------------- policy forward (glue) ---------------------------
@jax.jit
def critic_transformer_policy_forward(state, action, attn_bias, packed):
    """Mirrors CriticTransformerPolicy.forward(state, action) -> (x1, x2)."""
    assert state.shape[1] == STATE_DIM * NUM_LIMBS
    st = state.reshape(BATCH_SIZE, NUM_LIMBS, -1)      # (B, S, state_dim)
    ac = action.reshape(BATCH_SIZE, NUM_LIMBS, -1)     # (B, S, action_dim)
    inpt = jnp.concatenate([st, ac], axis=-1)          # (B, S, F)
    x12 = run_fused_critics(inpt, attn_bias, packed)   # (2, B, S)
    # PyTorch: squeeze(critic(inpt).permute(1,0,2)) -> (B, S) since action_dim==1
    return x12[0], x12[1]


# ------------------------------ pure-JAX reference ---------------------------
def _ref_ln(x, w, b):
    mu = jnp.mean(x, axis=-1, keepdims=True)
    var = jnp.mean((x - mu) ** 2, axis=-1, keepdims=True)
    return (x - mu) / jnp.sqrt(var + LN_EPS) * w + b


def reference_transformer(inpt, p):
    B, S, F = inpt.shape
    tok = inpt.reshape(B * S, F)
    x = tok @ p["enc_w"] + p["enc_b"]
    x = x * math.sqrt(EMBED)
    for l in range(NUM_LAYERS):
        qkv = x @ p["in_proj_w"][l] + p["in_proj_b"][l]
        q = qkv[:, :EMBED].reshape(B, S, NUM_HEADS, HEAD_DIM)
        k = qkv[:, EMBED:2 * EMBED].reshape(B, S, NUM_HEADS, HEAD_DIM)
        v = qkv[:, 2 * EMBED:].reshape(B, S, NUM_HEADS, HEAD_DIM)
        sc = jnp.einsum("bihd,bjhd->bhij", q, k) / math.sqrt(HEAD_DIM)
        pr = jax.nn.softmax(sc, axis=-1)
        oh = jnp.einsum("bhij,bjhd->bihd", pr, v).reshape(B * S, EMBED)
        attn = oh @ p["out_proj_w"][l] + p["out_proj_b"][l]
        x = _ref_ln(x + attn, p["norm1_w"][l], p["norm1_b"][l])
        ff = jnp.maximum(x @ p["lin1_w"][l] + p["lin1_b"][l], 0.0)
        ff = ff @ p["lin2_w"][l] + p["lin2_b"][l]
        x = _ref_ln(x + ff, p["norm2_w"][l], p["norm2_b"][l])
    if TRANSFORMER_NORM:
        x = _ref_ln(x, p["fnorm_w"], p["fnorm_b"])
    if CONDITION_DECODER:
        x = jnp.concatenate([x, tok], axis=-1)
    y = x @ p["dec_w"] + p["dec_b"]
    return y.reshape(B, S, ACTION_DIM)


# ------------------------------------ main -----------------------------------
if __name__ == "__main__":
    key = jax.random.PRNGKey(0)
    k_state, k_action, k_c1, k_c2 = jax.random.split(key, 4)

    state = jax.random.normal(k_state, (BATCH_SIZE, STATE_DIM * NUM_LIMBS), jnp.float32)
    action = jax.random.normal(k_action, (BATCH_SIZE, ACTION_DIM * NUM_LIMBS), jnp.float32)
    params1 = init_critic_params(k_c1)
    params2 = init_critic_params(k_c2)

    # one-time weight packing (constant folding, head splitting, bf16 MXU operands)
    packed = pack_critic_params(params1, params2)
    attn_bias = make_attn_bias(BATCH_SIZE, NUM_LIMBS)

    x1, x2 = critic_transformer_policy_forward(state, action, attn_bias, packed)
    x1 = jax.block_until_ready(x1)
    x2 = jax.block_until_ready(x2)

    # correctness check against pure-JAX f32 reference (tolerance widened to
    # cover bf16 MXU operands + approx reciprocal in the kernel)
    st = state.reshape(BATCH_SIZE, NUM_LIMBS, -1)
    ac = action.reshape(BATCH_SIZE, NUM_LIMBS, -1)
    inpt = jnp.concatenate([st, ac], axis=-1)
    r1 = jnp.squeeze(reference_transformer(inpt, params1), axis=-1)
    r2 = jnp.squeeze(reference_transformer(inpt, params2), axis=-1)
    assert x1.shape == r1.shape and x2.shape == r2.shape
    assert jnp.allclose(x1, r1, atol=5e-2, rtol=5e-2), "critic1 mismatch"
    assert jnp.allclose(x2, r2, atol=5e-2, rtol=5e-2), "critic2 mismatch"

    print("KERNEL_OK")
</pallas_src>

<mosaic_0001>
module attributes {stable_mosaic.version = 11 : i64} {
  func.func @_fused_critic_kernel(%arg0: i32, %arg1: memref<8x8x17xf32, #tpu.memory_space<vmem>>, %arg2: memref<64x64xf32, #tpu.memory_space<vmem>>, %arg3: memref<1x17x32xbf16, #tpu.memory_space<vmem>>, %arg4: memref<1x1x32xf32, #tpu.memory_space<vmem>>, %arg5: memref<1x4x32x16xbf16, #tpu.memory_space<vmem>>, %arg6: memref<1x4x1x16xf32, #tpu.memory_space<vmem>>, %arg7: memref<1x4x32x16xbf16, #tpu.memory_space<vmem>>, %arg8: memref<1x4x1x16xf32, #tpu.memory_space<vmem>>, %arg9: memref<1x4x32x16xbf16, #tpu.memory_space<vmem>>, %arg10: memref<1x4x1x16xf32, #tpu.memory_space<vmem>>, %arg11: memref<1x4x16x32xbf16, #tpu.memory_space<vmem>>, %arg12: memref<1x2x1x32xf32, #tpu.memory_space<vmem>>, %arg13: memref<1x2x1x32xf32, #tpu.memory_space<vmem>>, %arg14: memref<1x2x1x32xf32, #tpu.memory_space<vmem>>, %arg15: memref<1x2x32x64xbf16, #tpu.memory_space<vmem>>, %arg16: memref<1x2x1x64xf32, #tpu.memory_space<vmem>>, %arg17: memref<1x2x64x32xbf16, #tpu.memory_space<vmem>>, %arg18: memref<1x2x1x32xf32, #tpu.memory_space<vmem>>, %arg19: memref<1x2x1x32xf32, #tpu.memory_space<vmem>>, %arg20: memref<1x2x1x32xf32, #tpu.memory_space<vmem>>, %arg21: memref<1x1x32xf32, #tpu.memory_space<vmem>>, %arg22: memref<1x1x32xf32, #tpu.memory_space<vmem>>, %arg23: memref<1x1x32xf32, #tpu.memory_space<vmem>>, %arg24: memref<1x1x17xf32, #tpu.memory_space<vmem>>, %arg25: memref<1x1x1xf32, #tpu.memory_space<vmem>>, %arg26: memref<1x8x8xf32, #tpu.memory_space<vmem>>) attributes {dimension_semantics = [#tpu.dimension_semantics<parallel>], iteration_bounds = array<i64: 2>, scalar_prefetch = 0 : i64, scratch_operands = 0 : i64, tpu.core_type = #tpu.core_type<tc>, window_params = [{pipeline_mode = #tpu.pipeline_mode<synchronous>, transform_indices = @transform_0, window_bounds = array<i64: 8, 8, 17>}, {pipeline_mode = #tpu.pipeline_mode<synchronous>, transform_indices = @transform_1, window_bounds = array<i64: 64, 64>}, {transform_indices = @transform_2, window_bounds = array<i64: 1, 17, 32>}, {transform_indices = @transform_3, window_bounds = array<i64: 1, 1, 32>}, {transform_indices = @transform_4, window_bounds = array<i64: 1, 4, 32, 16>}, {transform_indices = @transform_5, window_bounds = array<i64: 1, 4, 1, 16>}, {transform_indices = @transform_6, window_bounds = array<i64: 1, 4, 32, 16>}, {transform_indices = @transform_7, window_bounds = array<i64: 1, 4, 1, 16>}, {transform_indices = @transform_8, window_bounds = array<i64: 1, 4, 32, 16>}, {transform_indices = @transform_9, window_bounds = array<i64: 1, 4, 1, 16>}, {transform_indices = @transform_10, window_bounds = array<i64: 1, 4, 16, 32>}, {transform_indices = @transform_11, window_bounds = array<i64: 1, 2, 1, 32>}, {transform_indices = @transform_12, window_bounds = array<i64: 1, 2, 1, 32>}, {transform_indices = @transform_13, window_bounds = array<i64: 1, 2, 1, 32>}, {transform_indices = @transform_14, window_bounds = array<i64: 1, 2, 32, 64>}, {transform_indices = @transform_15, window_bounds = array<i64: 1, 2, 1, 64>}, {transform_indices = @transform_16, window_bounds = array<i64: 1, 2, 64, 32>}, {transform_indices = @transform_17, window_bounds = array<i64: 1, 2, 1, 32>}, {transform_indices = @transform_18, window_bounds = array<i64: 1, 2, 1, 32>}, {transform_indices = @transform_19, window_bounds = array<i64: 1, 2, 1, 32>}, {transform_indices = @transform_20, window_bounds = array<i64: 1, 1, 32>}, {transform_indices = @transform_21, window_bounds = array<i64: 1, 1, 32>}, {transform_indices = @transform_22, window_bounds = array<i64: 1, 1, 32>}, {transform_indices = @transform_23, window_bounds = array<i64: 1, 1, 17>}, {transform_indices = @transform_24, window_bounds = array<i64: 1, 1, 1>}, {transform_indices = @transform_25, window_bounds = array<i64: 1, 8, 8>}]} {
    %c0 = arith.constant 0 : index
    %c0_0 = arith.constant 0 : index
    %c0_1 = arith.constant 0 : index
    %0 = vector.load %arg1[%c0, %c0_0, %c0_1] : memref<8x8x17xf32, #tpu.memory_space<vmem>>, vector<8x8x17xf32>
    %1 = vector.shape_cast %0 : vector<8x8x17xf32> to vector<64x17xf32>
    %c0_2 = arith.constant 0 : index
    %c0_3 = arith.constant 0 : index
    %2 = vector.load %arg2[%c0_2, %c0_3] : memref<64x64xf32, #tpu.memory_space<vmem>>, vector<64x64xf32>
    %3 = arith.truncf %1 : vector<64x17xf32> to vector<64x17xbf16>
    %c0_4 = arith.constant 0 : index
    %c0_5 = arith.constant 0 : index
    %c0_6 = arith.constant 0 : index
    %4 = vector.load %arg3[%c0_4, %c0_5, %c0_6] : memref<1x17x32xbf16, #tpu.memory_space<vmem>>, vector<1x17x32xbf16>
    %5 = vector.shape_cast %4 : vector<1x17x32xbf16> to vector<17x32xbf16>
    %cst = arith.constant dense<0.000000e+00> : vector<64x32xf32>
    %6 = tpu.matmul %3, %5, %cst {dimension_numbers = #tpu.dot_dimension_numbers<[1], [0], [0], [1], [0, 0, 1, 1], [], []>} : vector<64x17xbf16>, vector<17x32xbf16>, vector<64x32xf32> -> vector<64x32xf32>
    %c0_7 = arith.constant 0 : index
    %c0_8 = arith.constant 0 : index
    %c0_9 = arith.constant 0 : index
    %7 = vector.load %arg4[%c0_7, %c0_8, %c0_9] : memref<1x1x32xf32, #tpu.memory_space<vmem>>, vector<1x1x32xf32>
    %8 = vector.shape_cast %7 : vector<1x1x32xf32> to vector<1x32xf32>
    %9 = vector.broadcast %8 : vector<1x32xf32> to vector<64x32xf32>
    %10 = arith.addf %6, %9 : vector<64x32xf32>
    %11 = arith.truncf %10 : vector<64x32xf32> to vector<64x32xbf16>
    %cst_10 = arith.constant 0.000000e+00 : f32
    %12 = vector.broadcast %cst_10 : f32 to vector<64x32xf32>
    %c0_11 = arith.constant 0 : index
    %c0_12 = arith.constant 0 : index
    %c0_13 = arith.constant 0 : index
    %c0_14 = arith.constant 0 : index
    %13 = vector.load %arg5[%c0_11, %c0_12, %c0_13, %c0_14] : memref<1x4x32x16xbf16, #tpu.memory_space<vmem>>, vector<1x1x32x16xbf16>
    %14 = vector.shape_cast %13 : vector<1x1x32x16xbf16> to vector<32x16xbf16>
    %cst_15 = arith.constant dense<0.000000e+00> : vector<64x16xf32>
    %15 = tpu.matmul %11, %14, %cst_15 {dimension_numbers = #tpu.dot_dimension_numbers<[1], [0], [0], [1], [0, 0, 1, 1], [], []>} : vector<64x32xbf16>, vector<32x16xbf16>, vector<64x16xf32> -> vector<64x16xf32>
    %c0_16 = arith.constant 0 : index
    %c0_17 = arith.constant 0 : index
    %c0_18 = arith.constant 0 : index
    %c0_19 = arith.constant 0 : index
    %16 = vector.load %arg6[%c0_16, %c0_17, %c0_18, %c0_19] : memref<1x4x1x16xf32, #tpu.memory_space<vmem>>, vector<1x1x1x16xf32>
    %17 = vector.shape_cast %16 : vector<1x1x1x16xf32> to vector<1x16xf32>
    %18 = vector.broadcast %17 : vector<1x16xf32> to vector<64x16xf32>
    %19 = arith.addf %15, %18 : vector<64x16xf32>
    %c0_20 = arith.constant 0 : index
    %c0_21 = arith.constant 0 : index
    %c0_22 = arith.constant 0 : index
    %c0_23 = arith.constant 0 : index
    %20 = vector.load %arg7[%c0_20, %c0_21, %c0_22, %c0_23] : memref<1x4x32x16xbf16, #tpu.memory_space<vmem>>, vector<1x1x32x16xbf16>
    %21 = vector.shape_cast %20 : vector<1x1x32x16xbf16> to vector<32x16xbf16>
    %cst_24 = arith.constant dense<0.000000e+00> : vector<64x16xf32>
    %22 = tpu.matmul %11, %21, %cst_24 {dimension_numbers = #tpu.dot_dimension_numbers<[1], [0], [0], [1], [0, 0, 1, 1], [], []>} : vector<64x32xbf16>, vector<32x16xbf16>, vector<64x16xf32> -> vector<64x16xf32>
    %c0_25 = arith.constant 0 : index
    %c0_26 = arith.constant 0 : index
    %c0_27 = arith.constant 0 : index
    %c0_28 = arith.constant 0 : index
    %23 = vector.load %arg8[%c0_25, %c0_26, %c0_27, %c0_28] : memref<1x4x1x16xf32, #tpu.memory_space<vmem>>, vector<1x1x1x16xf32>
    %24 = vector.shape_cast %23 : vector<1x1x1x16xf32> to vector<1x16xf32>
    %25 = vector.broadcast %24 : vector<1x16xf32> to vector<64x16xf32>
    %26 = arith.addf %22, %25 : vector<64x16xf32>
    %c0_29 = arith.constant 0 : index
    %c0_30 = arith.constant 0 : index
    %c0_31 = arith.constant 0 : index
    %c0_32 = arith.constant 0 : index
    %27 = vector.load %arg9[%c0_29, %c0_30, %c0_31, %c0_32] : memref<1x4x32x16xbf16, #tpu.memory_space<vmem>>, vector<1x1x32x16xbf16>
    %28 = vector.shape_cast %27 : vector<1x1x32x16xbf16> to vector<32x16xbf16>
    %cst_33 = arith.constant dense<0.000000e+00> : vector<64x16xf32>
    %29 = tpu.matmul %11, %28, %cst_33 {dimension_numbers = #tpu.dot_dimension_numbers<[1], [0], [0], [1], [0, 0, 1, 1], [], []>} : vector<64x32xbf16>, vector<32x16xbf16>, vector<64x16xf32> -> vector<64x16xf32>
    %c0_34 = arith.constant 0 : index
    %c0_35 = arith.constant 0 : index
    %c0_36 = arith.constant 0 : index
    %c0_37 = arith.constant 0 : index
    %30 = vector.load %arg10[%c0_34, %c0_35, %c0_36, %c0_37] : memref<1x4x1x16xf32, #tpu.memory_space<vmem>>, vector<1x1x1x16xf32>
    %31 = vector.shape_cast %30 : vector<1x1x1x16xf32> to vector<1x16xf32>
    %32 = vector.broadcast %31 : vector<1x16xf32> to vector<64x16xf32>
    %33 = arith.addf %29, %32 : vector<64x16xf32>
    %34 = arith.truncf %19 : vector<64x16xf32> to vector<64x16xbf16>
    %35 = arith.truncf %26 : vector<64x16xf32> to vector<64x16xbf16>
    %cst_38 = arith.constant dense<0.000000e+00> : vector<64x64xf32>
    %36 = tpu.matmul %34, %35, %cst_38 {dimension_numbers = #tpu.dot_dimension_numbers<[1], [1], [0], [0], [0, 0, 1, 0], [], []>} : vector<64x16xbf16>, vector<64x16xbf16>, vector<64x64xf32> -> vector<64x64xf32>
    %37 = arith.addf %36, %2 : vector<64x64xf32>
    %cst_39 = arith.constant dense<0xFF800000> : vector<64xf32>
    %38 = vector.multi_reduction <maximumf>, %37, %cst_39 [1] : vector<64x64xf32> to vector<64xf32>
    %39 = vector.shape_cast %38 : vector<64xf32> to vector<64x1xf32>
    %40 = vector.broadcast %39 : vector<64x1xf32> to vector<64x64xf32>
    %41 = arith.subf %37, %40 : vector<64x64xf32>
    %42 = math.exp %41 : vector<64x64xf32>
    %cst_40 = arith.constant dense<0.000000e+00> : vector<64xf32>
    %43 = vector.multi_reduction <add>, %42, %cst_40 [1] : vector<64x64xf32> to vector<64xf32>
    %44 = vector.shape_cast %43 : vector<64xf32> to vector<64x1xf32>
    %45 = tpu.reciprocal %44 {approx = true} : vector<64x1xf32> -> vector<64x1xf32>
    %46 = vector.broadcast %45 : vector<64x1xf32> to vector<64x64xf32>
    %47 = arith.mulf %42, %46 : vector<64x64xf32>
    %48 = arith.truncf %47 : vector<64x64xf32> to vector<64x64xbf16>
    %49 = arith.truncf %33 : vector<64x16xf32> to vector<64x16xbf16>
    %cst_41 = arith.constant dense<0.000000e+00> : vector<64x16xf32>
    %50 = tpu.matmul %48, %49, %cst_41 {dimension_numbers = #tpu.dot_dimension_numbers<[1], [0], [0], [1], [0, 0, 1, 1], [], []>} : vector<64x64xbf16>, vector<64x16xbf16>, vector<64x16xf32> -> vector<64x16xf32>
    %51 = arith.truncf %50 : vector<64x16xf32> to vector<64x16xbf16>
    %c0_42 = arith.constant 0 : index
    %c0_43 = arith.constant 0 : index
    %c0_44 = arith.constant 0 : index
    %c0_45 = arith.constant 0 : index
    %52 = vector.load %arg11[%c0_42, %c0_43, %c0_44, %c0_45] : memref<1x4x16x32xbf16, #tpu.memory_space<vmem>>, vector<1x1x16x32xbf16>
    %53 = vector.shape_cast %52 : vector<1x1x16x32xbf16> to vector<16x32xbf16>
    %cst_46 = arith.constant dense<0.000000e+00> : vector<64x32xf32>
    %54 = tpu.matmul %51, %53, %cst_46 {dimension_numbers = #tpu.dot_dimension_numbers<[1], [0], [0], [1], [0, 0, 1, 1], [], []>} : vector<64x16xbf16>, vector<16x32xbf16>, vector<64x32xf32> -> vector<64x32xf32>
    %55 = arith.addf %12, %54 : vector<64x32xf32>
    %c0_47 = arith.constant 0 : index
    %c1 = arith.constant 1 : index
    %c0_48 = arith.constant 0 : index
    %c0_49 = arith.constant 0 : index
    %56 = vector.load %arg5[%c0_47, %c1, %c0_48, %c0_49] : memref<1x4x32x16xbf16, #tpu.memory_space<vmem>>, vector<1x1x32x16xbf16>
    %57 = vector.shape_cast %56 : vector<1x1x32x16xbf16> to vector<32x16xbf16>
    %cst_50 = arith.constant dense<0.000000e+00> : vector<64x16xf32>
    %58 = tpu.matmul %11, %57, %cst_50 {dimension_numbers = #tpu.dot_dimension_numbers<[1], [0], [0], [1], [0, 0, 1, 1], [], []>} : vector<64x32xbf16>, vector<32x16xbf16>, vector<64x16xf32> -> vector<64x16xf32>
    %c0_51 = arith.constant 0 : index
    %c1_52 = arith.constant 1 : index
    %c0_53 = arith.constant 0 : index
    %c0_54 = arith.constant 0 : index
    %59 = vector.load %arg6[%c0_51, %c1_52, %c0_53, %c0_54] : memref<1x4x1x16xf32, #tpu.memory_space<vmem>>, vector<1x1x1x16xf32>
    %60 = vector.shape_cast %59 : vector<1x1x1x16xf32> to vector<1x16xf32>
    %61 = vector.broadcast %60 : vector<1x16xf32> to vector<64x16xf32>
    %62 = arith.addf %58, %61 : vector<64x16xf32>
    %c0_55 = arith.constant 0 : index
    %c1_56 = arith.constant 1 : index
    %c0_57 = arith.constant 0 : index
    %c0_58 = arith.constant 0 : index
    %63 = vector.load %arg7[%c0_55, %c1_56, %c0_57, %c0_58] : memref<1x4x32x16xbf16, #tpu.memory_space<vmem>>, vector<1x1x32x16xbf16>
    %64 = vector.shape_cast %63 : vector<1x1x32x16xbf16> to vector<32x16xbf16>
    %cst_59 = arith.constant dense<0.000000e+00> : vector<64x16xf32>
    %65 = tpu.matmul %11, %64, %cst_59 {dimension_numbers = #tpu.dot_dimension_numbers<[1], [0], [0], [1], [0, 0, 1, 1], [], []>} : vector<64x32xbf16>, vector<32x16xbf16>, vector<64x16xf32> -> vector<64x16xf32>
    %c0_60 = arith.constant 0 : index
    %c1_61 = arith.constant 1 : index
    %c0_62 = arith.constant 0 : index
    %c0_63 = arith.constant 0 : index
    %66 = vector.load %arg8[%c0_60, %c1_61, %c0_62, %c0_63] : memref<1x4x1x16xf32, #tpu.memory_space<vmem>>, vector<1x1x1x16xf32>
    %67 = vector.shape_cast %66 : vector<1x1x1x16xf32> to vector<1x16xf32>
    %68 = vector.broadcast %67 : vector<1x16xf32> to vector<64x16xf32>
    %69 = arith.addf %65, %68 : vector<64x16xf32>
    %c0_64 = arith.constant 0 : index
    %c1_65 = arith.constant 1 : index
    %c0_66 = arith.constant 0 : index
    %c0_67 = arith.constant 0 : index
    %70 = vector.load %arg9[%c0_64, %c1_65, %c0_66, %c0_67] : memref<1x4x32x16xbf16, #tpu.memory_space<vmem>>, vector<1x1x32x16xbf16>
    %71 = vector.shape_cast %70 : vector<1x1x32x16xbf16> to vector<32x16xbf16>
    %cst_68 = arith.constant dense<0.000000e+00> : vector<64x16xf32>
    %72 = tpu.matmul %11, %71, %cst_68 {dimension_numbers = #tpu.dot_dimension_numbers<[1], [0], [0], [1], [0, 0, 1, 1], [], []>} : vector<64x32xbf16>, vector<32x16xbf16>, vector<64x16xf32> -> vector<64x16xf32>
    %c0_69 = arith.constant 0 : index
    %c1_70 = arith.constant 1 : index
    %c0_71 = arith.constant 0 : index
    %c0_72 = arith.constant 0 : index
    %73 = vector.load %arg10[%c0_69, %c1_70, %c0_71, %c0_72] : memref<1x4x1x16xf32, #tpu.memory_space<vmem>>, vector<1x1x1x16xf32>
    %74 = vector.shape_cast %73 : vector<1x1x1x16xf32> to vector<1x16xf32>
    %75 = vector.broadcast %74 : vector<1x16xf32> to vector<64x16xf32>
    %76 = arith.addf %72, %75 : vector<64x16xf32>
    %77 = arith.truncf %62 : vector<64x16xf32> to vector<64x16xbf16>
    %78 = arith.truncf %69 : vector<64x16xf32> to vector<64x16xbf16>
    %cst_73 = arith.constant dense<0.000000e+00> : vector<64x64xf32>
    %79 = tpu.matmul %77, %78, %cst_73 {dimension_numbers = #tpu.dot_dimension_numbers<[1], [1], [0], [0], [0, 0, 1, 0], [], []>} : vector<64x16xbf16>, vector<64x16xbf16>, vector<64x64xf32> -> vector<64x64xf32>
    %80 = arith.addf %79, %2 : vector<64x64xf32>
    %cst_74 = arith.constant dense<0xFF800000> : vector<64xf32>
    %81 = vector.multi_reduction <maximumf>, %80, %cst_74 [1] : vector<64x64xf32> to vector<64xf32>
    %82 = vector.shape_cast %81 : vector<64xf32> to vector<64x1xf32>
    %83 = vector.broadcast %82 : vector<64x1xf32> to vector<64x64xf32>
    %84 = arith.subf %80, %83 : vector<64x64xf32>
    %85 = math.exp %84 : vector<64x64xf32>
    %cst_75 = arith.constant dense<0.000000e+00> : vector<64xf32>
    %86 = vector.multi_reduction <add>, %85, %cst_75 [1] : vector<64x64xf32> to vector<64xf32>
    %87 = vector.shape_cast %86 : vector<64xf32> to vector<64x1xf32>
    %88 = tpu.reciprocal %87 {approx = true} : vector<64x1xf32> -> vector<64x1xf32>
    %89 = vector.broadcast %88 : vector<64x1xf32> to vector<64x64xf32>
    %90 = arith.mulf %85, %89 : vector<64x64xf32>
    %91 = arith.truncf %90 : vector<64x64xf32> to vector<64x64xbf16>
    %92 = arith.truncf %76 : vector<64x16xf32> to vector<64x16xbf16>
    %cst_76 = arith.constant dense<0.000000e+00> : vector<64x16xf32>
    %93 = tpu.matmul %91, %92, %cst_76 {dimension_numbers = #tpu.dot_dimension_numbers<[1], [0], [0], [1], [0, 0, 1, 1], [], []>} : vector<64x64xbf16>, vector<64x16xbf16>, vector<64x16xf32> -> vector<64x16xf32>
    %94 = arith.truncf %93 : vector<64x16xf32> to vector<64x16xbf16>
    %c0_77 = arith.constant 0 : index
    %c1_78 = arith.constant 1 : index
    %c0_79 = arith.constant 0 : index
    %c0_80 = arith.constant 0 : index
    %95 = vector.load %arg11[%c0_77, %c1_78, %c0_79, %c0_80] : memref<1x4x16x32xbf16, #tpu.memory_space<vmem>>, vector<1x1x16x32xbf16>
    %96 = vector.shape_cast %95 : vector<1x1x16x32xbf16> to vector<16x32xbf16>
    %cst_81 = arith.constant dense<0.000000e+00> : vector<64x32xf32>
    %97 = tpu.matmul %94, %96, %cst_81 {dimension_numbers = #tpu.dot_dimension_numbers<[1], [0], [0], [1], [0, 0, 1, 1], [], []>} : vector<64x16xbf16>, vector<16x32xbf16>, vector<64x32xf32> -> vector<64x32xf32>
    %98 = arith.addf %55, %97 : vector<64x32xf32>
    %c0_82 = arith.constant 0 : index
    %c0_83 = arith.constant 0 : index
    %c0_84 = arith.constant 0 : index
    %c0_85 = arith.constant 0 : index
    %99 = vector.load %arg12[%c0_82, %c0_83, %c0_84, %c0_85] : memref<1x2x1x32xf32, #tpu.memory_space<vmem>>, vector<1x1x1x32xf32>
    %100 = vector.shape_cast %99 : vector<1x1x1x32xf32> to vector<1x32xf32>
    %101 = vector.broadcast %100 : vector<1x32xf32> to vector<64x32xf32>
    %102 = arith.addf %98, %101 : vector<64x32xf32>
    %103 = arith.addf %10, %102 : vector<64x32xf32>
    %c0_86 = arith.constant 0 : index
    %c0_87 = arith.constant 0 : index
    %c0_88 = arith.constant 0 : index
    %c0_89 = arith.constant 0 : index
    %104 = vector.load %arg13[%c0_86, %c0_87, %c0_88, %c0_89] : memref<1x2x1x32xf32, #tpu.memory_space<vmem>>, vector<1x1x1x32xf32>
    %105 = vector.shape_cast %104 : vector<1x1x1x32xf32> to vector<1x32xf32>
    %c0_90 = arith.constant 0 : index
    %c0_91 = arith.constant 0 : index
    %c0_92 = arith.constant 0 : index
    %c0_93 = arith.constant 0 : index
    %106 = vector.load %arg14[%c0_90, %c0_91, %c0_92, %c0_93] : memref<1x2x1x32xf32, #tpu.memory_space<vmem>>, vector<1x1x1x32xf32>
    %107 = vector.shape_cast %106 : vector<1x1x1x32xf32> to vector<1x32xf32>
    %cst_94 = arith.constant dense<0.000000e+00> : vector<64xf32>
    %108 = vector.multi_reduction <add>, %103, %cst_94 [1] : vector<64x32xf32> to vector<64xf32>
    %109 = vector.shape_cast %108 : vector<64xf32> to vector<64x1xf32>
    %cst_95 = arith.constant 3.200000e+01 : f32
    %110 = vector.broadcast %cst_95 : f32 to vector<64x1xf32>
    %111 = arith.divf %109, %110 : vector<64x1xf32>
    %112 = vector.broadcast %111 : vector<64x1xf32> to vector<64x32xf32>
    %113 = arith.subf %103, %112 : vector<64x32xf32>
    %114 = arith.mulf %113, %113 : vector<64x32xf32>
    %cst_96 = arith.constant dense<0.000000e+00> : vector<64xf32>
    %115 = vector.multi_reduction <add>, %114, %cst_96 [1] : vector<64x32xf32> to vector<64xf32>
    %116 = vector.shape_cast %115 : vector<64xf32> to vector<64x1xf32>
    %cst_97 = arith.constant 3.200000e+01 : f32
    %117 = vector.broadcast %cst_97 : f32 to vector<64x1xf32>
    %118 = arith.divf %116, %117 : vector<64x1xf32>
    %cst_98 = arith.constant 9.99999974E-6 : f32
    %119 = vector.broadcast %cst_98 : f32 to vector<64x1xf32>
    %120 = arith.addf %118, %119 : vector<64x1xf32>
    %121 = math.rsqrt %120 : vector<64x1xf32>
    %122 = vector.broadcast %121 : vector<64x1xf32> to vector<64x32xf32>
    %123 = arith.mulf %113, %122 : vector<64x32xf32>
    %124 = vector.broadcast %105 : vector<1x32xf32> to vector<64x32xf32>
    %125 = arith.mulf %123, %124 : vector<64x32xf32>
    %126 = vector.broadcast %107 : vector<1x32xf32> to vector<64x32xf32>
    %127 = arith.addf %125, %126 : vector<64x32xf32>
    %128 = arith.truncf %127 : vector<64x32xf32> to vector<64x32xbf16>
    %c0_99 = arith.constant 0 : index
    %c0_100 = arith.constant 0 : index
    %c0_101 = arith.constant 0 : index
    %c0_102 = arith.constant 0 : index
    %129 = vector.load %arg15[%c0_99, %c0_100, %c0_101, %c0_102] : memref<1x2x32x64xbf16, #tpu.memory_space<vmem>>, vector<1x1x32x64xbf16>
    %130 = vector.shape_cast %129 : vector<1x1x32x64xbf16> to vector<32x64xbf16>
    %cst_103 = arith.constant dense<0.000000e+00> : vector<64x64xf32>
    %131 = tpu.matmul %128, %130, %cst_103 {dimension_numbers = #tpu.dot_dimension_numbers<[1], [0], [0], [1], [0, 0, 1, 1], [], []>} : vector<64x32xbf16>, vector<32x64xbf16>, vector<64x64xf32> -> vector<64x64xf32>
    %c0_104 = arith.constant 0 : index
    %c0_105 = arith.constant 0 : index
    %c0_106 = arith.constant 0 : index
    %c0_107 = arith.constant 0 : index
    %132 = vector.load %arg16[%c0_104, %c0_105, %c0_106, %c0_107] : memref<1x2x1x64xf32, #tpu.memory_space<vmem>>, vector<1x1x1x64xf32>
    %133 = vector.shape_cast %132 : vector<1x1x1x64xf32> to vector<1x64xf32>
    %134 = vector.broadcast %133 : vector<1x64xf32> to vector<64x64xf32>
    %135 = arith.addf %131, %134 : vector<64x64xf32>
    %cst_108 = arith.constant 0.000000e+00 : f32
    %136 = vector.broadcast %cst_108 : f32 to vector<64x64xf32>
    %137 = arith.maximumf %135, %136 : vector<64x64xf32>
    %138 = arith.truncf %137 : vector<64x64xf32> to vector<64x64xbf16>
    %c0_109 = arith.constant 0 : index
    %c0_110 = arith.constant 0 : index
    %c0_111 = arith.constant 0 : index
    %c0_112 = arith.constant 0 : index
    %139 = vector.load %arg17[%c0_109, %c0_110, %c0_111, %c0_112] : memref<1x2x64x32xbf16, #tpu.memory_space<vmem>>, vector<1x1x64x32xbf16>
    %140 = vector.shape_cast %139 : vector<1x1x64x32xbf16> to vector<64x32xbf16>
    %cst_113 = arith.constant dense<0.000000e+00> : vector<64x32xf32>
    %141 = tpu.matmul %138, %140, %cst_113 {dimension_numbers = #tpu.dot_dimension_numbers<[1], [0], [0], [1], [0, 0, 1, 1], [], []>} : vector<64x64xbf16>, vector<64x32xbf16>, vector<64x32xf32> -> vector<64x32xf32>
    %c0_114 = arith.constant 0 : index
    %c0_115 = arith.constant 0 : index
    %c0_116 = arith.constant 0 : index
    %c0_117 = arith.constant 0 : index
    %142 = vector.load %arg18[%c0_114, %c0_115, %c0_116, %c0_117] : memref<1x2x1x32xf32, #tpu.memory_space<vmem>>, vector<1x1x1x32xf32>
    %143 = vector.shape_cast %142 : vector<1x1x1x32xf32> to vector<1x32xf32>
    %144 = vector.broadcast %143 : vector<1x32xf32> to vector<64x32xf32>
    %145 = arith.addf %141, %144 : vector<64x32xf32>
    %146 = arith.addf %127, %145 : vector<64x32xf32>
    %c0_118 = arith.constant 0 : index
    %c0_119 = arith.constant 0 : index
    %c0_120 = arith.constant 0 : index
    %c0_121 = arith.constant 0 : index
    %147 = vector.load %arg19[%c0_118, %c0_119, %c0_120, %c0_121] : memref<1x2x1x32xf32, #tpu.memory_space<vmem>>, vector<1x1x1x32xf32>
    %148 = vector.shape_cast %147 : vector<1x1x1x32xf32> to vector<1x32xf32>
    %c0_122 = arith.constant 0 : index
    %c0_123 = arith.constant 0 : index
    %c0_124 = arith.constant 0 : index
    %c0_125 = arith.constant 0 : index
    %149 = vector.load %arg20[%c0_122, %c0_123, %c0_124, %c0_125] : memref<1x2x1x32xf32, #tpu.memory_space<vmem>>, vector<1x1x1x32xf32>
    %150 = vector.shape_cast %149 : vector<1x1x1x32xf32> to vector<1x32xf32>
    %cst_126 = arith.constant dense<0.000000e+00> : vector<64xf32>
    %151 = vector.multi_reduction <add>, %146, %cst_126 [1] : vector<64x32xf32> to vector<64xf32>
    %152 = vector.shape_cast %151 : vector<64xf32> to vector<64x1xf32>
    %cst_127 = arith.constant 3.200000e+01 : f32
    %153 = vector.broadcast %cst_127 : f32 to vector<64x1xf32>
    %154 = arith.divf %152, %153 : vector<64x1xf32>
    %155 = vector.broadcast %154 : vector<64x1xf32> to vector<64x32xf32>
    %156 = arith.subf %146, %155 : vector<64x32xf32>
    %157 = arith.mulf %156, %156 : vector<64x32xf32>
    %cst_128 = arith.constant dense<0.000000e+00> : vector<64xf32>
    %158 = vector.multi_reduction <add>, %157, %cst_128 [1] : vector<64x32xf32> to vector<64xf32>
    %159 = vector.shape_cast %158 : vector<64xf32> to vector<64x1xf32>
    %cst_129 = arith.constant 3.200000e+01 : f32
    %160 = vector.broadcast %cst_129 : f32 to vector<64x1xf32>
    %161 = arith.divf %159, %160 : vector<64x1xf32>
    %cst_130 = arith.constant 9.99999974E-6 : f32
    %162 = vector.broadcast %cst_130 : f32 to vector<64x1xf32>
    %163 = arith.addf %161, %162 : vector<64x1xf32>
    %164 = math.rsqrt %163 : vector<64x1xf32>
    %165 = vector.broadcast %164 : vector<64x1xf32> to vector<64x32xf32>
    %166 = arith.mulf %156, %165 : vector<64x32xf32>
    %167 = vector.broadcast %148 : vector<1x32xf32> to vector<64x32xf32>
    %168 = arith.mulf %166, %167 : vector<64x32xf32>
    %169 = vector.broadcast %150 : vector<1x32xf32> to vector<64x32xf32>
    %170 = arith.addf %168, %169 : vector<64x32xf32>
    %171 = arith.truncf %170 : vector<64x32xf32> to vector<64x32xbf16>
    %cst_131 = arith.constant 0.000000e+00 : f32
    %172 = vector.broadcast %cst_131 : f32 to vector<64x32xf32>
    %c0_132 = arith.constant 0 : index
    %c2 = arith.constant 2 : index
    %c0_133 = arith.constant 0 : index
    %c0_134 = arith.constant 0 : index
    %173 = vector.load %arg5[%c0_132, %c2, %c0_133, %c0_134] : memref<1x4x32x16xbf16, #tpu.memory_space<vmem>>, vector<1x1x32x16xbf16>
    %174 = vector.shape_cast %173 : vector<1x1x32x16xbf16> to vector<32x16xbf16>
    %cst_135 = arith.constant dense<0.000000e+00> : vector<64x16xf32>
    %175 = tpu.matmul %171, %174, %cst_135 {dimension_numbers = #tpu.dot_dimension_numbers<[1], [0], [0], [1], [0, 0, 1, 1], [], []>} : vector<64x32xbf16>, vector<32x16xbf16>, vector<64x16xf32> -> vector<64x16xf32>
    %c0_136 = arith.constant 0 : index
    %c2_137 = arith.constant 2 : index
    %c0_138 = arith.constant 0 : index
    %c0_139 = arith.constant 0 : index
    %176 = vector.load %arg6[%c0_136, %c2_137, %c0_138, %c0_139] : memref<1x4x1x16xf32, #tpu.memory_space<vmem>>, vector<1x1x1x16xf32>
    %177 = vector.shape_cast %176 : vector<1x1x1x16xf32> to vector<1x16xf32>
    %178 = vector.broadcast %177 : vector<1x16xf32> to vector<64x16xf32>
    %179 = arith.addf %175, %178 : vector<64x16xf32>
    %c0_140 = arith.constant 0 : index
    %c2_141 = arith.constant 2 : index
    %c0_142 = arith.constant 0 : index
    %c0_143 = arith.constant 0 : index
    %180 = vector.load %arg7[%c0_140, %c2_141, %c0_142, %c0_143] : memref<1x4x32x16xbf16, #tpu.memory_space<vmem>>, vector<1x1x32x16xbf16>
    %181 = vector.shape_cast %180 : vector<1x1x32x16xbf16> to vector<32x16xbf16>
    %cst_144 = arith.constant dense<0.000000e+00> : vector<64x16xf32>
    %182 = tpu.matmul %171, %181, %cst_144 {dimension_numbers = #tpu.dot_dimension_numbers<[1], [0], [0], [1], [0, 0, 1, 1], [], []>} : vector<64x32xbf16>, vector<32x16xbf16>, vector<64x16xf32> -> vector<64x16xf32>
    %c0_145 = arith.constant 0 : index
    %c2_146 = arith.constant 2 : index
    %c0_147 = arith.constant 0 : index
    %c0_148 = arith.constant 0 : index
    %183 = vector.load %arg8[%c0_145, %c2_146, %c0_147, %c0_148] : memref<1x4x1x16xf32, #tpu.memory_space<vmem>>, vector<1x1x1x16xf32>
    %184 = vector.shape_cast %183 : vector<1x1x1x16xf32> to vector<1x16xf32>
    %185 = vector.broadcast %184 : vector<1x16xf32> to vector<64x16xf32>
    %186 = arith.addf %182, %185 : vector<64x16xf32>
    %c0_149 = arith.constant 0 : index
    %c2_150 = arith.constant 2 : index
    %c0_151 = arith.constant 0 : index
    %c0_152 = arith.constant 0 : index
    %187 = vector.load %arg9[%c0_149, %c2_150, %c0_151, %c0_152] : memref<1x4x32x16xbf16, #tpu.memory_space<vmem>>, vector<1x1x32x16xbf16>
    %188 = vector.shape_cast %187 : vector<1x1x32x16xbf16> to vector<32x16xbf16>
    %cst_153 = arith.constant dense<0.000000e+00> : vector<64x16xf32>
    %189 = tpu.matmul %171, %188, %cst_153 {dimension_numbers = #tpu.dot_dimension_numbers<[1], [0], [0], [1], [0, 0, 1, 1], [], []>} : vector<64x32xbf16>, vector<32x16xbf16>, vector<64x16xf32> -> vector<64x16xf32>
    %c0_154 = arith.constant 0 : index
    %c2_155 = arith.constant 2 : index
    %c0_156 = arith.constant 0 : index
    %c0_157 = arith.constant 0 : index
    %190 = vector.load %arg10[%c0_154, %c2_155, %c0_156, %c0_157] : memref<1x4x1x16xf32, #tpu.memory_space<vmem>>, vector<1x1x1x16xf32>
    %191 = vector.shape_cast %190 : vector<1x1x1x16xf32> to vector<1x16xf32>
    %192 = vector.broadcast %191 : vector<1x16xf32> to vector<64x16xf32>
    %193 = arith.addf %189, %192 : vector<64x16xf32>
    %194 = arith.truncf %179 : vector<64x16xf32> to vector<64x16xbf16>
    %195 = arith.truncf %186 : vector<64x16xf32> to vector<64x16xbf16>
    %cst_158 = arith.constant dense<0.000000e+00> : vector<64x64xf32>
    %196 = tpu.matmul %194, %195, %cst_158 {dimension_numbers = #tpu.dot_dimension_numbers<[1], [1], [0], [0], [0, 0, 1, 0], [], []>} : vector<64x16xbf16>, vector<64x16xbf16>, vector<64x64xf32> -> vector<64x64xf32>
    %197 = arith.addf %196, %2 : vector<64x64xf32>
    %cst_159 = arith.constant dense<0xFF800000> : vector<64xf32>
    %198 = vector.multi_reduction <maximumf>, %197, %cst_159 [1] : vector<64x64xf32> to vector<64xf32>
    %199 = vector.shape_cast %198 : vector<64xf32> to vector<64x1xf32>
    %200 = vector.broadcast %199 : vector<64x1xf32> to vector<64x64xf32>
    %201 = arith.subf %197, %200 : vector<64x64xf32>
    %202 = math.exp %201 : vector<64x64xf32>
    %cst_160 = arith.constant dense<0.000000e+00> : vector<64xf32>
    %203 = vector.multi_reduction <add>, %202, %cst_160 [1] : vector<64x64xf32> to vector<64xf32>
    %204 = vector.shape_cast %203 : vector<64xf32> to vector<64x1xf32>
    %205 = tpu.reciprocal %204 {approx = true} : vector<64x1xf32> -> vector<64x1xf32>
    %206 = vector.broadcast %205 : vector<64x1xf32> to vector<64x64xf32>
    %207 = arith.mulf %202, %206 : vector<64x64xf32>
    %208 = arith.truncf %207 : vector<64x64xf32> to vector<64x64xbf16>
    %209 = arith.truncf %193 : vector<64x16xf32> to vector<64x16xbf16>
    %cst_161 = arith.constant dense<0.000000e+00> : vector<64x16xf32>
    %210 = tpu.matmul %208, %209, %cst_161 {dimension_numbers = #tpu.dot_dimension_numbers<[1], [0], [0], [1], [0, 0, 1, 1], [], []>} : vector<64x64xbf16>, vector<64x16xbf16>, vector<64x16xf32> -> vector<64x16xf32>
    %211 = arith.truncf %210 : vector<64x16xf32> to vector<64x16xbf16>
    %c0_162 = arith.constant 0 : index
    %c2_163 = arith.constant 2 : index
    %c0_164 = arith.constant 0 : index
    %c0_165 = arith.constant 0 : index
    %212 = vector.load %arg11[%c0_162, %c2_163, %c0_164, %c0_165] : memref<1x4x16x32xbf16, #tpu.memory_space<vmem>>, vector<1x1x16x32xbf16>
    %213 = vector.shape_cast %212 : vector<1x1x16x32xbf16> to vector<16x32xbf16>
    %cst_166 = arith.constant dense<0.000000e+00> : vector<64x32xf32>
    %214 = tpu.matmul %211, %213, %cst_166 {dimension_numbers = #tpu.dot_dimension_numbers<[1], [0], [0], [1], [0, 0, 1, 1], [], []>} : vector<64x16xbf16>, vector<16x32xbf16>, vector<64x32xf32> -> vector<64x32xf32>
    %215 = arith.addf %172, %214 : vector<64x32xf32>
    %c0_167 = arith.constant 0 : index
    %c3 = arith.constant 3 : index
    %c0_168 = arith.constant 0 : index
    %c0_169 = arith.constant 0 : index
    %216 = vector.load %arg5[%c0_167, %c3, %c0_168, %c0_169] : memref<1x4x32x16xbf16, #tpu.memory_space<vmem>>, vector<1x1x32x16xbf16>
    %217 = vector.shape_cast %216 : vector<1x1x32x16xbf16> to vector<32x16xbf16>
    %cst_170 = arith.constant dense<0.000000e+00> : vector<64x16xf32>
    %218 = tpu.matmul %171, %217, %cst_170 {dimension_numbers = #tpu.dot_dimension_numbers<[1], [0], [0], [1], [0, 0, 1, 1], [], []>} : vector<64x32xbf16>, vector<32x16xbf16>, vector<64x16xf32> -> vector<64x16xf32>
    %c0_171 = arith.constant 0 : index
    %c3_172 = arith.constant 3 : index
    %c0_173 = arith.constant 0 : index
    %c0_174 = arith.constant 0 : index
    %219 = vector.load %arg6[%c0_171, %c3_172, %c0_173, %c0_174] : memref<1x4x1x16xf32, #tpu.memory_space<vmem>>, vector<1x1x1x16xf32>
    %220 = vector.shape_cast %219 : vector<1x1x1x16xf32> to vector<1x16xf32>
    %221 = vector.broadcast %220 : vector<1x16xf32> to vector<64x16xf32>
    %222 = arith.addf %218, %221 : vector<64x16xf32>
    %c0_175 = arith.constant 0 : index
    %c3_176 = arith.constant 3 : index
    %c0_177 = arith.constant 0 : index
    %c0_178 = arith.constant 0 : index
    %223 = vector.load %arg7[%c0_175, %c3_176, %c0_177, %c0_178] : memref<1x4x32x16xbf16, #tpu.memory_space<vmem>>, vector<1x1x32x16xbf16>
    %224 = vector.shape_cast %223 : vector<1x1x32x16xbf16> to vector<32x16xbf16>
    %cst_179 = arith.constant dense<0.000000e+00> : vector<64x16xf32>
    %225 = tpu.matmul %171, %224, %cst_179 {dimension_numbers = #tpu.dot_dimension_numbers<[1], [0], [0], [1], [0, 0, 1, 1], [], []>} : vector<64x32xbf16>, vector<32x16xbf16>, vector<64x16xf32> -> vector<64x16xf32>
    %c0_180 = arith.constant 0 : index
    %c3_181 = arith.constant 3 : index
    %c0_182 = arith.constant 0 : index
    %c0_183 = arith.constant 0 : index
    %226 = vector.load %arg8[%c0_180, %c3_181, %c0_182, %c0_183] : memref<1x4x1x16xf32, #tpu.memory_space<vmem>>, vector<1x1x1x16xf32>
    %227 = vector.shape_cast %226 : vector<1x1x1x16xf32> to vector<1x16xf32>
    %228 = vector.broadcast %227 : vector<1x16xf32> to vector<64x16xf32>
    %229 = arith.addf %225, %228 : vector<64x16xf32>
    %c0_184 = arith.constant 0 : index
    %c3_185 = arith.constant 3 : index
    %c0_186 = arith.constant 0 : index
    %c0_187 = arith.constant 0 : index
    %230 = vector.load %arg9[%c0_184, %c3_185, %c0_186, %c0_187] : memref<1x4x32x16xbf16, #tpu.memory_space<vmem>>, vector<1x1x32x16xbf16>
    %231 = vector.shape_cast %230 : vector<1x1x32x16xbf16> to vector<32x16xbf16>
    %cst_188 = arith.constant dense<0.000000e+00> : vector<64x16xf32>
    %232 = tpu.matmul %171, %231, %cst_188 {dimension_numbers = #tpu.dot_dimension_numbers<[1], [0], [0], [1], [0, 0, 1, 1], [], []>} : vector<64x32xbf16>, vector<32x16xbf16>, vector<64x16xf32> -> vector<64x16xf32>
    %c0_189 = arith.constant 0 : index
    %c3_190 = arith.constant 3 : index
    %c0_191 = arith.constant 0 : index
    %c0_192 = arith.constant 0 : index
    %233 = vector.load %arg10[%c0_189, %c3_190, %c0_191, %c0_192] : memref<1x4x1x16xf32, #tpu.memory_space<vmem>>, vector<1x1x1x16xf32>
    %234 = vector.shape_cast %233 : vector<1x1x1x16xf32> to vector<1x16xf32>
    %235 = vector.broadcast %234 : vector<1x16xf32> to vector<64x16xf32>
    %236 = arith.addf %232, %235 : vector<64x16xf32>
    %237 = arith.truncf %222 : vector<64x16xf32> to vector<64x16xbf16>
    %238 = arith.truncf %229 : vector<64x16xf32> to vector<64x16xbf16>
    %cst_193 = arith.constant dense<0.000000e+00> : vector<64x64xf32>
    %239 = tpu.matmul %237, %238, %cst_193 {dimension_numbers = #tpu.dot_dimension_numbers<[1], [1], [0], [0], [0, 0, 1, 0], [], []>} : vector<64x16xbf16>, vector<64x16xbf16>, vector<64x64xf32> -> vector<64x64xf32>
    %240 = arith.addf %239, %2 : vector<64x64xf32>
    %cst_194 = arith.constant dense<0xFF800000> : vector<64xf32>
    %241 = vector.multi_reduction <maximumf>, %240, %cst_194 [1] : vector<64x64xf32> to vector<64xf32>
    %242 = vector.shape_cast %241 : vector<64xf32> to vector<64x1xf32>
    %243 = vector.broadcast %242 : vector<64x1xf32> to vector<64x64xf32>
    %244 = arith.subf %240, %243 : vector<64x64xf32>
    %245 = math.exp %244 : vector<64x64xf32>
    %cst_195 = arith.constant dense<0.000000e+00> : vector<64xf32>
    %246 = vector.multi_reduction <add>, %245, %cst_195 [1] : vector<64x64xf32> to vector<64xf32>
    %247 = vector.shape_cast %246 : vector<64xf32> to vector<64x1xf32>
    %248 = tpu.reciprocal %247 {approx = true} : vector<64x1xf32> -> vector<64x1xf32>
    %249 = vector.broadcast %248 : vector<64x1xf32> to vector<64x64xf32>
    %250 = arith.mulf %245, %249 : vector<64x64xf32>
    %251 = arith.truncf %250 : vector<64x64xf32> to vector<64x64xbf16>
    %252 = arith.truncf %236 : vector<64x16xf32> to vector<64x16xbf16>
    %cst_196 = arith.constant dense<0.000000e+00> : vector<64x16xf32>
    %253 = tpu.matmul %251, %252, %cst_196 {dimension_numbers = #tpu.dot_dimension_numbers<[1], [0], [0], [1], [0, 0, 1, 1], [], []>} : vector<64x64xbf16>, vector<64x16xbf16>, vector<64x16xf32> -> vector<64x16xf32>
    %254 = arith.truncf %253 : vector<64x16xf32> to vector<64x16xbf16>
    %c0_197 = arith.constant 0 : index
    %c3_198 = arith.constant 3 : index
    %c0_199 = arith.constant 0 : index
    %c0_200 = arith.constant 0 : index
    %255 = vector.load %arg11[%c0_197, %c3_198, %c0_199, %c0_200] : memref<1x4x16x32xbf16, #tpu.memory_space<vmem>>, vector<1x1x16x32xbf16>
    %256 = vector.shape_cast %255 : vector<1x1x16x32xbf16> to vector<16x32xbf16>
    %cst_201 = arith.constant dense<0.000000e+00> : vector<64x32xf32>
    %257 = tpu.matmul %254, %256, %cst_201 {dimension_numbers = #tpu.dot_dimension_numbers<[1], [0], [0], [1], [0, 0, 1, 1], [], []>} : vector<64x16xbf16>, vector<16x32xbf16>, vector<64x32xf32> -> vector<64x32xf32>
    %258 = arith.addf %215, %257 : vector<64x32xf32>
    %c0_202 = arith.constant 0 : index
    %c1_203 = arith.constant 1 : index
    %c0_204 = arith.constant 0 : index
    %c0_205 = arith.constant 0 : index
    %259 = vector.load %arg12[%c0_202, %c1_203, %c0_204, %c0_205] : memref<1x2x1x32xf32, #tpu.memory_space<vmem>>, vector<1x1x1x32xf32>
    %260 = vector.shape_cast %259 : vector<1x1x1x32xf32> to vector<1x32xf32>
    %261 = vector.broadcast %260 : vector<1x32xf32> to vector<64x32xf32>
    %262 = arith.addf %258, %261 : vector<64x32xf32>
    %263 = arith.addf %170, %262 : vector<64x32xf32>
    %c0_206 = arith.constant 0 : index
    %c1_207 = arith.constant 1 : index
    %c0_208 = arith.constant 0 : index
    %c0_209 = arith.constant 0 : index
    %264 = vector.load %arg13[%c0_206, %c1_207, %c0_208, %c0_209] : memref<1x2x1x32xf32, #tpu.memory_space<vmem>>, vector<1x1x1x32xf32>
    %265 = vector.shape_cast %264 : vector<1x1x1x32xf32> to vector<1x32xf32>
    %c0_210 = arith.constant 0 : index
    %c1_211 = arith.constant 1 : index
    %c0_212 = arith.constant 0 : index
    %c0_213 = arith.constant 0 : index
    %266 = vector.load %arg14[%c0_210, %c1_211, %c0_212, %c0_213] : memref<1x2x1x32xf32, #tpu.memory_space<vmem>>, vector<1x1x1x32xf32>
    %267 = vector.shape_cast %266 : vector<1x1x1x32xf32> to vector<1x32xf32>
    %cst_214 = arith.constant dense<0.000000e+00> : vector<64xf32>
    %268 = vector.multi_reduction <add>, %263, %cst_214 [1] : vector<64x32xf32> to vector<64xf32>
    %269 = vector.shape_cast %268 : vector<64xf32> to vector<64x1xf32>
    %cst_215 = arith.constant 3.200000e+01 : f32
    %270 = vector.broadcast %cst_215 : f32 to vector<64x1xf32>
    %271 = arith.divf %269, %270 : vector<64x1xf32>
    %272 = vector.broadcast %271 : vector<64x1xf32> to vector<64x32xf32>
    %273 = arith.subf %263, %272 : vector<64x32xf32>
    %274 = arith.mulf %273, %273 : vector<64x32xf32>
    %cst_216 = arith.constant dense<0.000000e+00> : vector<64xf32>
    %275 = vector.multi_reduction <add>, %274, %cst_216 [1] : vector<64x32xf32> to vector<64xf32>
    %276 = vector.shape_cast %275 : vector<64xf32> to vector<64x1xf32>
    %cst_217 = arith.constant 3.200000e+01 : f32
    %277 = vector.broadcast %cst_217 : f32 to vector<64x1xf32>
    %278 = arith.divf %276, %277 : vector<64x1xf32>
    %cst_218 = arith.constant 9.99999974E-6 : f32
    %279 = vector.broadcast %cst_218 : f32 to vector<64x1xf32>
    %280 = arith.addf %278, %279 : vector<64x1xf32>
    %281 = math.rsqrt %280 : vector<64x1xf32>
    %282 = vector.broadcast %281 : vector<64x1xf32> to vector<64x32xf32>
    %283 = arith.mulf %273, %282 : vector<64x32xf32>
    %284 = vector.broadcast %265 : vector<1x32xf32> to vector<64x32xf32>
    %285 = arith.mulf %283, %284 : vector<64x32xf32>
    %286 = vector.broadcast %267 : vector<1x32xf32> to vector<64x32xf32>
    %287 = arith.addf %285, %286 : vector<64x32xf32>
    %288 = arith.truncf %287 : vector<64x32xf32> to vector<64x32xbf16>
    %c0_219 = arith.constant 0 : index
    %c1_220 = arith.constant 1 : index
    %c0_221 = arith.constant 0 : index
    %c0_222 = arith.constant 0 : index
    %289 = vector.load %arg15[%c0_219, %c1_220, %c0_221, %c0_222] : memref<1x2x32x64xbf16, #tpu.memory_space<vmem>>, vector<1x1x32x64xbf16>
    %290 = vector.shape_cast %289 : vector<1x1x32x64xbf16> to vector<32x64xbf16>
    %cst_223 = arith.constant dense<0.000000e+00> : vector<64x64xf32>
    %291 = tpu.matmul %288, %290, %cst_223 {dimension_numbers = #tpu.dot_dimension_numbers<[1], [0], [0], [1], [0, 0, 1, 1], [], []>} : vector<64x32xbf16>, vector<32x64xbf16>, vector<64x64xf32> -> vector<64x64xf32>
    %c0_224 = arith.constant 0 : index
    %c1_225 = arith.constant 1 : index
    %c0_226 = arith.constant 0 : index
    %c0_227 = arith.constant 0 : index
    %292 = vector.load %arg16[%c0_224, %c1_225, %c0_226, %c0_227] : memref<1x2x1x64xf32, #tpu.memory_space<vmem>>, vector<1x1x1x64xf32>
    %293 = vector.shape_cast %292 : vector<1x1x1x64xf32> to vector<1x64xf32>
    %294 = vector.broadcast %293 : vector<1x64xf32> to vector<64x64xf32>
    %295 = arith.addf %291, %294 : vector<64x64xf32>
    %cst_228 = arith.constant 0.000000e+00 : f32
    %296 = vector.broadcast %cst_228 : f32 to vector<64x64xf32>
    %297 = arith.maximumf %295, %296 : vector<64x64xf32>
    %298 = arith.truncf %297 : vector<64x64xf32> to vector<64x64xbf16>
    %c0_229 = arith.constant 0 : index
    %c1_230 = arith.constant 1 : index
    %c0_231 = arith.constant 0 : index
    %c0_232 = arith.constant 0 : index
    %299 = vector.load %arg17[%c0_229, %c1_230, %c0_231, %c0_232] : memref<1x2x64x32xbf16, #tpu.memory_space<vmem>>, vector<1x1x64x32xbf16>
    %300 = vector.shape_cast %299 : vector<1x1x64x32xbf16> to vector<64x32xbf16>
    %cst_233 = arith.constant dense<0.000000e+00> : vector<64x32xf32>
    %301 = tpu.matmul %298, %300, %cst_233 {dimension_numbers = #tpu.dot_dimension_numbers<[1], [0], [0], [1], [0, 0, 1, 1], [], []>} : vector<64x64xbf16>, vector<64x32xbf16>, vector<64x32xf32> -> vector<64x32xf32>
    %c0_234 = arith.constant 0 : index
    %c1_235 = arith.constant 1 : index
    %c0_236 = arith.constant 0 : index
    %c0_237 = arith.constant 0 : index
    %302 = vector.load %arg18[%c0_234, %c1_235, %c0_236, %c0_237] : memref<1x2x1x32xf32, #tpu.memory_space<vmem>>, vector<1x1x1x32xf32>
    %303 = vector.shape_cast %302 : vector<1x1x1x32xf32> to vector<1x32xf32>
    %304 = vector.broadcast %303 : vector<1x32xf32> to vector<64x32xf32>
    %305 = arith.addf %301, %304 : vector<64x32xf32>
    %306 = arith.addf %287, %305 : vector<64x32xf32>
    %c0_238 = arith.constant 0 : index
    %c1_239 = arith.constant 1 : index
    %c0_240 = arith.constant 0 : index
    %c0_241 = arith.constant 0 : index
    %307 = vector.load %arg19[%c0_238, %c1_239, %c0_240, %c0_241] : memref<1x2x1x32xf32, #tpu.memory_space<vmem>>, vector<1x1x1x32xf32>
    %308 = vector.shape_cast %307 : vector<1x1x1x32xf32> to vector<1x32xf32>
    %c0_242 = arith.constant 0 : index
    %c1_243 = arith.constant 1 : index
    %c0_244 = arith.constant 0 : index
    %c0_245 = arith.constant 0 : index
    %309 = vector.load %arg20[%c0_242, %c1_243, %c0_244, %c0_245] : memref<1x2x1x32xf32, #tpu.memory_space<vmem>>, vector<1x1x1x32xf32>
    %310 = vector.shape_cast %309 : vector<1x1x1x32xf32> to vector<1x32xf32>
    %cst_246 = arith.constant dense<0.000000e+00> : vector<64xf32>
    %311 = vector.multi_reduction <add>, %306, %cst_246 [1] : vector<64x32xf32> to vector<64xf32>
    %312 = vector.shape_cast %311 : vector<64xf32> to vector<64x1xf32>
    %cst_247 = arith.constant 3.200000e+01 : f32
    %313 = vector.broadcast %cst_247 : f32 to vector<64x1xf32>
    %314 = arith.divf %312, %313 : vector<64x1xf32>
    %315 = vector.broadcast %314 : vector<64x1xf32> to vector<64x32xf32>
    %316 = arith.subf %306, %315 : vector<64x32xf32>
    %317 = arith.mulf %316, %316 : vector<64x32xf32>
    %cst_248 = arith.constant dense<0.000000e+00> : vector<64xf32>
    %318 = vector.multi_reduction <add>, %317, %cst_248 [1] : vector<64x32xf32> to vector<64xf32>
    %319 = vector.shape_cast %318 : vector<64xf32> to vector<64x1xf32>
    %cst_249 = arith.constant 3.200000e+01 : f32
    %320 = vector.broadcast %cst_249 : f32 to vector<64x1xf32>
    %321 = arith.divf %319, %320 : vector<64x1xf32>
    %cst_250 = arith.constant 9.99999974E-6 : f32
    %322 = vector.broadcast %cst_250 : f32 to vector<64x1xf32>
    %323 = arith.addf %321, %322 : vector<64x1xf32>
    %324 = math.rsqrt %323 : vector<64x1xf32>
    %325 = vector.broadcast %324 : vector<64x1xf32> to vector<64x32xf32>
    %326 = arith.mulf %316, %325 : vector<64x32xf32>
    %327 = vector.broadcast %308 : vector<1x32xf32> to vector<64x32xf32>
    %328 = arith.mulf %326, %327 : vector<64x32xf32>
    %329 = vector.broadcast %310 : vector<1x32xf32> to vector<64x32xf32>
    %330 = arith.addf %328, %329 : vector<64x32xf32>
    %c0_251 = arith.constant 0 : index
    %c0_252 = arith.constant 0 : index
    %c0_253 = arith.constant 0 : index
    %331 = vector.load %arg21[%c0_251, %c0_252, %c0_253] : memref<1x1x32xf32, #tpu.memory_space<vmem>>, vector<1x1x32xf32>
    %332 = vector.shape_cast %331 : vector<1x1x32xf32> to vector<1x32xf32>
    %c0_254 = arith.constant 0 : index
    %c0_255 = arith.constant 0 : index
    %c0_256 = arith.constant 0 : index
    %333 = vector.load %arg22[%c0_254, %c0_255, %c0_256] : memref<1x1x32xf32, #tpu.memory_space<vmem>>, vector<1x1x32xf32>
    %334 = vector.shape_cast %333 : vector<1x1x32xf32> to vector<1x32xf32>
    %cst_257 = arith.constant dense<0.000000e+00> : vector<64xf32>
    %335 = vector.multi_reduction <add>, %330, %cst_257 [1] : vector<64x32xf32> to vector<64xf32>
    %336 = vector.shape_cast %335 : vector<64xf32> to vector<64x1xf32>
    %cst_258 = arith.constant 3.200000e+01 : f32
    %337 = vector.broadcast %cst_258 : f32 to vector<64x1xf32>
    %338 = arith.divf %336, %337 : vector<64x1xf32>
    %339 = vector.broadcast %338 : vector<64x1xf32> to vector<64x32xf32>
    %340 = arith.subf %330, %339 : vector<64x32xf32>
    %341 = arith.mulf %340, %340 : vector<64x32xf32>
    %cst_259 = arith.constant dense<0.000000e+00> : vector<64xf32>
    %342 = vector.multi_reduction <add>, %341, %cst_259 [1] : vector<64x32xf32> to vector<64xf32>
    %343 = vector.shape_cast %342 : vector<64xf32> to vector<64x1xf32>
    %cst_260 = arith.constant 3.200000e+01 : f32
    %344 = vector.broadcast %cst_260 : f32 to vector<64x1xf32>
    %345 = arith.divf %343, %344 : vector<64x1xf32>
    %cst_261 = arith.constant 9.99999974E-6 : f32
    %346 = vector.broadcast %cst_261 : f32 to vector<64x1xf32>
    %347 = arith.addf %345, %346 : vector<64x1xf32>
    %348 = math.rsqrt %347 : vector<64x1xf32>
    %349 = vector.broadcast %348 : vector<64x1xf32> to vector<64x32xf32>
    %350 = arith.mulf %340, %349 : vector<64x32xf32>
    %351 = vector.broadcast %332 : vector<1x32xf32> to vector<64x32xf32>
    %352 = arith.mulf %350, %351 : vector<64x32xf32>
    %353 = vector.broadcast %334 : vector<1x32xf32> to vector<64x32xf32>
    %354 = arith.addf %352, %353 : vector<64x32xf32>
    %355 = vector.shape_cast %354 : vector<64x32xf32> to vector<8x8x32xf32>
    %c0_262 = arith.constant 0 : index
    %c0_263 = arith.constant 0 : index
    %c0_264 = arith.constant 0 : index
    %356 = vector.load %arg23[%c0_262, %c0_263, %c0_264] : memref<1x1x32xf32, #tpu.memory_space<vmem>>, vector<1x1x32xf32>
    %357 = vector.shape_cast %356 : vector<1x1x32xf32> to vector<1x32xf32>
    %358 = vector.shape_cast %357 : vector<1x32xf32> to vector<1x1x32xf32>
    %359 = vector.broadcast %358 : vector<1x1x32xf32> to vector<8x8x32xf32>
    %360 = arith.mulf %355, %359 : vector<8x8x32xf32>
    %cst_265 = arith.constant dense<0.000000e+00> : vector<8x8xf32>
    %361 = vector.multi_reduction <add>, %360, %cst_265 [2] : vector<8x8x32xf32> to vector<8x8xf32>
    %c0_266 = arith.constant 0 : index
    %c0_267 = arith.constant 0 : index
    %c0_268 = arith.constant 0 : index
    %362 = vector.load %arg24[%c0_266, %c0_267, %c0_268] : memref<1x1x17xf32, #tpu.memory_space<vmem>>, vector<1x1x17xf32>
    %363 = vector.shape_cast %362 : vector<1x1x17xf32> to vector<1x17xf32>
    %364 = vector.shape_cast %363 : vector<1x17xf32> to vector<1x1x17xf32>
    %365 = vector.broadcast %364 : vector<1x1x17xf32> to vector<8x8x17xf32>
    %366 = arith.mulf %0, %365 : vector<8x8x17xf32>
    %cst_269 = arith.constant dense<0.000000e+00> : vector<8x8xf32>
    %367 = vector.multi_reduction <add>, %366, %cst_269 [2] : vector<8x8x17xf32> to vector<8x8xf32>
    %368 = arith.addf %361, %367 : vector<8x8xf32>
    %c0_270 = arith.constant 0 : index
    %c0_271 = arith.constant 0 : index
    %c0_272 = arith.constant 0 : index
    %369 = vector.load %arg25[%c0_270, %c0_271, %c0_272] : memref<1x1x1xf32, #tpu.memory_space<vmem>>, vector<1x1x1xf32>
    %370 = vector.shape_cast %369 : vector<1x1x1xf32> to vector<1x1xf32>
    %371 = vector.broadcast %370 : vector<1x1xf32> to vector<8x8xf32>
    %372 = arith.addf %368, %371 : vector<8x8xf32>
    %c0_273 = arith.constant 0 : index
    %c0_274 = arith.constant 0 : index
    %c0_275 = arith.constant 0 : index
    %373 = vector.load %arg26[%c0_273, %c0_274, %c0_275] : memref<1x8x8xf32, #tpu.memory_space<vmem>>, vector<1x8x8xf32>
    %374 = vector.shape_cast %373 : vector<1x8x8xf32> to vector<8x8xf32>
    %375 = vector.shape_cast %372 : vector<8x8xf32> to vector<1x8x8xf32>
    tpu.vector_store %arg26[%c0_273, %c0_274, %c0_275], %375 {strides = array<i32>} : memref<1x8x8xf32, #tpu.memory_space<vmem>>, vector<1x8x8xf32>,
    return
  }
  func.func @transform_0(%arg0: i32) -> (i32, i32, i32) {
    %c0_i32 = arith.constant 0 : i32
    %c0_i32_0 = arith.constant 0 : i32
    %c0_i32_1 = arith.constant 0 : i32
    %c0_i32_2 = arith.constant 0 : i32
    return %c0_i32, %c0_i32_0, %c0_i32_1 : i32, i32, i32
  }
  func.func @transform_1(%arg0: i32) -> (i32, i32) {
    %c0_i32 = arith.constant 0 : i32
    %c0_i32_0 = arith.constant 0 : i32
    %c0_i32_1 = arith.constant 0 : i32
    return %c0_i32, %c0_i32_0 : i32, i32
  }
  func.func @transform_2(%arg0: i32) -> (i32, i32, i32) {
    %c0_i32 = arith.constant 0 : i32
    %c0_i32_0 = arith.constant 0 : i32
    %c0_i32_1 = arith.constant 0 : i32
    return %arg0, %c0_i32, %c0_i32_0 : i32, i32, i32
  }
  func.func @transform_3(%arg0: i32) -> (i32, i32, i32) {
    %c0_i32 = arith.constant 0 : i32
    %c0_i32_0 = arith.constant 0 : i32
    %c0_i32_1 = arith.constant 0 : i32
    return %arg0, %c0_i32, %c0_i32_0 : i32, i32, i32
  }
  func.func @transform_4(%arg0: i32) -> (i32, i32, i32, i32) {
    %c0_i32 = arith.constant 0 : i32
    %c0_i32_0 = arith.constant 0 : i32
    %c0_i32_1 = arith.constant 0 : i32
    %c0_i32_2 = arith.constant 0 : i32
    return %arg0, %c0_i32, %c0_i32_0, %c0_i32_1 : i32, i32, i32, i32
  }
  func.func @transform_5(%arg0: i32) -> (i32, i32, i32, i32) {
    %c0_i32 = arith.constant 0 : i32
    %c0_i32_0 = arith.constant 0 : i32
    %c0_i32_1 = arith.constant 0 : i32
    %c0_i32_2 = arith.constant 0 : i32
    return %arg0, %c0_i32, %c0_i32_0, %c0_i32_1 : i32, i32, i32, i32
  }
  func.func @transform_6(%arg0: i32) -> (i32, i32, i32, i32) {
    %c0_i32 = arith.constant 0 : i32
    %c0_i32_0 = arith.constant 0 : i32
    %c0_i32_1 = arith.constant 0 : i32
    %c0_i32_2 = arith.constant 0 : i32
    return %arg0, %c0_i32, %c0_i32_0, %c0_i32_1 : i32, i32, i32, i32
  }
  func.func @transform_7(%arg0: i32) -> (i32, i32, i32, i32) {
    %c0_i32 = arith.constant 0 : i32
    %c0_i32_0 = arith.constant 0 : i32
    %c0_i32_1 = arith.constant 0 : i32
    %c0_i32_2 = arith.constant 0 : i32
    return %arg0, %c0_i32, %c0_i32_0, %c0_i32_1 : i32, i32, i32, i32
  }
  func.func @transform_8(%arg0: i32) -> (i32, i32, i32, i32) {
    %c0_i32 = arith.constant 0 : i32
    %c0_i32_0 = arith.constant 0 : i32
    %c0_i32_1 = arith.constant 0 : i32
    %c0_i32_2 = arith.constant 0 : i32
    return %arg0, %c0_i32, %c0_i32_0, %c0_i32_1 : i32, i32, i32, i32
  }
  func.func @transform_9(%arg0: i32) -> (i32, i32, i32, i32) {
    %c0_i32 = arith.constant 0 : i32
    %c0_i32_0 = arith.constant 0 : i32
    %c0_i32_1 = arith.constant 0 : i32
    %c0_i32_2 = arith.constant 0 : i32
    return %arg0, %c0_i32, %c0_i32_0, %c0_i32_1 : i32, i32, i32, i32
  }
  func.func @transform_10(%arg0: i32) -> (i32, i32, i32, i32) {
    %c0_i32 = arith.constant 0 : i32
    %c0_i32_0 = arith.constant 0 : i32
    %c0_i32_1 = arith.constant 0 : i32
    %c0_i32_2 = arith.constant 0 : i32
    return %arg0, %c0_i32, %c0_i32_0, %c0_i32_1 : i32, i32, i32, i32
  }
  func.func @transform_11(%arg0: i32) -> (i32, i32, i32, i32) {
    %c0_i32 = arith.constant 0 : i32
    %c0_i32_0 = arith.constant 0 : i32
    %c0_i32_1 = arith.constant 0 : i32
    %c0_i32_2 = arith.constant 0 : i32
    return %arg0, %c0_i32, %c0_i32_0, %c0_i32_1 : i32, i32, i32, i32
  }
  func.func @transform_12(%arg0: i32) -> (i32, i32, i32, i32) {
    %c0_i32 = arith.constant 0 : i32
    %c0_i32_0 = arith.constant 0 : i32
    %c0_i32_1 = arith.constant 0 : i32
    %c0_i32_2 = arith.constant 0 : i32
    return %arg0, %c0_i32, %c0_i32_0, %c0_i32_1 : i32, i32, i32, i32
  }
  func.func @transform_13(%arg0: i32) -> (i32, i32, i32, i32) {
    %c0_i32 = arith.constant 0 : i32
    %c0_i32_0 = arith.constant 0 : i32
    %c0_i32_1 = arith.constant 0 : i32
    %c0_i32_2 = arith.constant 0 : i32
    return %arg0, %c0_i32, %c0_i32_0, %c0_i32_1 : i32, i32, i32, i32
  }
  func.func @transform_14(%arg0: i32) -> (i32, i32, i32, i32) {
    %c0_i32 = arith.constant 0 : i32
    %c0_i32_0 = arith.constant 0 : i32
    %c0_i32_1 = arith.constant 0 : i32
    %c0_i32_2 = arith.constant 0 : i32
    return %arg0, %c0_i32, %c0_i32_0, %c0_i32_1 : i32, i32, i32, i32
  }
  func.func @transform_15(%arg0: i32) -> (i32, i32, i32, i32) {
    %c0_i32 = arith.constant 0 : i32
    %c0_i32_0 = arith.constant 0 : i32
    %c0_i32_1 = arith.constant 0 : i32
    %c0_i32_2 = arith.constant 0 : i32
    return %arg0, %c0_i32, %c0_i32_0, %c0_i32_1 : i32, i32, i32, i32
  }
  func.func @transform_16(%arg0: i32) -> (i32, i32, i32, i32) {
    %c0_i32 = arith.constant 0 : i32
    %c0_i32_0 = arith.constant 0 : i32
    %c0_i32_1 = arith.constant 0 : i32
    %c0_i32_2 = arith.constant 0 : i32
    return %arg0, %c0_i32, %c0_i32_0, %c0_i32_1 : i32, i32, i32, i32
  }
  func.func @transform_17(%arg0: i32) -> (i32, i32, i32, i32) {
    %c0_i32 = arith.constant 0 : i32
    %c0_i32_0 = arith.constant 0 : i32
    %c0_i32_1 = arith.constant 0 : i32
    %c0_i32_2 = arith.constant 0 : i32
    return %arg0, %c0_i32, %c0_i32_0, %c0_i32_1 : i32, i32, i32, i32
  }
  func.func @transform_18(%arg0: i32) -> (i32, i32, i32, i32) {
    %c0_i32 = arith.constant 0 : i32
    %c0_i32_0 = arith.constant 0 : i32
    %c0_i32_1 = arith.constant 0 : i32
    %c0_i32_2 = arith.constant 0 : i32
    return %arg0, %c0_i32, %c0_i32_0, %c0_i32_1 : i32, i32, i32, i32
  }
  func.func @transform_19(%arg0: i32) -> (i32, i32, i32, i32) {
    %c0_i32 = arith.constant 0 : i32
    %c0_i32_0 = arith.constant 0 : i32
    %c0_i32_1 = arith.constant 0 : i32
    %c0_i32_2 = arith.constant 0 : i32
    return %arg0, %c0_i32, %c0_i32_0, %c0_i32_1 : i32, i32, i32, i32
  }
  func.func @transform_20(%arg0: i32) -> (i32, i32, i32) {
    %c0_i32 = arith.constant 0 : i32
    %c0_i32_0 = arith.constant 0 : i32
    %c0_i32_1 = arith.constant 0 : i32
    return %arg0, %c0_i32, %c0_i32_0 : i32, i32, i32
  }
  func.func @transform_21(%arg0: i32) -> (i32, i32, i32) {
    %c0_i32 = arith.constant 0 : i32
    %c0_i32_0 = arith.constant 0 : i32
    %c0_i32_1 = arith.constant 0 : i32
    return %arg0, %c0_i32, %c0_i32_0 : i32, i32, i32
  }
  func.func @transform_22(%arg0: i32) -> (i32, i32, i32) {
    %c0_i32 = arith.constant 0 : i32
    %c0_i32_0 = arith.constant 0 : i32
    %c0_i32_1 = arith.constant 0 : i32
    return %arg0, %c0_i32, %c0_i32_0 : i32, i32, i32
  }
  func.func @transform_23(%arg0: i32) -> (i32, i32, i32) {
    %c0_i32 = arith.constant 0 : i32
    %c0_i32_0 = arith.constant 0 : i32
    %c0_i32_1 = arith.constant 0 : i32
    return %arg0, %c0_i32, %c0_i32_0 : i32, i32, i32
  }
  func.func @transform_24(%arg0: i32) -> (i32, i32, i32) {
    %c0_i32 = arith.constant 0 : i32
    %c0_i32_0 = arith.constant 0 : i32
    %c0_i32_1 = arith.constant 0 : i32
    return %arg0, %c0_i32, %c0_i32_0 : i32, i32, i32
  }
  func.func @transform_25(%arg0: i32) -> (i32, i32, i32) {
    %c0_i32 = arith.constant 0 : i32
    %c0_i32_0 = arith.constant 0 : i32
    %c0_i32_1 = arith.constant 0 : i32
    return %arg0, %c0_i32, %c0_i32_0 : i32, i32, i32
  }
}

</mosaic_0001>

<llo_original>
// kernel: critic_transformer_policy_forward.1
$region0: #{critic_transformer_policy_forward.1}
  #allocation0 [shape = 'u32[]', space=smem, size = 0x4, offset = 0x4, fixed_abs, tag = 'smem constant byte address 0x4 - core index']
  #allocation1 [shape = 'u32[144,128]{1,0:T(1,128)}', space=vmem, size = 0x12000, scoped, tag = 'internal scratch']
  %s0 = inlined_call_operand.vmem [shape: f32[8,8,17], index: 0, kind: input, shape index: {}]
  %s1 = inlined_call_operand.vmem [shape: f32[64,64], index: 1, kind: input, shape index: {}]
  %s2 = inlined_call_operand.vmem [shape: bf16[2,17,32], index: 2, kind: input, shape index: {}]
  %s3 = inlined_call_operand.vmem [shape: f32[2,1,32], index: 3, kind: input, shape index: {}]
  %s4 = inlined_call_operand.vmem [shape: bf16[2,4,32,16], index: 4, kind: input, shape index: {}]
  %s5 = inlined_call_operand.vmem [shape: f32[2,4,1,16], index: 5, kind: input, shape index: {}]
  %s6 = inlined_call_operand.vmem [shape: bf16[2,4,32,16], index: 6, kind: input, shape index: {}]
  %s7 = inlined_call_operand.vmem [shape: f32[2,4,1,16], index: 7, kind: input, shape index: {}]
  %s8 = inlined_call_operand.vmem [shape: bf16[2,4,32,16], index: 8, kind: input, shape index: {}]
  %s9 = inlined_call_operand.vmem [shape: f32[2,4,1,16], index: 9, kind: input, shape index: {}]
  %s10 = inlined_call_operand.vmem [shape: bf16[2,4,16,32], index: 10, kind: input, shape index: {}]
  %s11 = inlined_call_operand.vmem [shape: f32[2,2,1,32], index: 11, kind: input, shape index: {}]
  %s12 = inlined_call_operand.vmem [shape: f32[2,2,1,32], index: 12, kind: input, shape index: {}]
  %s13 = inlined_call_operand.vmem [shape: f32[2,2,1,32], index: 13, kind: input, shape index: {}]
  %s14 = inlined_call_operand.vmem [shape: bf16[2,2,32,64], index: 14, kind: input, shape index: {}]
  %s15 = inlined_call_operand.vmem [shape: f32[2,2,1,64], index: 15, kind: input, shape index: {}]
  %s16 = inlined_call_operand.vmem [shape: bf16[2,2,64,32], index: 16, kind: input, shape index: {}]
  %s17 = inlined_call_operand.vmem [shape: f32[2,2,1,32], index: 17, kind: input, shape index: {}]
  %s18 = inlined_call_operand.vmem [shape: f32[2,2,1,32], index: 18, kind: input, shape index: {}]
  %s19 = inlined_call_operand.vmem [shape: f32[2,2,1,32], index: 19, kind: input, shape index: {}]
  %s20 = inlined_call_operand.vmem [shape: f32[2,1,32], index: 20, kind: input, shape index: {}]
  %s21 = inlined_call_operand.vmem [shape: f32[2,1,32], index: 21, kind: input, shape index: {}]
  %s22 = inlined_call_operand.vmem [shape: f32[2,1,32], index: 22, kind: input, shape index: {}]
  %s23 = inlined_call_operand.vmem [shape: f32[2,1,17], index: 23, kind: input, shape index: {}]
  %s24 = inlined_call_operand.vmem [shape: f32[2,1,1], index: 24, kind: input, shape index: {}]
  %s25 = inlined_call_operand.vmem [shape: f32[2,8,8], index: 25, kind: output, shape index: {}]
  %s26 = sld [smem:[#allocation0]]
  $region133: #{critic_transformer_policy_forward.1} parent=0
    _
  %s28 = ssub.s32 1, %s26
  %s29 = scalar_select 0, %s28, %s26
  loop: start=0, step=1, limit=4
  $region2: #{critic_transformer_policy_forward.1} parent=0 // loop_pre_header
    _
  $region3: #{critic_transformer_policy_forward.1} parent=0 // loop_header
    %s31 = sphi 0, %s35
    %p32 = scmp.ge.s32.totalorder %s31, 4
    %s39 = sphi 0, %s39
    %s41 = sphi 0, %s39
    %s42 = sphi 0, %s41
    %s56 = sphi 0, %s42
    %s60 = sphi 0, %s60
    %s62 = sphi 0, %s60
    %s63 = sphi 0, %s62
    %s77 = sphi 0, %s63
    %s83 = sphi 0, %s85
    %s86 = sphi 0, %s83
    %s87 = sphi 0, %s86
    %s103 = sphi 0, %s87
    %s109 = sphi 0, %s111
    %s112 = sphi 0, %s109
    %s113 = sphi 0, %s112
    %s129 = sphi 0, %s113
    %s135 = sphi 0, %s137
    %s138 = sphi 0, %s135
    %s139 = sphi 0, %s138
    %s155 = sphi 0, %s139
    %s161 = sphi 0, %s163
    %s164 = sphi 0, %s161
    %s165 = sphi 0, %s164
    %s181 = sphi 0, %s165
    %s187 = sphi 0, %s189
    %s190 = sphi 0, %s187
    %s191 = sphi 0, %s190
    %s207 = sphi 0, %s191
    %s213 = sphi 0, %s215
    %s216 = sphi 0, %s213
    %s217 = sphi 0, %s216
    %s233 = sphi 0, %s217
    %s239 = sphi 0, %s241
    %s242 = sphi 0, %s239
    %s243 = sphi 0, %s242
    %s259 = sphi 0, %s243
    %s265 = sphi 0, %s267
    %s268 = sphi 0, %s265
    %s269 = sphi 0, %s268
    %s285 = sphi 0, %s269
    %s291 = sphi 0, %s293
    %s294 = sphi 0, %s291
    %s295 = sphi 0, %s294
    %s311 = sphi 0, %s295
    %s317 = sphi 0, %s319
    %s320 = sphi 0, %s317
    %s321 = sphi 0, %s320
    %s337 = sphi 0, %s321
    %s343 = sphi 0, %s345
    %s346 = sphi 0, %s343
    %s347 = sphi 0, %s346
    %s363 = sphi 0, %s347
    %s369 = sphi 0, %s371
    %s372 = sphi 0, %s369
    %s373 = sphi 0, %s372
    %s389 = sphi 0, %s373
    %s395 = sphi 0, %s397
    %s398 = sphi 0, %s395
    %s399 = sphi 0, %s398
    %s415 = sphi 0, %s399
    %s421 = sphi 0, %s423
    %s424 = sphi 0, %s421
    %s425 = sphi 0, %s424
    %s441 = sphi 0, %s425
    %s447 = sphi 0, %s449
    %s450 = sphi 0, %s447
    %s451 = sphi 0, %s450
    %s467 = sphi 0, %s451
    %s473 = sphi 0, %s475
    %s476 = sphi 0, %s473
    %s477 = sphi 0, %s476
    %s493 = sphi 0, %s477
    %s499 = sphi 0, %s501
    %s502 = sphi 0, %s499
    %s503 = sphi 0, %s502
    %s519 = sphi 0, %s503
    %s525 = sphi 0, %s527
    %s528 = sphi 0, %s525
    %s529 = sphi 0, %s528
    %s545 = sphi 0, %s529
    %s551 = sphi 0, %s553
    %s554 = sphi 0, %s551
    %s555 = sphi 0, %s554
    %s571 = sphi 0, %s555
    %s577 = sphi 0, %s579
    %s580 = sphi 0, %s577
    %s581 = sphi 0, %s580
    %s597 = sphi 0, %s581
    %s603 = sphi 0, %s605
    %s606 = sphi 0, %s603
    %s607 = sphi 0, %s606
    %s623 = sphi 0, %s607
    %s629 = sphi 0, %s631
    %s632 = sphi 0, %s629
    %s633 = sphi 0, %s632
    %s649 = sphi 0, %s633
    %s655 = sphi 0, %s657
    %s658 = sphi 0, %s655
    %s659 = sphi 0, %s658
    %s675 = sphi 0, %s659
    %s681 = sphi 0, %s683
    %s684 = sphi 0, %s681
    %s685 = sphi 0, %s684
    %s701 = sphi 0, %s685
  $region4: #{critic_transformer_policy_forward.1} parent=0 // loop_header_branch
    %34 = sbr.rel (%p32) target = $region8
  $region5: #{critic_transformer_policy_forward.1} parent=0 // loop_body
    %s36 = ssub.s32 %s31, 1
    %s37 = ssub.s32 %s31, 2
    %s38 = sadd.s32 %s31, 1
    %s40 = sadd.s32 %s39, 1
    %p43 = scmp.eq.s32.totalorder %s31, 1
    %p44 = scmp.ne.s32.totalorder %s39, %s41
    %p45 = scmp.eq.s32.totalorder %s31, 0
    %p46 = por %p44, %p45
    %p47 = scmp.ne.s32.totalorder %s39, %s41
    %p48 = scmp.eq.s32.totalorder %s36, 1
    %p49 = por %p47, %p48
    %p50 = scmp.ne.s32.totalorder %s41, %s42
    %p51 = scmp.eq.s32.totalorder %s36, 0
    %p52 = por %p50, %p51
    %p53 = scmp.ne.s32.totalorder %s41, %s42
    %p54 = scmp.eq.s32.totalorder %s37, 1
    %p55 = por %p53, %p54
    %p57 = scmp.ne.s32.totalorder %s42, %s56
    %p58 = scmp.eq.s32.totalorder %s37, 0
    %p59 = por %p57, %p58
    %s61 = sadd.s32 %s60, 1
    %p64 = scmp.eq.s32.totalorder %s31, 1
    %p65 = scmp.ne.s32.totalorder %s60, %s62
    %p66 = scmp.eq.s32.totalorder %s31, 0
    %p67 = por %p65, %p66
    %p68 = scmp.ne.s32.totalorder %s60, %s62
    %p69 = scmp.eq.s32.totalorder %s36, 1
    %p70 = por %p68, %p69
    %p71 = scmp.ne.s32.totalorder %s62, %s63
    %p72 = scmp.eq.s32.totalorder %s36, 0
    %p73 = por %p71, %p72
    %p74 = scmp.ne.s32.totalorder %s62, %s63
    %p75 = scmp.eq.s32.totalorder %s37, 1
    %p76 = por %p74, %p75
    %p78 = scmp.ne.s32.totalorder %s63, %s77
    %p79 = scmp.eq.s32.totalorder %s37, 0
    %p80 = por %p78, %p79
    %s81 = ssub.s32 %s31, %s38
    %p82 = scmp.eq.s32.totalorder %s81, 0
    %s84 = sadd.s32 %s83, 1
    %s85 = scalar_select %p82, %s83, %s84
    %p88 = pneg %p82
    %p89 = scmp.eq.s32.totalorder %s31, 1
    %p90 = por %p88, %p89
    %p91 = scmp.ne.s32.totalorder %s83, %s86
    %p92 = scmp.eq.s32.totalorder %s31, 0
    %p93 = por %p91, %p92
    %p94 = scmp.ne.s32.totalorder %s83, %s86
    %p95 = scmp.eq.s32.totalorder %s36, 1
    %p96 = por %p94, %p95
    %p97 = scmp.ne.s32.totalorder %s86, %s87
    %p98 = scmp.eq.s32.totalorder %s36, 0
    %p99 = por %p97, %p98
    %p100 = scmp.ne.s32.totalorder %s86, %s87
    %p101 = scmp.eq.s32.totalorder %s37, 1
    %p102 = por %p100, %p101
    %p104 = scmp.ne.s32.totalorder %s87, %s103
    %p105 = scmp.eq.s32.totalorder %s37, 0
    %p106 = por %p104, %p105
    %s107 = ssub.s32 %s31, %s38
    %p108 = scmp.eq.s32.totalorder %s107, 0
    %s110 = sadd.s32 %s109, 1
    %s111 = scalar_select %p108, %s109, %s110
    %p114 = pneg %p108
    %p115 = scmp.eq.s32.totalorder %s31, 1
    %p116 = por %p114, %p115
    %p117 = scmp.ne.s32.totalorder %s109, %s112
    %p118 = scmp.eq.s32.totalorder %s31, 0
    %p119 = por %p117, %p118
    %p120 = scmp.ne.s32.totalorder %s109, %s112
    %p121 = scmp.eq.s32.totalorder %s36, 1
    %p122 = por %p120, %p121
    %p123 = scmp.ne.s32.totalorder %s112, %s113
    %p124 = scmp.eq.s32.totalorder %s36, 0
    %p125 = por %p123, %p124
    %p126 = scmp.ne.s32.totalorder %s112, %s113
    %p127 = scmp.eq.s32.totalorder %s37, 1
    %p128 = por %p126, %p127
    %p130 = scmp.ne.s32.totalorder %s113, %s129
    %p131 = scmp.eq.s32.totalorder %s37, 0
    %p132 = por %p130, %p131
    %s133 = ssub.s32 %s31, %s38
    %p134 = scmp.eq.s32.totalorder %s133, 0
    %s136 = sadd.s32 %s135, 1
    %s137 = scalar_select %p134, %s135, %s136
    %p140 = pneg %p134
    %p141 = scmp.eq.s32.totalorder %s31, 1
    %p142 = por %p140, %p141
    %p143 = scmp.ne.s32.totalorder %s135, %s138
    %p144 = scmp.eq.s32.totalorder %s31, 0
    %p145 = por %p143, %p144
    %p146 = scmp.ne.s32.totalorder %s135, %s138
    %p147 = scmp.eq.s32.totalorder %s36, 1
    %p148 = por %p146, %p147
    %p149 = scmp.ne.s32.totalorder %s138, %s139
    %p150 = scmp.eq.s32.totalorder %s36, 0
    %p151 = por %p149, %p150
    %p152 = scmp.ne.s32.totalorder %s138, %s139
    %p153 = scmp.eq.s32.totalorder %s37, 1
    %p154 = por %p152, %p153
    %p156 = scmp.ne.s32.totalorder %s139, %s155
    %p157 = scmp.eq.s32.totalorder %s37, 0
    %p158 = por %p156, %p157
    %s159 = ssub.s32 %s31, %s38
    %p160 = scmp.eq.s32.totalorder %s159, 0
    %s162 = sadd.s32 %s161, 1
    %s163 = scalar_select %p160, %s161, %s162
    %p166 = pneg %p160
    %p167 = scmp.eq.s32.totalorder %s31, 1
    %p168 = por %p166, %p167
    %p169 = scmp.ne.s32.totalorder %s161, %s164
    %p170 = scmp.eq.s32.totalorder %s31, 0
    %p171 = por %p169, %p170
    %p172 = scmp.ne.s32.totalorder %s161, %s164
    %p173 = scmp.eq.s32.totalorder %s36, 1
    %p174 = por %p172, %p173
    %p175 = scmp.ne.s32.totalorder %s164, %s165
    %p176 = scmp.eq.s32.totalorder %s36, 0
    %p177 = por %p175, %p176
    %p178 = scmp.ne.s32.totalorder %s164, %s165
    %p179 = scmp.eq.s32.totalorder %s37, 1
    %p180 = por %p178, %p179
    %p182 = scmp.ne.s32.totalorder %s165, %s181
    %p183 = scmp.eq.s32.totalorder %s37, 0
    %p184 = por %p182, %p183
    %s185 = ssub.s32 %s31, %s38
    %p186 = scmp.eq.s32.totalorder %s185, 0
    %s188 = sadd.s32 %s187, 1
    %s189 = scalar_select %p186, %s187, %s188
    %p192 = pneg %p186
    %p193 = scmp.eq.s32.totalorder %s31, 1
    %p194 = por %p192, %p193
    %p195 = scmp.ne.s32.totalorder %s187, %s190
    %p196 = scmp.eq.s32.totalorder %s31, 0
    %p197 = por %p195, %p196
    %p198 = scmp.ne.s32.totalorder %s187, %s190
    %p199 = scmp.eq.s32.totalorder %s36, 1
    %p200 = por %p198, %p199
    %p201 = scmp.ne.s32.totalorder %s190, %s191
    %p202 = scmp.eq.s32.totalorder %s36, 0
    %p203 = por %p201, %p202
    %p204 = scmp.ne.s32.totalorder %s190, %s191
    %p205 = scmp.eq.s32.totalorder %s37, 1
    %p206 = por %p204, %p205
    %p208 = scmp.ne.s32.totalorder %s191, %s207
    %p209 = scmp.eq.s32.totalorder %s37, 0
    %p210 = por %p208, %p209
    %s211 = ssub.s32 %s31, %s38
    %p212 = scmp.eq.s32.totalorder %s211, 0
    %s214 = sadd.s32 %s213, 1
    %s215 = scalar_select %p212, %s213, %s214
    %p218 = pneg %p212
    %p219 = scmp.eq.s32.totalorder %s31, 1
    %p220 = por %p218, %p219
    %p221 = scmp.ne.s32.totalorder %s213, %s216
    %p222 = scmp.eq.s32.totalorder %s31, 0
    %p223 = por %p221, %p222
    %p224 = scmp.ne.s32.totalorder %s213, %s216
    %p225 = scmp.eq.s32.totalorder %s36, 1
    %p226 = por %p224, %p225
    %p227 = scmp.ne.s32.totalorder %s216, %s217
    %p228 = scmp.eq.s32.totalorder %s36, 0
    %p229 = por %p227, %p228
    %p230 = scmp.ne.s32.totalorder %s216, %s217
    %p231 = scmp.eq.s32.totalorder %s37, 1
    %p232 = por %p230, %p231
    %p234 = scmp.ne.s32.totalorder %s217, %s233
    %p235 = scmp.eq.s32.totalorder %s37, 0
    %p236 = por %p234, %p235
    %s237 = ssub.s32 %s31, %s38
    %p238 = scmp.eq.s32.totalorder %s237, 0
    %s240 = sadd.s32 %s239, 1
    %s241 = scalar_select %p238, %s239, %s240
    %p244 = pneg %p238
    %p245 = scmp.eq.s32.totalorder %s31, 1
    %p246 = por %p244, %p245
    %p247 = scmp.ne.s32.totalorder %s239, %s242
    %p248 = scmp.eq.s32.totalorder %s31, 0
    %p249 = por %p247, %p248
    %p250 = scmp.ne.s32.totalorder %s239, %s242
    %p251 = scmp.eq.s32.totalorder %s36, 1
    %p252 = por %p250, %p251
    %p253 = scmp.ne.s32.totalorder %s242, %s243
    %p254 = scmp.eq.s32.totalorder %s36, 0
    %p255 = por %p253, %p254
    %p256 = scmp.ne.s32.totalorder %s242, %s243
    %p257 = scmp.eq.s32.totalorder %s37, 1
    %p258 = por %p256, %p257
    %p260 = scmp.ne.s32.totalorder %s243, %s259
    %p261 = scmp.eq.s32.totalorder %s37, 0
    %p262 = por %p260, %p261
    %s263 = ssub.s32 %s31, %s38
    %p264 = scmp.eq.s32.totalorder %s263, 0
    %s266 = sadd.s32 %s265, 1
    %s267 = scalar_select %p264, %s265, %s266
    %p270 = pneg %p264
    %p271 = scmp.eq.s32.totalorder %s31, 1
    %p272 = por %p270, %p271
    %p273 = scmp.ne.s32.totalorder %s265, %s268
    %p274 = scmp.eq.s32.totalorder %s31, 0
    %p275 = por %p273, %p274
    %p276 = scmp.ne.s32.totalorder %s265, %s268
    %p277 = scmp.eq.s32.totalorder %s36, 1
    %p278 = por %p276, %p277
    %p279 = scmp.ne.s32.totalorder %s268, %s269
    %p280 = scmp.eq.s32.totalorder %s36, 0
    %p281 = por %p279, %p280
    %p282 = scmp.ne.s32.totalorder %s268, %s269
    %p283 = scmp.eq.s32.totalorder %s37, 1
    %p284 = por %p282, %p283
    %p286 = scmp.ne.s32.totalorder %s269, %s285
    %p287 = scmp.eq.s32.totalorder %s37, 0
    %p288 = por %p286, %p287
    %s289 = ssub.s32 %s31, %s38
    %p290 = scmp.eq.s32.totalorder %s289, 0
    %s292 = sadd.s32 %s291, 1
    %s293 = scalar_select %p290, %s291, %s292
    %p296 = pneg %p290
    %p297 = scmp.eq.s32.totalorder %s31, 1
    %p298 = por %p296, %p297
    %p299 = scmp.ne.s32.totalorder %s291, %s294
    %p300 = scmp.eq.s32.totalorder %s31, 0
    %p301 = por %p299, %p300
    %p302 = scmp.ne.s32.totalorder %s291, %s294
    %p303 = scmp.eq.s32.totalorder %s36, 1
    %p304 = por %p302, %p303
    %p305 = scmp.ne.s32.totalorder %s294, %s295
    %p306 = scmp.eq.s32.totalorder %s36, 0
    %p307 = por %p305, %p306
    %p308 = scmp.ne.s32.totalorder %s294, %s295
    %p309 = scmp.eq.s32.totalorder %s37, 1
    %p310 = por %p308, %p309
    %p312 = scmp.ne.s32.totalorder %s295, %s311
    %p313 = scmp.eq.s32.totalorder %s37, 0
    %p314 = por %p312, %p313
    %s315 = ssub.s32 %s31, %s38
    %p316 = scmp.eq.s32.totalorder %s315, 0
    %s318 = sadd.s32 %s317, 1
    %s319 = scalar_select %p316, %s317, %s318
    %p322 = pneg %p316
    %p323 = scmp.eq.s32.totalorder %s31, 1
    %p324 = por %p322, %p323
    %p325 = scmp.ne.s32.totalorder %s317, %s320
    %p326 = scmp.eq.s32.totalorder %s31, 0
    %p327 = por %p325, %p326
    %p328 = scmp.ne.s32.totalorder %s317, %s320
    %p329 = scmp.eq.s32.totalorder %s36, 1
    %p330 = por %p328, %p329
    %p331 = scmp.ne.s32.totalorder %s320, %s321
    %p332 = scmp.eq.s32.totalorder %s36, 0
    %p333 = por %p331, %p332
    %p334 = scmp.ne.s32.totalorder %s320, %s321
    %p335 = scmp.eq.s32.totalorder %s37, 1
    %p336 = por %p334, %p335
    %p338 = scmp.ne.s32.totalorder %s321, %s337
    %p339 = scmp.eq.s32.totalorder %s37, 0
    %p340 = por %p338, %p339
    %s341 = ssub.s32 %s31, %s38
    %p342 = scmp.eq.s32.totalorder %s341, 0
    %s344 = sadd.s32 %s343, 1
    %s345 = scalar_select %p342, %s343, %s344
    %p348 = pneg %p342
    %p349 = scmp.eq.s32.totalorder %s31, 1
    %p350 = por %p348, %p349
    %p351 = scmp.ne.s32.totalorder %s343, %s346
    %p352 = scmp.eq.s32.totalorder %s31, 0
    %p353 = por %p351, %p352
    %p354 = scmp.ne.s32.totalorder %s343, %s346
    %p355 = scmp.eq.s32.totalorder %s36, 1
    %p356 = por %p354, %p355
    %p357 = scmp.ne.s32.totalorder %s346, %s347
    %p358 = scmp.eq.s32.totalorder %s36, 0
    %p359 = por %p357, %p358
    %p360 = scmp.ne.s32.totalorder %s346, %s347
    %p361 = scmp.eq.s32.totalorder %s37, 1
    %p362 = por %p360, %p361
    %p364 = scmp.ne.s32.totalorder %s347, %s363
    %p365 = scmp.eq.s32.totalorder %s37, 0
    %p366 = por %p364, %p365
    %s367 = ssub.s32 %s31, %s38
    %p368 = scmp.eq.s32.totalorder %s367, 0
    %s370 = sadd.s32 %s369, 1
    %s371 = scalar_select %p368, %s369, %s370
    %p374 = pneg %p368
    %p375 = scmp.eq.s32.totalorder %s31, 1
    %p376 = por %p374, %p375
    %p377 = scmp.ne.s32.totalorder %s369, %s372
    %p378 = scmp.eq.s32.totalorder %s31, 0
    %p379 = por %p377, %p378
    %p380 = scmp.ne.s32.totalorder %s369, %s372
    %p381 = scmp.eq.s32.totalorder %s36, 1
    %p382 = por %p380, %p381
    %p383 = scmp.ne.s32.totalorder %s372, %s373
    %p384 = scmp.eq.s32.totalorder %s36, 0
    %p385 = por %p383, %p384
    %p386 = scmp.ne.s32.totalorder %s372, %s373
    %p387 = scmp.eq.s32.totalorder %s37, 1
    %p388 = por %p386, %p387
    %p390 = scmp.ne.s32.totalorder %s373, %s389
    %p391 = scmp.eq.s32.totalorder %s37, 0
    %p392 = por %p390, %p391
    %s393 = ssub.s32 %s31, %s38
    %p394 = scmp.eq.s32.totalorder %s393, 0
    %s396 = sadd.s32 %s395, 1
    %s397 = scalar_select %p394, %s395, %s396
    %p400 = pneg %p394
    %p401 = scmp.eq.s32.totalorder %s31, 1
    %p402 = por %p400, %p401
    %p403 = scmp.ne.s32.totalorder %s395, %s398
    %p404 = scmp.eq.s32.totalorder %s31, 0
    %p405 = por %p403, %p404
    %p406 = scmp.ne.s32.totalorder %s395, %s398
    %p407 = scmp.eq.s32.totalorder %s36, 1
    %p408 = por %p406, %p407
    %p409 = scmp.ne.s32.totalorder %s398, %s399
    %p410 = scmp.eq.s32.totalorder %s36, 0
    %p411 = por %p409, %p410
    %p412 = scmp.ne.s32.totalorder %s398, %s399
    %p413 = scmp.eq.s32.totalorder %s37, 1
    %p414 = por %p412, %p413
    %p416 = scmp.ne.s32.totalorder %s399, %s415
    %p417 = scmp.eq.s32.totalorder %s37, 0
    %p418 = por %p416, %p417
    %s419 = ssub.s32 %s31, %s38
    %p420 = scmp.eq.s32.totalorder %s419, 0
    %s422 = sadd.s32 %s421, 1
    %s423 = scalar_select %p420, %s421, %s422
    %p426 = pneg %p420
    %p427 = scmp.eq.s32.totalorder %s31, 1
    %p428 = por %p426, %p427
    %p429 = scmp.ne.s32.totalorder %s421, %s424
    %p430 = scmp.eq.s32.totalorder %s31, 0
    %p431 = por %p429, %p430
    %p432 = scmp.ne.s32.totalorder %s421, %s424
    %p433 = scmp.eq.s32.totalorder %s36, 1
    %p434 = por %p432, %p433
    %p435 = scmp.ne.s32.totalorder %s424, %s425
    %p436 = scmp.eq.s32.totalorder %s36, 0
    %p437 = por %p435, %p436
    %p438 = scmp.ne.s32.totalorder %s424, %s425
    %p439 = scmp.eq.s32.totalorder %s37, 1
    %p440 = por %p438, %p439
    %p442 = scmp.ne.s32.totalorder %s425, %s441
    %p443 = scmp.eq.s32.totalorder %s37, 0
    %p444 = por %p442, %p443
    %s445 = ssub.s32 %s31, %s38
    %p446 = scmp.eq.s32.totalorder %s445, 0
    %s448 = sadd.s32 %s447, 1
    %s449 = scalar_select %p446, %s447, %s448
    %p452 = pneg %p446
    %p453 = scmp.eq.s32.totalorder %s31, 1
    %p454 = por %p452, %p453
    %p455 = scmp.ne.s32.totalorder %s447, %s450
    %p456 = scmp.eq.s32.totalorder %s31, 0
    %p457 = por %p455, %p456
    %p458 = scmp.ne.s32.totalorder %s447, %s450
    %p459 = scmp.eq.s32.totalorder %s36, 1
    %p460 = por %p458, %p459
    %p461 = scmp.ne.s32.totalorder %s450, %s451
    %p462 = scmp.eq.s32.totalorder %s36, 0
    %p463 = por %p461, %p462
    %p464 = scmp.ne.s32.totalorder %s450, %s451
    %p465 = scmp.eq.s32.totalorder %s37, 1
    %p466 = por %p464, %p465
    %p468 = scmp.ne.s32.totalorder %s451, %s467
    %p469 = scmp.eq.s32.totalorder %s37, 0
    %p470 = por %p468, %p469
    %s471 = ssub.s32 %s31, %s38
    %p472 = scmp.eq.s32.totalorder %s471, 0
    %s474 = sadd.s32 %s473, 1
    %s475 = scalar_select %p472, %s473, %s474
    %p478 = pneg %p472
    %p479 = scmp.eq.s32.totalorder %s31, 1
    %p480 = por %p478, %p479
    %p481 = scmp.ne.s32.totalorder %s473, %s476
    %p482 = scmp.eq.s32.totalorder %s31, 0
    %p483 = por %p481, %p482
    %p484 = scmp.ne.s32.totalorder %s473, %s476
    %p485 = scmp.eq.s32.totalorder %s36, 1
    %p486 = por %p484, %p485
    %p487 = scmp.ne.s32.totalorder %s476, %s477
    %p488 = scmp.eq.s32.totalorder %s36, 0
    %p489 = por %p487, %p488
    %p490 = scmp.ne.s32.totalorder %s476, %s477
    %p491 = scmp.eq.s32.totalorder %s37, 1
    %p492 = por %p490, %p491
    %p494 = scmp.ne.s32.totalorder %s477, %s493
    %p495 = scmp.eq.s32.totalorder %s37, 0
    %p496 = por %p494, %p495
    %s497 = ssub.s32 %s31, %s38
    %p498 = scmp.eq.s32.totalorder %s497, 0
    %s500 = sadd.s32 %s499, 1
    %s501 = scalar_select %p498, %s499, %s500
    %p504 = pneg %p498
    %p505 = scmp.eq.s32.totalorder %s31, 1
    %p506 = por %p504, %p505
    %p507 = scmp.ne.s32.totalorder %s499, %s502
    %p508 = scmp.eq.s32.totalorder %s31, 0
    %p509 = por %p507, %p508
    %p510 = scmp.ne.s32.totalorder %s499, %s502
    %p511 = scmp.eq.s32.totalorder %s36, 1
    %p512 = por %p510, %p511
    %p513 = scmp.ne.s32.totalorder %s502, %s503
    %p514 = scmp.eq.s32.totalorder %s36, 0
    %p515 = por %p513, %p514
    %p516 = scmp.ne.s32.totalorder %s502, %s503
    %p517 = scmp.eq.s32.totalorder %s37, 1
    %p518 = por %p516, %p517
    %p520 = scmp.ne.s32.totalorder %s503, %s519
    %p521 = scmp.eq.s32.totalorder %s37, 0
    %p522 = por %p520, %p521
    %s523 = ssub.s32 %s31, %s38
    %p524 = scmp.eq.s32.totalorder %s523, 0
    %s526 = sadd.s32 %s525, 1
    %s527 = scalar_select %p524, %s525, %s526
    %p530 = pneg %p524
    %p531 = scmp.eq.s32.totalorder %s31, 1
    %p532 = por %p530, %p531
    %p533 = scmp.ne.s32.totalorder %s525, %s528
    %p534 = scmp.eq.s32.totalorder %s31, 0
    %p535 = por %p533, %p534
    %p536 = scmp.ne.s32.totalorder %s525, %s528
    %p537 = scmp.eq.s32.totalorder %s36, 1
    %p538 = por %p536, %p537
    %p539 = scmp.ne.s32.totalorder %s528, %s529
    %p540 = scmp.eq.s32.totalorder %s36, 0
    %p541 = por %p539, %p540
    %p542 = scmp.ne.s32.totalorder %s528, %s529
    %p543 = scmp.eq.s32.totalorder %s37, 1
    %p544 = por %p542, %p543
    %p546 = scmp.ne.s32.totalorder %s529, %s545
    %p547 = scmp.eq.s32.totalorder %s37, 0
    %p548 = por %p546, %p547
    %s549 = ssub.s32 %s31, %s38
    %p550 = scmp.eq.s32.totalorder %s549, 0
    %s552 = sadd.s32 %s551, 1
    %s553 = scalar_select %p550, %s551, %s552
    %p556 = pneg %p550
    %p557 = scmp.eq.s32.totalorder %s31, 1
    %p558 = por %p556, %p557
    %p559 = scmp.ne.s32.totalorder %s551, %s554
    %p560 = scmp.eq.s32.totalorder %s31, 0
    %p561 = por %p559, %p560
    %p562 = scmp.ne.s32.totalorder %s551, %s554
    %p563 = scmp.eq.s32.totalorder %s36, 1
    %p564 = por %p562, %p563
    %p565 = scmp.ne.s32.totalorder %s554, %s555
    %p566 = scmp.eq.s32.totalorder %s36, 0
    %p567 = por %p565, %p566
    %p568 = scmp.ne.s32.totalorder %s554, %s555
    %p569 = scmp.eq.s32.totalorder %s37, 1
    %p570 = por %p568, %p569
    %p572 = scmp.ne.s32.totalorder %s555, %s571
    %p573 = scmp.eq.s32.totalorder %s37, 0
    %p574 = por %p572, %p573
    %s575 = ssub.s32 %s31, %s38
    %p576 = scmp.eq.s32.totalorder %s575, 0
    %s578 = sadd.s32 %s577, 1
    %s579 = scalar_select %p576, %s577, %s578
    %p582 = pneg %p576
    %p583 = scmp.eq.s32.totalorder %s31, 1
    %p584 = por %p582, %p583
    %p585 = scmp.ne.s32.totalorder %s577, %s580
    %p586 = scmp.eq.s32.totalorder %s31, 0
    %p587 = por %p585, %p586
    %p588 = scmp.ne.s32.totalorder %s577, %s580
    %p589 = scmp.eq.s32.totalorder %s36, 1
    %p590 = por %p588, %p589
    %p591 = scmp.ne.s32.totalorder %s580, %s581
    %p592 = scmp.eq.s32.totalorder %s36, 0
    %p593 = por %p591, %p592
    %p594 = scmp.ne.s32.totalorder %s580, %s581
    %p595 = scmp.eq.s32.totalorder %s37, 1
    %p596 = por %p594, %p595
    %p598 = scmp.ne.s32.totalorder %s581, %s597
    %p599 = scmp.eq.s32.totalorder %s37, 0
    %p600 = por %p598, %p599
    %s601 = ssub.s32 %s31, %s38
    %p602 = scmp.eq.s32.totalorder %s601, 0
    %s604 = sadd.s32 %s603, 1
    %s605 = scalar_select %p602, %s603, %s604
    %p608 = pneg %p602
    %p609 = scmp.eq.s32.totalorder %s31, 1
    %p610 = por %p608, %p609
    %p611 = scmp.ne.s32.totalorder %s603, %s606
    %p612 = scmp.eq.s32.totalorder %s31, 0
    %p613 = por %p611, %p612
    %p614 = scmp.ne.s32.totalorder %s603, %s606
    %p615 = scmp.eq.s32.totalorder %s36, 1
    %p616 = por %p614, %p615
    %p617 = scmp.ne.s32.totalorder %s606, %s607
    %p618 = scmp.eq.s32.totalorder %s36, 0
    %p619 = por %p617, %p618
    %p620 = scmp.ne.s32.totalorder %s606, %s607
    %p621 = scmp.eq.s32.totalorder %s37, 1
    %p622 = por %p620, %p621
    %p624 = scmp.ne.s32.totalorder %s607, %s623
    %p625 = scmp.eq.s32.totalorder %s37, 0
    %p626 = por %p624, %p625
    %s627 = ssub.s32 %s31, %s38
    %p628 = scmp.eq.s32.totalorder %s627, 0
    %s630 = sadd.s32 %s629, 1
    %s631 = scalar_select %p628, %s629, %s630
    %p634 = pneg %p628
    %p635 = scmp.eq.s32.totalorder %s31, 1
    %p636 = por %p634, %p635
    %p637 = scmp.ne.s32.totalorder %s629, %s632
    %p638 = scmp.eq.s32.totalorder %s31, 0
    %p639 = por %p637, %p638
    %p640 = scmp.ne.s32.totalorder %s629, %s632
    %p641 = scmp.eq.s32.totalorder %s36, 1
    %p642 = por %p640, %p641
    %p643 = scmp.ne.s32.totalorder %s632, %s633
    %p644 = scmp.eq.s32.totalorder %s36, 0
    %p645 = por %p643, %p644
    %p646 = scmp.ne.s32.totalorder %s632, %s633
    %p647 = scmp.eq.s32.totalorder %s37, 1
    %p648 = por %p646, %p647
    %p650 = scmp.ne.s32.totalorder %s633, %s649
    %p651 = scmp.eq.s32.totalorder %s37, 0
    %p652 = por %p650, %p651
    %s653 = ssub.s32 %s31, %s38
    %p654 = scmp.eq.s32.totalorder %s653, 0
    %s656 = sadd.s32 %s655, 1
    %s657 = scalar_select %p654, %s655, %s656
    %p660 = pneg %p654
    %p661 = scmp.eq.s32.totalorder %s31, 1
    %p662 = por %p660, %p661
    %p663 = scmp.ne.s32.totalorder %s655, %s658
    %p664 = scmp.eq.s32.totalorder %s31, 0
    %p665 = por %p663, %p664
    %p666 = scmp.ne.s32.totalorder %s655, %s658
    %p667 = scmp.eq.s32.totalorder %s36, 1
    %p668 = por %p666, %p667
    %p669 = scmp.ne.s32.totalorder %s658, %s659
    %p670 = scmp.eq.s32.totalorder %s36, 0
    %p671 = por %p669, %p670
    %p672 = scmp.ne.s32.totalorder %s658, %s659
    %p673 = scmp.eq.s32.totalorder %s37, 1
    %p674 = por %p672, %p673
    %p676 = scmp.ne.s32.totalorder %s659, %s675
    %p677 = scmp.eq.s32.totalorder %s37, 0
    %p678 = por %p676, %p677
    %s679 = ssub.s32 %s31, %s38
    %p680 = scmp.eq.s32.totalorder %s679, 0
    %s682 = sadd.s32 %s681, 1
    %s683 = scalar_select %p680, %s681, %s682
    %p686 = pneg %p680
    %p687 = scmp.eq.s32.totalorder %s31, 1
    %p688 = por %p686, %p687
    %p689 = scmp.ne.s32.totalorder %s681, %s684
    %p690 = scmp.eq.s32.totalorder %s31, 0
    %p691 = por %p689, %p690
    %p692 = scmp.ne.s32.totalorder %s681, %s684
    %p693 = scmp.eq.s32.totalorder %s36, 1
    %p694 = por %p692, %p693
    %p695 = scmp.ne.s32.totalorder %s684, %s685
    %p696 = scmp.eq.s32.totalorder %s36, 0
    %p697 = por %p695, %p696
    %p698 = scmp.ne.s32.totalorder %s684, %s685
    %p699 = scmp.eq.s32.totalorder %s37, 1
    %p700 = por %p698, %p699
    %p702 = scmp.ne.s32.totalorder %s685, %s701
    %p703 = scmp.eq.s32.totalorder %s37, 0
    %p704 = por %p702, %p703
    %p705 = scmp.le.s32.totalorder 1, %s31
    %p706 = scmp.lt.s32.totalorder %s31, 3
    %p707 = pnand %p705, %p706
    %p708 = pneg %p707
    // Predicated region
    $region9: #{critic_transformer_policy_forward.1} parent=5 // pred_check
      _
    $region10: #{critic_transformer_policy_forward.1} parent=5 // pred_check_branch
      %710 = sbr.rel (%p707) target = $region12
    $region11: #{critic_transformer_policy_forward.1} parent=5 // pred_region
      %s711 = ssub.s32 %s31, 1
      // Predicated region
      $region13: #{critic_transformer_policy_forward.1} parent=11 // pred_check
        %p712 = pneg %p52
      $region14: #{critic_transformer_policy_forward.1} parent=11 // pred_check_branch
        %714 = sbr.rel (%p712) target = $region16
      $region15: #{critic_transformer_policy_forward.1} parent=11 // pred_region
        _
      $region16: #{critic_transformer_policy_forward.1} parent=11 // pred_fallthru
        _
      // Predicated region
      $region17: #{critic_transformer_policy_forward.1} parent=11 // pred_check
        %p715 = pneg %p73
      $region18: #{critic_transformer_policy_forward.1} parent=11 // pred_check_branch
        %717 = sbr.rel (%p715) target = $region20
      $region19: #{critic_transformer_policy_forward.1} parent=11 // pred_region
        _
      $region20: #{critic_transformer_policy_forward.1} parent=11 // pred_fallthru
        _
    $region12: #{critic_transformer_policy_forward.1} parent=5 // pred_fallthru
      _
    %p718 = scmp.lt.s32.totalorder %s31, 2
    // Predicated region
    $region21: #{critic_transformer_policy_forward.1} parent=5 // pred_check
      %p719 = pneg %p718
    $region22: #{critic_transformer_policy_forward.1} parent=5 // pred_check_branch
      %721 = sbr.rel (%p719) target = $region24
    $region23: #{critic_transformer_policy_forward.1} parent=5 // pred_region
      // Predicated region
      $region25: #{critic_transformer_policy_forward.1} parent=23 // pred_check
        %p722 = pneg %p93
      $region26: #{critic_transformer_policy_forward.1} parent=23 // pred_check_branch
        %724 = sbr.rel (%p722) target = $region28
      $region27: #{critic_transformer_policy_forward.1} parent=23 // pred_region
        %p725 = scmp.lt.s32.totalorder %s31, 1
        %s726 = scalar_select %p725, %s31, 1
        %s727 = smul.addr %s726, 3
        %s728 = smul.addr %s727, 4
        %s729 = scalar_lea.vmem %s2, %s728
      $region28: #{critic_transformer_policy_forward.1} parent=23 // pred_fallthru
        _
      // Predicated region
      $region29: #{critic_transformer_policy_forward.1} parent=23 // pred_check
        %p730 = pneg %p119
      $region30: #{critic_transformer_policy_forward.1} parent=23 // pred_check_branch
        %732 = sbr.rel (%p730) target = $region32
      $region31: #{critic_transformer_policy_forward.1} parent=23 // pred_region
        %p733 = scmp.lt.s32.totalorder %s31, 1
        %s734 = scalar_select %p733, %s31, 1
        %s735 = scalar_lea.vmem %s3, %s734
      $region32: #{critic_transformer_policy_forward.1} parent=23 // pred_fallthru
        _
      // Predicated region
      $region33: #{critic_transformer_policy_forward.1} parent=23 // pred_check
        %p736 = pneg %p145
      $region34: #{critic_transformer_policy_forward.1} parent=23 // pred_check_branch
        %738 = sbr.rel (%p736) target = $region36
      $region35: #{critic_transformer_policy_forward.1} parent=23 // pred_region
        %p739 = scmp.lt.s32.totalorder %s31, 1
        %s740 = scalar_select %p739, %s31, 1
        %s741 = smul.addr %s740, 16
        %s742 = smul.addr %s741, 4
        %s743 = scalar_lea.vmem %s4, %s742
      $region36: #{critic_transformer_policy_forward.1} parent=23 // pred_fallthru
        _
      // Predicated region
      $region37: #{critic_transformer_policy_forward.1} parent=23 // pred_check
        %p744 = pneg %p171
      $region38: #{critic_transformer_policy_forward.1} parent=23 // pred_check_branch
        %746 = sbr.rel (%p744) target = $region40
      $region39: #{critic_transformer_policy_forward.1} parent=23 // pred_region
        %p747 = scmp.lt.s32.totalorder %s31, 1
        %s748 = scalar_select %p747, %s31, 1
        %s749 = smul.addr %s748, 4
        %s750 = scalar_lea.vmem %s5, %s749
      $region40: #{critic_transformer_policy_forward.1} parent=23 // pred_fallthru
        _
      // Predicated region
      $region41: #{critic_transformer_policy_forward.1} parent=23 // pred_check
        %p751 = pneg %p197
      $region42: #{critic_transformer_policy_forward.1} parent=23 // pred_check_branch
        %753 = sbr.rel (%p751) target = $region44
      $region43: #{critic_transformer_policy_forward.1} parent=23 // pred_region
        %p754 = scmp.lt.s32.totalorder %s31, 1
        %s755 = scalar_select %p754, %s31, 1
        %s756 = smul.addr %s755, 16
        %s757 = smul.addr %s756, 4
        %s758 = scalar_lea.vmem %s6, %s757
      $region44: #{critic_transformer_policy_forward.1} parent=23 // pred_fallthru
        _
      // Predicated region
      $region45: #{critic_transformer_policy_forward.1} parent=23 // pred_check
        %p759 = pneg %p223
      $region46: #{critic_transformer_policy_forward.1} parent=23 // pred_check_branch
        %761 = sbr.rel (%p759) target = $region48
      $region47: #{critic_transformer_policy_forward.1} parent=23 // pred_region
        %p762 = scmp.lt.s32.totalorder %s31, 1
        %s763 = scalar_select %p762, %s31, 1
        %s764 = smul.addr %s763, 4
        %s765 = scalar_lea.vmem %s7, %s764
      $region48: #{critic_transformer_policy_forward.1} parent=23 // pred_fallthru
        _
      // Predicated region
      $region49: #{critic_transformer_policy_forward.1} parent=23 // pred_check
        %p766 = pneg %p249
      $region50: #{critic_transformer_policy_forward.1} parent=23 // pred_check_branch
        %768 = sbr.rel (%p766) target = $region52
      $region51: #{critic_transformer_policy_forward.1} parent=23 // pred_region
        %p769 = scmp.lt.s32.totalorder %s31, 1
        %s770 = scalar_select %p769, %s31, 1
        %s771 = smul.addr %s770, 16
        %s772 = smul.addr %s771, 4
        %s773 = scalar_lea.vmem %s8, %s772
      $region52: #{critic_transformer_policy_forward.1} parent=23 // pred_fallthru
        _
      // Predicated region
      $region53: #{critic_transformer_policy_forward.1} parent=23 // pred_check
        %p774 = pneg %p275
      $region54: #{critic_transformer_policy_forward.1} parent=23 // pred_check_branch
        %776 = sbr.rel (%p774) target = $region56
      $region55: #{critic_transformer_policy_forward.1} parent=23 // pred_region
        %p777 = scmp.lt.s32.totalorder %s31, 1
        %s778 = scalar_select %p777, %s31, 1
        %s779 = smul.addr %s778, 4
        %s780 = scalar_lea.vmem %s9, %s779
      $region56: #{critic_transformer_policy_forward.1} parent=23 // pred_fallthru
        _
      // Predicated region
      $region57: #{critic_transformer_policy_forward.1} parent=23 // pred_check
        %p781 = pneg %p301
      $region58: #{critic_transformer_policy_forward.1} parent=23 // pred_check_branch
        %783 = sbr.rel (%p781) target = $region60
      $region59: #{critic_transformer_policy_forward.1} parent=23 // pred_region
        %p784 = scmp.lt.s32.totalorder %s31, 1
        %s785 = scalar_select %p784, %s31, 1
        %s786 = smul.addr %s785, 8
        %s787 = smul.addr %s786, 4
        %s788 = scalar_lea.vmem %s10, %s787
      $region60: #{critic_transformer_policy_forward.1} parent=23 // pred_fallthru
        _
      // Predicated region
      $region61: #{critic_transformer_policy_forward.1} parent=23 // pred_check
        %p789 = pneg %p327
      $region62: #{critic_transformer_policy_forward.1} parent=23 // pred_check_branch
        %791 = sbr.rel (%p789) target = $region64
      $region63: #{critic_transformer_policy_forward.1} parent=23 // pred_region
        %p792 = scmp.lt.s32.totalorder %s31, 1
        %s793 = scalar_select %p792, %s31, 1
        %s794 = smul.addr %s793, 2
        %s795 = scalar_lea.vmem %s11, %s794
      $region64: #{critic_transformer_policy_forward.1} parent=23 // pred_fallthru
        _
      // Predicated region
      $region65: #{critic_transformer_policy_forward.1} parent=23 // pred_check
        %p796 = pneg %p353
      $region66: #{critic_transformer_policy_forward.1} parent=23 // pred_check_branch
        %798 = sbr.rel (%p796) target = $region68
      $region67: #{critic_transformer_policy_forward.1} parent=23 // pred_region
        %p799 = scmp.lt.s32.totalorder %s31, 1
        %s800 = scalar_select %p799, %s31, 1
        %s801 = smul.addr %s800, 2
        %s802 = scalar_lea.vmem %s12, %s801
      $region68: #{critic_transformer_policy_forward.1} parent=23 // pred_fallthru
        _
      // Predicated region
      $region69: #{critic_transformer_policy_forward.1} parent=23 // pred_check
        %p803 = pneg %p379
      $region70: #{critic_transformer_policy_forward.1} parent=23 // pred_check_branch
        %805 = sbr.rel (%p803) target = $region72
      $region71: #{critic_transformer_policy_forward.1} parent=23 // pred_region
        %p806 = scmp.lt.s32.totalorder %s31, 1
        %s807 = scalar_select %p806, %s31, 1
        %s808 = smul.addr %s807, 2
        %s809 = scalar_lea.vmem %s13, %s808
      $region72: #{critic_transformer_policy_forward.1} parent=23 // pred_fallthru
        _
      // Predicated region
      $region73: #{critic_transformer_policy_forward.1} parent=23 // pred_check
        %p810 = pneg %p405
      $region74: #{critic_transformer_policy_forward.1} parent=23 // pred_check_branch
        %812 = sbr.rel (%p810) target = $region76
      $region75: #{critic_transformer_policy_forward.1} parent=23 // pred_region
        %p813 = scmp.lt.s32.totalorder %s31, 1
        %s814 = scalar_select %p813, %s31, 1
        %s815 = smul.addr %s814, 8
        %s816 = smul.addr %s815, 4
        %s817 = scalar_lea.vmem %s14, %s816
      $region76: #{critic_transformer_policy_forward.1} parent=23 // pred_fallthru
        _
      // Predicated region
      $region77: #{critic_transformer_policy_forward.1} parent=23 // pred_check
        %p818 = pneg %p431
      $region78: #{critic_transformer_policy_forward.1} parent=23 // pred_check_branch
        %820 = sbr.rel (%p818) target = $region80
      $region79: #{critic_transformer_policy_forward.1} parent=23 // pred_region
        %p821 = scmp.lt.s32.totalorder %s31, 1
        %s822 = scalar_select %p821, %s31, 1
        %s823 = smul.addr %s822, 2
        %s824 = scalar_lea.vmem %s15, %s823
      $region80: #{critic_transformer_policy_forward.1} parent=23 // pred_fallthru
        _
      // Predicated region
      $region81: #{critic_transformer_policy_forward.1} parent=23 // pred_check
        %p825 = pneg %p457
      $region82: #{critic_transformer_policy_forward.1} parent=23 // pred_check_branch
        %827 = sbr.rel (%p825) target = $region84
      $region83: #{critic_transformer_policy_forward.1} parent=23 // pred_region
        %p828 = scmp.lt.s32.totalorder %s31, 1
        %s829 = scalar_select %p828, %s31, 1
        %s830 = smul.addr %s829, 16
        %s831 = smul.addr %s830, 4
        %s832 = scalar_lea.vmem %s16, %s831
      $region84: #{critic_transformer_policy_forward.1} parent=23 // pred_fallthru
        _
      // Predicated region
      $region85: #{critic_transformer_policy_forward.1} parent=23 // pred_check
        %p833 = pneg %p483
      $region86: #{critic_transformer_policy_forward.1} parent=23 // pred_check_branch
        %835 = sbr.rel (%p833) target = $region88
      $region87: #{critic_transformer_policy_forward.1} parent=23 // pred_region
        %p836 = scmp.lt.s32.totalorder %s31, 1
        %s837 = scalar_select %p836, %s31, 1
        %s838 = smul.addr %s837, 2
        %s839 = scalar_lea.vmem %s17, %s838
      $region88: #{critic_transformer_policy_forward.1} parent=23 // pred_fallthru
        _
      // Predicated region
      $region89: #{critic_transformer_policy_forward.1} parent=23 // pred_check
        %p840 = pneg %p509
      $region90: #{critic_transformer_policy_forward.1} parent=23 // pred_check_branch
        %842 = sbr.rel (%p840) target = $region92
      $region91: #{critic_transformer_policy_forward.1} parent=23 // pred_region
        %p843 = scmp.lt.s32.totalorder %s31, 1
        %s844 = scalar_select %p843, %s31, 1
        %s845 = smul.addr %s844, 2
        %s846 = scalar_lea.vmem %s18, %s845
      $region92: #{critic_transformer_policy_forward.1} parent=23 // pred_fallthru
        _
      // Predicated region
      $region93: #{critic_transformer_policy_forward.1} parent=23 // pred_check
        %p847 = pneg %p535
      $region94: #{critic_transformer_policy_forward.1} parent=23 // pred_check_branch
        %849 = sbr.rel (%p847) target = $region96
      $region95: #{critic_transformer_policy_forward.1} parent=23 // pred_region
        %p850 = scmp.lt.s32.totalorder %s31, 1
        %s851 = scalar_select %p850, %s31, 1
        %s852 = smul.addr %s851, 2
        %s853 = scalar_lea.vmem %s19, %s852
      $region96: #{critic_transformer_policy_forward.1} parent=23 // pred_fallthru
        _
      // Predicated region
      $region97: #{critic_transformer_policy_forward.1} parent=23 // pred_check
        %p854 = pneg %p561
      $region98: #{critic_transformer_policy_forward.1} parent=23 // pred_check_branch
        %856 = sbr.rel (%p854) target = $region100
      $region99: #{critic_transformer_policy_forward.1} parent=23 // pred_region
        %p857 = scmp.lt.s32.totalorder %s31, 1
        %s858 = scalar_select %p857, %s31, 1
        %s859 = scalar_lea.vmem %s20, %s858
      $region100: #{critic_transformer_policy_forward.1} parent=23 // pred_fallthru
        _
      // Predicated region
      $region101: #{critic_transformer_policy_forward.1} parent=23 // pred_check
        %p860 = pneg %p587
      $region102: #{critic_transformer_policy_forward.1} parent=23 // pred_check_branch
        %862 = sbr.rel (%p860) target = $region104
      $region103: #{critic_transformer_policy_forward.1} parent=23 // pred_region
        %p863 = scmp.lt.s32.totalorder %s31, 1
        %s864 = scalar_select %p863, %s31, 1
        %s865 = scalar_lea.vmem %s21, %s864
      $region104: #{critic_transformer_policy_forward.1} parent=23 // pred_fallthru
        _
      // Predicated region
      $region105: #{critic_transformer_policy_forward.1} parent=23 // pred_check
        %p866 = pneg %p613
      $region106: #{critic_transformer_policy_forward.1} parent=23 // pred_check_branch
        %868 = sbr.rel (%p866) target = $region108
      $region107: #{critic_transformer_policy_forward.1} parent=23 // pred_region
        %p869 = scmp.lt.s32.totalorder %s31, 1
        %s870 = scalar_select %p869, %s31, 1
        %s871 = scalar_lea.vmem %s22, %s870
      $region108: #{critic_transformer_policy_forward.1} parent=23 // pred_fallthru
        _
      // Predicated region
      $region109: #{critic_transformer_policy_forward.1} parent=23 // pred_check
        %p872 = pneg %p639
      $region110: #{critic_transformer_policy_forward.1} parent=23 // pred_check_branch
        %874 = sbr.rel (%p872) target = $region112
      $region111: #{critic_transformer_policy_forward.1} parent=23 // pred_region
        %p875 = scmp.lt.s32.totalorder %s31, 1
        %s876 = scalar_select %p875, %s31, 1
        %s877 = scalar_lea.vmem %s23, %s876
      $region112: #{critic_transformer_policy_forward.1} parent=23 // pred_fallthru
        _
      // Predicated region
      $region113: #{critic_transformer_policy_forward.1} parent=23 // pred_check
        %p878 = pneg %p665
      $region114: #{critic_transformer_policy_forward.1} parent=23 // pred_check_branch
        %880 = sbr.rel (%p878) target = $region116
      $region115: #{critic_transformer_policy_forward.1} parent=23 // pred_region
        %p881 = scmp.lt.s32.totalorder %s31, 1
        %s882 = scalar_select %p881, %s31, 1
        %s883 = scalar_lea.vmem %s24, %s882
      $region116: #{critic_transformer_policy_forward.1} parent=23 // pred_fallthru
        _
    $region24: #{critic_transformer_policy_forward.1} parent=5 // pred_fallthru
      _
    %p884 = scmp.le.s32.totalorder 1, %s31
    %p885 = scmp.lt.s32.totalorder %s31, 3
    %p886 = pnand %p884, %p885
    %p887 = pneg %p886
    // Predicated region
    $region117: #{critic_transformer_policy_forward.1} parent=5 // pred_check
      _
    $region118: #{critic_transformer_policy_forward.1} parent=5 // pred_check_branch
      %889 = sbr.rel (%p886) target = $region120
    $region119: #{critic_transformer_policy_forward.1} parent=5 // pred_region
      %s890 = ssub.s32 %s31, 1
      %p891 = pneg %p52
      %p892 = pneg %p49
      %p893 = pneg %p73
      %p894 = pneg %p70
      %p895 = scmp.lt.s32.totalorder %s36, 1
      %s896 = scalar_select %p895, %s36, 1
      %s897 = smul.addr %s896, 3
      %s898 = smul.addr %s897, 4
      %s899 = scalar_lea.vmem %s2, %s898
      %p900 = pneg %p99
      %p901 = pneg %p96
      %p902 = scmp.lt.s32.totalorder %s36, 1
      %s903 = scalar_select %p902, %s36, 1
      %s904 = scalar_lea.vmem %s3, %s903
      %p905 = pneg %p125
      %p906 = pneg %p122
      %p907 = scmp.lt.s32.totalorder %s36, 1
      %s908 = scalar_select %p907, %s36, 1
      %s909 = smul.addr %s908, 16
      %s910 = smul.addr %s909, 4
      %s911 = scalar_lea.vmem %s4, %s910
      %p912 = pneg %p151
      %p913 = pneg %p148
      %p914 = scmp.lt.s32.totalorder %s36, 1
      %s915 = scalar_select %p914, %s36, 1
      %s916 = smul.addr %s915, 4
      %s917 = scalar_lea.vmem %s5, %s916
      %p918 = pneg %p177
      %p919 = pneg %p174
      %p920 = scmp.lt.s32.totalorder %s36, 1
      %s921 = scalar_select %p920, %s36, 1
      %s922 = smul.addr %s921, 16
      %s923 = smul.addr %s922, 4
      %s924 = scalar_lea.vmem %s6, %s923
      %p925 = pneg %p203
      %p926 = pneg %p200
      %p927 = scmp.lt.s32.totalorder %s36, 1
      %s928 = scalar_select %p927, %s36, 1
      %s929 = smul.addr %s928, 4
      %s930 = scalar_lea.vmem %s7, %s929
      %p931 = pneg %p229
      %p932 = pneg %p226
      %p933 = scmp.lt.s32.totalorder %s36, 1
      %s934 = scalar_select %p933, %s36, 1
      %s935 = smul.addr %s934, 16
      %s936 = smul.addr %s935, 4
      %s937 = scalar_lea.vmem %s8, %s936
      %p938 = pneg %p255
      %p939 = pneg %p252
      %p940 = scmp.lt.s32.totalorder %s36, 1
      %s941 = scalar_select %p940, %s36, 1
      %s942 = smul.addr %s941, 4
      %s943 = scalar_lea.vmem %s9, %s942
      %p944 = pneg %p281
      %p945 = pneg %p278
      %p946 = scmp.lt.s32.totalorder %s36, 1
      %s947 = scalar_select %p946, %s36, 1
      %s948 = smul.addr %s947, 8
      %s949 = smul.addr %s948, 4
      %s950 = scalar_lea.vmem %s10, %s949
      %p951 = pneg %p307
      %p952 = pneg %p304
      %p953 = scmp.lt.s32.totalorder %s36, 1
      %s954 = scalar_select %p953, %s36, 1
      %s955 = smul.addr %s954, 2
      %s956 = scalar_lea.vmem %s11, %s955
      %p957 = pneg %p333
      %p958 = pneg %p330
      %p959 = scmp.lt.s32.totalorder %s36, 1
      %s960 = scalar_select %p959, %s36, 1
      %s961 = smul.addr %s960, 2
      %s962 = scalar_lea.vmem %s12, %s961
      %p963 = pneg %p359
      %p964 = pneg %p356
      %p965 = scmp.lt.s32.totalorder %s36, 1
      %s966 = scalar_select %p965, %s36, 1
      %s967 = smul.addr %s966, 2
      %s968 = scalar_lea.vmem %s13, %s967
      %p969 = pneg %p385
      %p970 = pneg %p382
      %p971 = scmp.lt.s32.totalorder %s36, 1
      %s972 = scalar_select %p971, %s36, 1
      %s973 = smul.addr %s972, 8
      %s974 = smul.addr %s973, 4
      %s975 = scalar_lea.vmem %s14, %s974
      %p976 = pneg %p411
      %p977 = pneg %p408
      %p978 = scmp.lt.s32.totalorder %s36, 1
      %s979 = scalar_select %p978, %s36, 1
      %s980 = smul.addr %s979, 2
      %s981 = scalar_lea.vmem %s15, %s980
      %p982 = pneg %p437
      %p983 = pneg %p434
      %p984 = scmp.lt.s32.totalorder %s36, 1
      %s985 = scalar_select %p984, %s36, 1
      %s986 = smul.addr %s985, 16
      %s987 = smul.addr %s986, 4
      %s988 = scalar_lea.vmem %s16, %s987
      %p989 = pneg %p463
      %p990 = pneg %p460
      %p991 = scmp.lt.s32.totalorder %s36, 1
      %s992 = scalar_select %p991, %s36, 1
      %s993 = smul.addr %s992, 2
      %s994 = scalar_lea.vmem %s17, %s993
      %p995 = pneg %p489
      %p996 = pneg %p486
      %p997 = scmp.lt.s32.totalorder %s36, 1
      %s998 = scalar_select %p997, %s36, 1
      %s999 = smul.addr %s998, 2
      %s1000 = scalar_lea.vmem %s18, %s999
      %p1001 = pneg %p515
      %p1002 = pneg %p512
      %p1003 = scmp.lt.s32.totalorder %s36, 1
      %s1004 = scalar_select %p1003, %s36, 1
      %s1005 = smul.addr %s1004, 2
      %s1006 = scalar_lea.vmem %s19, %s1005
      %p1007 = pneg %p541
      %p1008 = pneg %p538
      %p1009 = scmp.lt.s32.totalorder %s36, 1
      %s1010 = scalar_select %p1009, %s36, 1
      %s1011 = scalar_lea.vmem %s20, %s1010
      %p1012 = pneg %p567
      %p1013 = pneg %p564
      %p1014 = scmp.lt.s32.totalorder %s36, 1
      %s1015 = scalar_select %p1014, %s36, 1
      %s1016 = scalar_lea.vmem %s21, %s1015
      %p1017 = pneg %p593
      %p1018 = pneg %p590
      %p1019 = scmp.lt.s32.totalorder %s36, 1
      %s1020 = scalar_select %p1019, %s36, 1
      %s1021 = scalar_lea.vmem %s22, %s1020
      %p1022 = pneg %p619
      %p1023 = pneg %p616
      %p1024 = scmp.lt.s32.totalorder %s36, 1
      %s1025 = scalar_select %p1024, %s36, 1
      %s1026 = scalar_lea.vmem %s23, %s1025
      %p1027 = pneg %p645
      %p1028 = pneg %p642
      %p1029 = scmp.lt.s32.totalorder %s36, 1
      %s1030 = scalar_select %p1029, %s36, 1
      %s1031 = scalar_lea.vmem %s24, %s1030
      %p1032 = pneg %p671
      %p1033 = pneg %p668
      %p1034 = pneg %p697
      %p1035 = pneg %p694
      %p1036 = scmp.lt.s32.totalorder %s36, 1
      %s1037 = scalar_select %p1036, %s36, 1
      %s1038 = smul.addr %s1037, 8
      %s1039 = scalar_lea.vmem %s25, %s1038
      %p1040 = scmp.lt.s32.totalorder %s36, 1
      %s1041 = scalar_select %p1040, %s36, 1
      %s1042 = smul.addr %s1041, 3
      %s1043 = smul.addr %s1042, 4
      %s1044 = scalar_lea.vmem %s2, %s1043
      %p1045 = scmp.lt.s32.totalorder %s36, 1
      %s1046 = scalar_select %p1045, %s36, 1
      %s1047 = scalar_lea.vmem %s3, %s1046
      %p1048 = scmp.lt.s32.totalorder %s36, 1
      %s1049 = scalar_select %p1048, %s36, 1
      %s1050 = smul.addr %s1049, 16
      %s1051 = smul.addr %s1050, 4
      %s1052 = scalar_lea.vmem %s4, %s1051
      %p1053 = scmp.lt.s32.totalorder %s36, 1
      %s1054 = scalar_select %p1053, %s36, 1
      %s1055 = smul.addr %s1054, 4
      %s1056 = scalar_lea.vmem %s5, %s1055
      %p1057 = scmp.lt.s32.totalorder %s36, 1
      %s1058 = scalar_select %p1057, %s36, 1
      %s1059 = smul.addr %s1058, 16
      %s1060 = smul.addr %s1059, 4
      %s1061 = scalar_lea.vmem %s6, %s1060
      %p1062 = scmp.lt.s32.totalorder %s36, 1
      %s1063 = scalar_select %p1062, %s36, 1
      %s1064 = smul.addr %s1063, 4
      %s1065 = scalar_lea.vmem %s7, %s1064
      %p1066 = scmp.lt.s32.totalorder %s36, 1
      %s1067 = scalar_select %p1066, %s36, 1
      %s1068 = smul.addr %s1067, 16
      %s1069 = smul.addr %s1068, 4
      %s1070 = scalar_lea.vmem %s8, %s1069
      %p1071 = scmp.lt.s32.totalorder %s36, 1
      %s1072 = scalar_select %p1071, %s36, 1
      %s1073 = smul.addr %s1072, 4
      %s1074 = scalar_lea.vmem %s9, %s1073
      %p1075 = scmp.lt.s32.totalorder %s36, 1
      %s1076 = scalar_select %p1075, %s36, 1
      %s1077 = smul.addr %s1076, 8
      %s1078 = smul.addr %s1077, 4
      %s1079 = scalar_lea.vmem %s10, %s1078
      %p1080 = scmp.lt.s32.totalorder %s36, 1
      %s1081 = scalar_select %p1080, %s36, 1
      %s1082 = smul.addr %s1081, 2
      %s1083 = scalar_lea.vmem %s11, %s1082
      %p1084 = scmp.lt.s32.totalorder %s36, 1
      %s1085 = scalar_select %p1084, %s36, 1
      %s1086 = smul.addr %s1085, 2
      %s1087 = scalar_lea.vmem %s12, %s1086
      %p1088 = scmp.lt.s32.totalorder %s36, 1
      %s1089 = scalar_select %p1088, %s36, 1
      %s1090 = smul.addr %s1089, 2
      %s1091 = scalar_lea.vmem %s13, %s1090
      %p1092 = scmp.lt.s32.totalorder %s36, 1
      %s1093 = scalar_select %p1092, %s36, 1
      %s1094 = smul.addr %s1093, 8
      %s1095 = smul.addr %s1094, 4
      %s1096 = scalar_lea.vmem %s14, %s1095
      %p1097 = scmp.lt.s32.totalorder %s36, 1
      %s1098 = scalar_select %p1097, %s36, 1
      %s1099 = smul.addr %s1098, 2
      %s1100 = scalar_lea.vmem %s15, %s1099
      %p1101 = scmp.lt.s32.totalorder %s36, 1
      %s1102 = scalar_select %p1101, %s36, 1
      %s1103 = smul.addr %s1102, 16
      %s1104 = smul.addr %s1103, 4
      %s1105 = scalar_lea.vmem %s16, %s1104
      %p1106 = scmp.lt.s32.totalorder %s36, 1
      %s1107 = scalar_select %p1106, %s36, 1
      %s1108 = smul.addr %s1107, 2
      %s1109 = scalar_lea.vmem %s17, %s1108
      %p1110 = scmp.lt.s32.totalorder %s36, 1
      %s1111 = scalar_select %p1110, %s36, 1
      %s1112 = smul.addr %s1111, 2
      %s1113 = scalar_lea.vmem %s18, %s1112
      %p1114 = scmp.lt.s32.totalorder %s36, 1
      %s1115 = scalar_select %p1114, %s36, 1
      %s1116 = smul.addr %s1115, 2
      %s1117 = scalar_lea.vmem %s19, %s1116
      %p1118 = scmp.lt.s32.totalorder %s36, 1
      %s1119 = scalar_select %p1118, %s36, 1
      %s1120 = scalar_lea.vmem %s20, %s1119
      %p1121 = scmp.lt.s32.totalorder %s36, 1
      %s1122 = scalar_select %p1121, %s36, 1
      %s1123 = scalar_lea.vmem %s21, %s1122
      %p1124 = scmp.lt.s32.totalorder %s36, 1
      %s1125 = scalar_select %p1124, %s36, 1
      %s1126 = scalar_lea.vmem %s22, %s1125
      %p1127 = scmp.lt.s32.totalorder %s36, 1
      %s1128 = scalar_select %p1127, %s36, 1
      %s1129 = scalar_lea.vmem %s23, %s1128
      %p1130 = scmp.lt.s32.totalorder %s36, 1
      %s1131 = scalar_select %p1130, %s36, 1
      %s1132 = scalar_lea.vmem %s24, %s1131
      %p1133 = scmp.lt.s32.totalorder %s36, 1
      %s1134 = scalar_select %p1133, %s36, 1
      %s1135 = smul.addr %s1134, 8
      %s1136 = scalar_lea.vmem %s25, %s1135
      %v1138 = vld [vmem:[%s0] sm:$0xff]
      %v1139 = vld [vmem:[%s0 + $0x8] sm:$0xff]
      %v1140 = vld [vmem:[%s0 + $0x10] sm:$0xff]
      %v1141 = vld [vmem:[%s0 + $0x18] sm:$0xff]
      %v1142 = vld [vmem:[%s0 + $0x20] sm:$0xff]
      %v1143 = vld [vmem:[%s0 + $0x28] sm:$0xff]
      %v1144 = vld [vmem:[%s0 + $0x30] sm:$0xff]
      %v1145 = vld [vmem:[%s0 + $0x38] sm:$0xff]
      %v1146 = vld [vmem:[%s1] sm:$0xff]
      %v1147 = vld [vmem:[%s1 + $0x8] sm:$0xff]
      %v1148 = vld [vmem:[%s1 + $0x10] sm:$0xff]
      %v1149 = vld [vmem:[%s1 + $0x18] sm:$0xff]
      %v1150 = vld [vmem:[%s1 + $0x20] sm:$0xff]
      %v1151 = vld [vmem:[%s1 + $0x28] sm:$0xff]
      %v1152 = vld [vmem:[%s1 + $0x30] sm:$0xff]
      %v1153 = vld [vmem:[%s1 + $0x38] sm:$0xff]
      %v1154 = vpack.c.bf16 %v1139, %v1138
      %v1155 = vpack.c.bf16 %v1141, %v1140
      %v1156 = vpack.c.bf16 %v1143, %v1142
      %v1157 = vpack.c.bf16 %v1145, %v1144
      %v1158 = vld [vmem:[%s1044] sm:$0xf]
      %v1159 = vld [vmem:[%s1044 + $0x4] sm:$0xf]
      %v1160 = vld [vmem:[%s1044 + $0x8] sm:$0x1]
      %v1161 = vld [vmem:[%s1047] sm:$0x1]
      %v1163 = vlaneseq
      %v1164 = vshrl.u32 %v1163, 7
      %v1165 = vsub.s32 0, %v1164
      %v1166 = vrot.slane %v1161, %v1165
      %v1171 = vunpack.c.l.b16 %v1158
      %v1172 = vunpack.c.l.b16 %v1159
      %v1173 = vunpack.c.l.b16 %v1160
      %v1174 = vpack.c.b16 %v1172, %v1171
      %v1175 = vpack.c.b16 %v1173, %v1173
      %vm1177 = vcmask 138240
      %v1179 = vsel %vm1177, %v1154, 0
      %v1182 = vsel %vm1177, %v1155, 0
      %v1185 = vsel %vm1177, %v1156, 0
      %v1188 = vsel %vm1177, %v1157, 0
      %vm1190 = vcmask 1040384
      %v1191 = vsel 0, 4294967295, 65535
      %v1192 = vsel %vm1190, %v1191, 0
      %v1194 = vand.u32 %v1175, %v1192
      %1196 = vmatprep.subr.bf16.mxu0 0
      %1197 = vmatpush1.bf16.msra.mxu0 %v1174
      %1198 = vmatprep.subr.bf16.mxu0 0
      %1199 = vmatpush1.bf16.msra.mxu0 %v1194
      %1200 = vmatprep.subr.bf16.mxu0 0
      %1201 = vmatpush1.bf16.msra.mxu0 0
      %1202 = vmatprep.subr.bf16.mxu0 0
      %1203 = vmatpush1.bf16.msra.mxu0 0
      %1204 = vmatprep.subr.bf16.mxu0 0
      %1205 = vmatpush1.bf16.msra.mxu0 0
      %1206 = vmatprep.subr.bf16.mxu0 0
      %1207 = vmatpush1.bf16.msra.mxu0 0
      %1208 = vmatprep.subr.bf16.mxu0 0
      %1209 = vmatpush1.bf16.msra.mxu0 0
      %1210 = vmatprep.subr.bf16.mxu0 0
      %1211 = vmatpush1.bf16.msra.mxu0 0
      %1212 = vmatprep.subr.bf16.mxu0 0
      %1213 = vmatpush1.bf16.msra.mxu0 0
      %1214 = vmatprep.subr.bf16.mxu0 0
      %1215 = vmatpush1.bf16.msra.mxu0 0
      %1216 = vmatprep.subr.bf16.mxu0 0
      %1217 = vmatpush1.bf16.msra.mxu0 0
      %1218 = vmatprep.subr.bf16.mxu0 0
      %1219 = vmatpush1.bf16.msra.mxu0 0
      %1220 = vmatprep.subr.bf16.mxu0 0
      %1221 = vmatpush1.bf16.msra.mxu0 0
      %1222 = vmatprep.subr.bf16.mxu0 0
      %1223 = vmatpush1.bf16.msra.mxu0 0
      %1224 = vmatprep.subr.bf16.mxu0 0
      %1225 = vmatpush1.bf16.msra.mxu0 0
      %1226 = vmatprep.subr.bf16.mxu0 0
      %1227 = vmatpush1.bf16.msra.mxu0 0
      %1228 = vmatprep.mubr.bf16.mxu0 0
      %1229 = vmatmul.mubr.bf16.gmra.mrb[0].mxu0 %v1179
      %v1230 = vpop.f32.mrb[0].mxu0
      %v1231 = vadd.f32 %v1166, %v1230
      %v1232 = vpop.f32.mrb[0].mxu0
      %v1233 = vpop.f32.mrb[0].mxu0
      %v1234 = vadd.f32 %v1166, %v1233
      %v1235 = vpop.f32.mrb[0].mxu0
      %1236 = vmatprep.mubr.bf16.mxu0 0
      %1237 = vmatmul.mubr.bf16.gmra.mrb[0].mxu0 %v1182
      %v1238 = vpop.f32.mrb[0].mxu0
      %v1239 = vadd.f32 %v1166, %v1238
      %v1240 = vpop.f32.mrb[0].mxu0
      %v1241 = vpop.f32.mrb[0].mxu0
      %v1242 = vadd.f32 %v1166, %v1241
      %v1243 = vpop.f32.mrb[0].mxu0
      %1244 = vmatprep.mubr.bf16.mxu0 0
      %1245 = vmatmul.mubr.bf16.gmra.mrb[0].mxu0 %v1185
      %v1246 = vpop.f32.mrb[0].mxu0
      %v1247 = vadd.f32 %v1166, %v1246
      %v1248 = vpop.f32.mrb[0].mxu0
      %v1249 = vpop.f32.mrb[0].mxu0
      %v1250 = vadd.f32 %v1166, %v1249
      %v1251 = vpop.f32.mrb[0].mxu0
      %1252 = vmatprep.mubr.bf16.mxu0 0
      %1253 = vmatmul.mubr.bf16.gmra.mrb[0].mxu0 %v1188
      %v1254 = vpop.f32.mrb[0].mxu0
      %v1255 = vadd.f32 %v1166, %v1254
      %v1256 = vpop.f32.mrb[0].mxu0
      %v1257 = vpop.f32.mrb[0].mxu0
      %v1258 = vadd.f32 %v1166, %v1257
      %v1259 = vpop.f32.mrb[0].mxu0
      %1260 = vdwg.mxu0
      %v1261 = vpack.c.bf16 %v1234, %v1231
      %v1262 = vpack.c.bf16 %v1242, %v1239
      %v1263 = vpack.c.bf16 %v1250, %v1247
      %v1264 = vpack.c.bf16 %v1258, %v1255
      %v1265 = vld [vmem:[%s1052] sm:$0xf]
      %v1266 = vld [vmem:[%s1052 + $0x4] sm:$0xf]
      %v1267 = vld [vmem:[%s1052 + $0x8] sm:$0xf]
      %v1268 = vld [vmem:[%s1052 + $0xc] sm:$0xf]
      %v1269 = vld [vmem:[%s1056] sm:$0x1]
      %v1271 = vlaneseq
      %v1272 = vshrl.u32 %v1271, 7
      %v1273 = vsub.s32 0, %v1272
      %v1274 = vrot.slane %v1269, %v1273
      %v1280 = vunpack.c.l.b16 %v1265
      %v1281 = vunpack.c.l.b16 %v1266
      %v1282 = vunpack.c.l.b16 %v1267
      %v1283 = vunpack.c.l.b16 %v1268
      %v1284 = vpack.c.b16 %v1281, %v1280
      %v1285 = vpack.c.b16 %v1283, %v1282
      %vm1288 = vcmask 261120
      %v1290 = vsel %vm1288, %v1261, 0
      %v1293 = vsel %vm1288, %v1262, 0
      %v1296 = vsel %vm1288, %v1263, 0
      %v1299 = vsel %vm1288, %v1264, 0
      %1301 = vmatprep.subr.bf16.mxu0 0
      %1302 = vmatpush1.bf16.msra.mxu0 %v1284
      %1303 = vmatprep.subr.bf16.mxu0 0
      %1304 = vmatpush1.bf16.msra.mxu0 %v1285
      %1305 = vmatprep.subr.bf16.mxu0 0
      %1306 = vmatpush1.bf16.msra.mxu0 0
      %1307 = vmatprep.subr.bf16.mxu0 0
      %1308 = vmatpush1.bf16.msra.mxu0 0
      %1309 = vmatprep.subr.bf16.mxu0 0
      %1310 = vmatpush1.bf16.msra.mxu0 0
      %1311 = vmatprep.subr.bf16.mxu0 0
      %1312 = vmatpush1.bf16.msra.mxu0 0
      %1313 = vmatprep.subr.bf16.mxu0 0
      %1314 = vmatpush1.bf16.msra.mxu0 0
      %1315 = vmatprep.subr.bf16.mxu0 0
      %1316 = vmatpush1.bf16.msra.mxu0 0
      %1317 = vmatprep.subr.bf16.mxu0 0
      %1318 = vmatpush1.bf16.msra.mxu0 0
      %1319 = vmatprep.subr.bf16.mxu0 0
      %1320 = vmatpush1.bf16.msra.mxu0 0
      %1321 = vmatprep.subr.bf16.mxu0 0
      %1322 = vmatpush1.bf16.msra.mxu0 0
      %1323 = vmatprep.subr.bf16.mxu0 0
      %1324 = vmatpush1.bf16.msra.mxu0 0
      %1325 = vmatprep.subr.bf16.mxu0 0
      %1326 = vmatpush1.bf16.msra.mxu0 0
      %1327 = vmatprep.subr.bf16.mxu0 0
      %1328 = vmatpush1.bf16.msra.mxu0 0
      %1329 = vmatprep.subr.bf16.mxu0 0
      %1330 = vmatpush1.bf16.msra.mxu0 0
      %1331 = vmatprep.subr.bf16.mxu0 0
      %1332 = vmatpush1.bf16.msra.mxu0 0
      %1333 = vmatprep.mubr.bf16.mxu0 0
      %1334 = vmatmul.mubr.bf16.gmra.mrb[0].mxu0 %v1290
      %v1335 = vpop.f32.mrb[0].mxu0
      %v1336 = vadd.f32 %v1274, %v1335
      %v1337 = vpop.f32.mrb[0].mxu0
      %v1338 = vpop.f32.mrb[0].mxu0
      %v1339 = vadd.f32 %v1274, %v1338
      %v1340 = vpop.f32.mrb[0].mxu0
      %1341 = vmatprep.mubr.bf16.mxu0 0
      %1342 = vmatmul.mubr.bf16.gmra.mrb[0].mxu0 %v1293
      %v1343 = vpop.f32.mrb[0].mxu0
      %v1344 = vadd.f32 %v1274, %v1343
      %v1345 = vpop.f32.mrb[0].mxu0
      %v1346 = vpop.f32.mrb[0].mxu0
      %v1347 = vadd.f32 %v1274, %v1346
      %v1348 = vpop.f32.mrb[0].mxu0
      %1349 = vmatprep.mubr.bf16.mxu0 0
      %1350 = vmatmul.mubr.bf16.gmra.mrb[0].mxu0 %v1296
      %v1351 = vpop.f32.mrb[0].mxu0
      %v1352 = vadd.f32 %v1274, %v1351
      %v1353 = vpop.f32.mrb[0].mxu0
      %v1354 = vpop.f32.mrb[0].mxu0
      %v1355 = vadd.f32 %v1274, %v1354
      %v1356 = vpop.f32.mrb[0].mxu0
      %1357 = vmatprep.mubr.bf16.mxu0 0
      %1358 = vmatmul.mubr.bf16.gmra.mrb[0].mxu0 %v1299
      %v1359 = vpop.f32.mrb[0].mxu0
      %v1360 = vadd.f32 %v1274, %v1359
      %v1361 = vpop.f32.mrb[0].mxu0
      %v1362 = vpop.f32.mrb[0].mxu0
      %v1363 = vadd.f32 %v1274, %v1362
      %v1364 = vpop.f32.mrb[0].mxu0
      %1365 = vdwg.mxu0
      %v1366 = vld [vmem:[%s1061] sm:$0xf]
      %v1367 = vld [vmem:[%s1061 + $0x4] sm:$0xf]
      %v1368 = vld [vmem:[%s1061 + $0x8] sm:$0xf]
      %v1369 = vld [vmem:[%s1061 + $0xc] sm:$0xf]
      %v1370 = vld [vmem:[%s1065] sm:$0x1]
      %v1372 = vlaneseq
      %v1373 = vshrl.u32 %v1372, 7
      %v1374 = vsub.s32 0, %v1373
      %v1375 = vrot.slane %v1370, %v1374
      %v1381 = vunpack.c.l.b16 %v1366
      %v1382 = vunpack.c.l.b16 %v1367
      %v1383 = vunpack.c.l.b16 %v1368
      %v1384 = vunpack.c.l.b16 %v1369
      %v1385 = vpack.c.b16 %v1382, %v1381
      %v1386 = vpack.c.b16 %v1384, %v1383
      %1389 = vmatprep.subr.bf16.mxu0 0
      %1390 = vmatpush1.bf16.msra.mxu0 %v1385
      %1391 = vmatprep.subr.bf16.mxu0 0
      %1392 = vmatpush1.bf16.msra.mxu0 %v1386
      %1393 = vmatprep.subr.bf16.mxu0 0
      %1394 = vmatpush1.bf16.msra.mxu0 0
      %1395 = vmatprep.subr.bf16.mxu0 0
      %1396 = vmatpush1.bf16.msra.mxu0 0
      %1397 = vmatprep.subr.bf16.mxu0 0
      %1398 = vmatpush1.bf16.msra.mxu0 0
      %1399 = vmatprep.subr.bf16.mxu0 0
      %1400 = vmatpush1.bf16.msra.mxu0 0
      %1401 = vmatprep.subr.bf16.mxu0 0
      %1402 = vmatpush1.bf16.msra.mxu0 0
      %1403 = vmatprep.subr.bf16.mxu0 0
      %1404 = vmatpush1.bf16.msra.mxu0 0
      %1405 = vmatprep.subr.bf16.mxu0 0
      %1406 = vmatpush1.bf16.msra.mxu0 0
      %1407 = vmatprep.subr.bf16.mxu0 0
      %1408 = vmatpush1.bf16.msra.mxu0 0
      %1409 = vmatprep.subr.bf16.mxu0 0
      %1410 = vmatpush1.bf16.msra.mxu0 0
      %1411 = vmatprep.subr.bf16.mxu0 0
      %1412 = vmatpush1.bf16.msra.mxu0 0
      %1413 = vmatprep.subr.bf16.mxu0 0
      %1414 = vmatpush1.bf16.msra.mxu0 0
      %1415 = vmatprep.subr.bf16.mxu0 0
      %1416 = vmatpush1.bf16.msra.mxu0 0
      %1417 = vmatprep.subr.bf16.mxu0 0
      %1418 = vmatpush1.bf16.msra.mxu0 0
      %1419 = vmatprep.subr.bf16.mxu0 0
      %1420 = vmatpush1.bf16.msra.mxu0 0
      %1421 = vmatprep.mubr.bf16.mxu0 0
      %1422 = vmatmul.mubr.bf16.gmra.mrb[0].mxu0 %v1290
      %v1423 = vpop.f32.mrb[0].mxu0
      %v1424 = vadd.f32 %v1375, %v1423
      %v1425 = vpop.f32.mrb[0].mxu0
      %v1426 = vpop.f32.mrb[0].mxu0
      %v1427 = vadd.f32 %v1375, %v1426
      %v1428 = vpop.f32.mrb[0].mxu0
      %1429 = vmatprep.mubr.bf16.mxu0 0
      %1430 = vmatmul.mubr.bf16.gmra.mrb[0].mxu0 %v1293
      %v1431 = vpop.f32.mrb[0].mxu0
      %v1432 = vadd.f32 %v1375, %v1431
      %v1433 = vpop.f32.mrb[0].mxu0
      %v1434 = vpop.f32.mrb[0].mxu0
      %v1435 = vadd.f32 %v1375, %v1434
      %v1436 = vpop.f32.mrb[0].mxu0
      %1437 = vmatprep.mubr.bf16.mxu0 0
      %1438 = vmatmul.mubr.bf16.gmra.mrb[0].mxu0 %v1296
      %v1439 = vpop.f32.mrb[0].mxu0
      %v1440 = vadd.f32 %v1375, %v1439
      %v1441 = vpop.f32.mrb[0].mxu0
      %v1442 = vpop.f32.mrb[0].mxu0
      %v1443 = vadd.f32 %v1375, %v1442
      %v1444 = vpop.f32.mrb[0].mxu0
      %1445 = vmatprep.mubr.bf16.mxu0 0
      %1446 = vmatmul.mubr.bf16.gmra.mrb[0].mxu0 %v1299
      %v1447 = vpop.f32.mrb[0].mxu0
      %v1448 = vadd.f32 %v1375, %v1447
      %v1449 = vpop.f32.mrb[0].mxu0
      %v1450 = vpop.f32.mrb[0].mxu0
      %v1451 = vadd.f32 %v1375, %v1450
      %v1452 = vpop.f32.mrb[0].mxu0
      %1453 = vdwg.mxu0
      %v1454 = vld [vmem:[%s1070] sm:$0xf]
      %v1455 = vld [vmem:[%s1070 + $0x4] sm:$0xf]
      %v1456 = vld [vmem:[%s1070 + $0x8] sm:$0xf]
      %v1457 = vld [vmem:[%s1070 + $0xc] sm:$0xf]
      %v1458 = vld [vmem:[%s1074] sm:$0x1]
      %v1460 = vlaneseq
      %v1461 = vshrl.u32 %v1460, 7
      %v1462 = vsub.s32 0, %v1461
      %v1463 = vrot.slane %v1458, %v1462
      %v1469 = vunpack.c.l.b16 %v1454
      %v1470 = vunpack.c.l.b16 %v1455
      %v1471 = vunpack.c.l.b16 %v1456
      %v1472 = vunpack.c.l.b16 %v1457
      %v1473 = vpack.c.b16 %v1470, %v1469
      %v1474 = vpack.c.b16 %v1472, %v1471
      %1477 = vmatprep.subr.bf16.mxu0 0
      %1478 = vmatpush1.bf16.msra.mxu0 %v1473
      %1479 = vmatprep.subr.bf16.mxu0 0
      %1480 = vmatpush1.bf16.msra.mxu0 %v1474
      %1481 = vmatprep.subr.bf16.mxu0 0
      %1482 = vmatpush1.bf16.msra.mxu0 0
      %1483 = vmatprep.subr.bf16.mxu0 0
      %1484 = vmatpush1.bf16.msra.mxu0 0
      %1485 = vmatprep.subr.bf16.mxu0 0
      %1486 = vmatpush1.bf16.msra.mxu0 0
      %1487 = vmatprep.subr.bf16.mxu0 0
      %1488 = vmatpush1.bf16.msra.mxu0 0
      %1489 = vmatprep.subr.bf16.mxu0 0
      %1490 = vmatpush1.bf16.msra.mxu0 0
      %1491 = vmatprep.subr.bf16.mxu0 0
      %1492 = vmatpush1.bf16.msra.mxu0 0
      %1493 = vmatprep.subr.bf16.mxu0 0
      %1494 = vmatpush1.bf16.msra.mxu0 0
      %1495 = vmatprep.subr.bf16.mxu0 0
      %1496 = vmatpush1.bf16.msra.mxu0 0
      %1497 = vmatprep.subr.bf16.mxu0 0
      %1498 = vmatpush1.bf16.msra.mxu0 0
      %1499 = vmatprep.subr.bf16.mxu0 0
      %1500 = vmatpush1.bf16.msra.mxu0 0
      %1501 = vmatprep.subr.bf16.mxu0 0
      %1502 = vmatpush1.bf16.msra.mxu0 0
      %1503 = vmatprep.subr.bf16.mxu0 0
      %1504 = vmatpush1.bf16.msra.mxu0 0
      %1505 = vmatprep.subr.bf16.mxu0 0
      %1506 = vmatpush1.bf16.msra.mxu0 0
      %1507 = vmatprep.subr.bf16.mxu0 0
      %1508 = vmatpush1.bf16.msra.mxu0 0
      %1509 = vmatprep.mubr.bf16.mxu0 0
      %1510 = vmatmul.mubr.bf16.gmra.mrb[0].mxu0 %v1290
      %v1511 = vpop.f32.mrb[0].mxu0
      %v1512 = vadd.f32 %v1463, %v1511
      %v1513 = vpop.f32.mrb[0].mxu0
      %v1514 = vpop.f32.mrb[0].mxu0
      %v1515 = vadd.f32 %v1463, %v1514
      %v1516 = vpop.f32.mrb[0].mxu0
      %1517 = vmatprep.mubr.bf16.mxu0 0
      %1518 = vmatmul.mubr.bf16.gmra.mrb[0].mxu0 %v1293
      %v1519 = vpop.f32.mrb[0].mxu0
      %v1520 = vadd.f32 %v1463, %v1519
      %v1521 = vpop.f32.mrb[0].mxu0
      %v1522 = vpop.f32.mrb[0].mxu0
      %v1523 = vadd.f32 %v1463, %v1522
      %v1524 = vpop.f32.mrb[0].mxu0
      %1525 = vmatprep.mubr.bf16.mxu0 0
      %1526 = vmatmul.mubr.bf16.gmra.mrb[0].mxu0 %v1296
      %v1527 = vpop.f32.mrb[0].mxu0
      %v1528 = vadd.f32 %v1463, %v1527
      %v1529 = vpop.f32.mrb[0].mxu0
      %v1530 = vpop.f32.mrb[0].mxu0
      %v1531 = vadd.f32 %v1463, %v1530
      %v1532 = vpop.f32.mrb[0].mxu0
      %1533 = vmatprep.mubr.bf16.mxu0 0
      %1534 = vmatmul.mubr.bf16.gmra.mrb[0].mxu0 %v1299
      %v1535 = vpop.f32.mrb[0].mxu0
      %v1536 = vadd.f32 %v1463, %v1535
      %v1537 = vpop.f32.mrb[0].mxu0
      %v1538 = vpop.f32.mrb[0].mxu0
      %v1539 = vadd.f32 %v1463, %v1538
      %v1540 = vpop.f32.mrb[0].mxu0
      %1541 = vdwg.mxu0
      %v1542 = vpack.c.bf16 %v1339, %v1336
      %v1543 = vpack.c.bf16 %v1347, %v1344
      %v1544 = vpack.c.bf16 %v1355, %v1352
      %v1545 = vpack.c.bf16 %v1363, %v1360
      %v1546 = vpack.c.bf16 %v1427, %v1424
      %v1547 = vpack.c.bf16 %v1435, %v1432
      %v1548 = vpack.c.bf16 %v1443, %v1440
      %v1549 = vpack.c.bf16 %v1451, %v1448
      %vm1550 = vcmask 130048
      %v1552 = vsel %vm1550, %v1542, 0
      %v1555 = vsel %vm1550, %v1543, 0
      %v1558 = vsel %vm1550, %v1544, 0
      %v1561 = vsel %vm1550, %v1545, 0
      %v1564 = vsel %vm1550, %v1546, 0
      %v1567 = vsel %vm1550, %v1547, 0
      %v1570 = vsel %vm1550, %v1548, 0
      %v1573 = vsel %vm1550, %v1549, 0
      %1575 = vmatprep.subr.bf16.mxu0 0
      %1576 = vmatpush1.bf16.xpose.msra.mxu0 %v1564
      %1577 = vmatprep.subr.bf16.mxu0 0
      %1578 = vmatpush1.bf16.xpose.msra.mxu0 %v1567
      %1579 = vmatprep.subr.bf16.mxu0 0
      %1580 = vmatpush1.bf16.xpose.msra.mxu0 %v1570
      %1581 = vmatprep.subr.bf16.mxu0 0
      %1582 = vmatpush1.bf16.xpose.msra.mxu0 %v1573
      %1583 = vmatprep.subr.bf16.mxu0 0
      %1584 = vmatpush1.bf16.xpose.msra.mxu0 0
      %1585 = vmatprep.subr.bf16.mxu0 0
      %1586 = vmatpush1.bf16.xpose.msra.mxu0 0
      %1587 = vmatprep.subr.bf16.mxu0 0
      %1588 = vmatpush1.bf16.xpose.msra.mxu0 0
      %1589 = vmatprep.subr.bf16.mxu0 0
      %1590 = vmatpush1.bf16.xpose.msra.mxu0 0
      %1591 = vmatprep.subr.bf16.mxu0 0
      %1592 = vmatpush1.bf16.xpose.msra.mxu0 0
      %1593 = vmatprep.subr.bf16.mxu0 0
      %1594 = vmatpush1.bf16.xpose.msra.mxu0 0
      %1595 = vmatprep.subr.bf16.mxu0 0
      %1596 = vmatpush1.bf16.xpose.msra.mxu0 0
      %1597 = vmatprep.subr.bf16.mxu0 0
      %1598 = vmatpush1.bf16.xpose.msra.mxu0 0
      %1599 = vmatprep.subr.bf16.mxu0 0
      %1600 = vmatpush1.bf16.xpose.msra.mxu0 0
      %1601 = vmatprep.subr.bf16.mxu0 0
      %1602 = vmatpush1.bf16.xpose.msra.mxu0 0
      %1603 = vmatprep.subr.bf16.mxu0 0
      %1604 = vmatpush1.bf16.xpose.msra.mxu0 0
      %1605 = vmatprep.subr.bf16.mxu0 0
      %1606 = vmatpush1.bf16.xpose.msra.mxu0 0
      %1607 = vmatprep.mubr.bf16.mxu0 0
      %1608 = vmatmul.mubr.bf16.gmra.mrb[0].mxu0 %v1552
      %v1609 = vpop.f32.mrb[0].mxu0
      %v1610 = vadd.f32 %v1146, %v1609
      %v1611 = vpop.f32.mrb[0].mxu0
      %v1612 = vpop.f32.mrb[0].mxu0
      %v1613 = vadd.f32 %v1147, %v1612
      %v1614 = vpop.f32.mrb[0].mxu0
      %1615 = vmatprep.mubr.bf16.mxu0 0
      %1616 = vmatmul.mubr.bf16.gmra.mrb[0].mxu0 %v1555
      %v1617 = vpop.f32.mrb[0].mxu0
      %v1618 = vadd.f32 %v1148, %v1617
      %v1619 = vpop.f32.mrb[0].mxu0
      %v1620 = vpop.f32.mrb[0].mxu0
      %v1621 = vadd.f32 %v1149, %v1620
      %v1622 = vpop.f32.mrb[0].mxu0
      %1623 = vmatprep.mubr.bf16.mxu0 0
      %1624 = vmatmul.mubr.bf16.gmra.mrb[0].mxu0 %v1558
      %v1625 = vpop.f32.mrb[0].mxu0
      %v1626 = vadd.f32 %v1150, %v1625
      %v1627 = vpop.f32.mrb[0].mxu0
      %v1628 = vpop.f32.mrb[0].mxu0
      %v1629 = vadd.f32 %v1151, %v1628
      %v1630 = vpop.f32.mrb[0].mxu0
      %1631 = vmatprep.mubr.bf16.mxu0 0
      %1632 = vmatmul.mubr.bf16.gmra.mrb[0].mxu0 %v1561
      %v1633 = vpop.f32.mrb[0].mxu0
      %v1634 = vadd.f32 %v1152, %v1633
      %v1635 = vpop.f32.mrb[0].mxu0
      %v1636 = vpop.f32.mrb[0].mxu0
      %v1637 = vadd.f32 %v1153, %v1636
      %v1638 = vpop.f32.mrb[0].mxu0
      %1639 = vdwg.mxu0
      %vm1640 = vcmask 523264
      %v1641 = vsel %vm1640, %v1610, -inf
      %1642 = vmax.xlane.f32.xlu0 %v1641
      %v1643 = vpop.xlane.xlu0 %1642
      %v1644 = vsel %vm1640, %v1613, -inf
      %1645 = vmax.xlane.f32.xlu0 %v1644
      %v1646 = vpop.xlane.xlu0 %1645
      %v1647 = vsel %vm1640, %v1618, -inf
      %1648 = vmax.xlane.f32.xlu0 %v1647
      %v1649 = vpop.xlane.xlu0 %1648
      %v1650 = vsel %vm1640, %v1621, -inf
      %1651 = vmax.xlane.f32.xlu0 %v1650
      %v1652 = vpop.xlane.xlu0 %1651
      %v1653 = vsel %vm1640, %v1626, -inf
      %1654 = vmax.xlane.f32.xlu0 %v1653
      %v1655 = vpop.xlane.xlu0 %1654
      %v1656 = vsel %vm1640, %v1629, -inf
      %1657 = vmax.xlane.f32.xlu0 %v1656
      %v1658 = vpop.xlane.xlu0 %1657
      %v1659 = vsel %vm1640, %v1634, -inf
      %1660 = vmax.xlane.f32.xlu0 %v1659
      %v1661 = vpop.xlane.xlu0 %1660
      %v1662 = vsel %vm1640, %v1637, -inf
      %1663 = vmax.xlane.f32.xlu0 %v1662
      %v1664 = vpop.xlane.xlu0 %1663
      %v1665 = vsub.f32 %v1610, %v1643
      %v1666 = vsub.f32 %v1613, %v1646
      %v1667 = vsub.f32 %v1618, %v1649
      %v1668 = vsub.f32 %v1621, %v1652
      %v1669 = vsub.f32 %v1626, %v1655
      %v1670 = vsub.f32 %v1629, %v1658
      %v1671 = vsub.f32 %v1634, %v1661
      %v1672 = vsub.f32 %v1637, %v1664
      %v1673 = vmul.f32 %v1665, 1.442695
      %v1674 = vpow.pop %v1673
      %v1675 = vmul.f32 %v1666, 1.442695
      %v1676 = vpow.pop %v1675
      %v1677 = vmul.f32 %v1667, 1.442695
      %v1678 = vpow.pop %v1677
      %v1679 = vmul.f32 %v1668, 1.442695
      %v1680 = vpow.pop %v1679
      %v1681 = vmul.f32 %v1669, 1.442695
      %v1682 = vpow.pop %v1681
      %v1683 = vmul.f32 %v1670, 1.442695
      %v1684 = vpow.pop %v1683
      %v1685 = vmul.f32 %v1671, 1.442695
      %v1686 = vpow.pop %v1685
      %v1687 = vmul.f32 %v1672, 1.442695
      %v1688 = vpow.pop %v1687
      %v1689 = vsel %vm1640, %v1674, 0.0
      %1690 = vadd.xlane.f32.xlu0 %v1689
      %v1691 = vpop.xlane.xlu0 %1690
      %v1692 = vsel %vm1640, %v1676, 0.0
      %1693 = vadd.xlane.f32.xlu0 %v1692
      %v1694 = vpop.xlane.xlu0 %1693
      %v1695 = vsel %vm1640, %v1678, 0.0
      %1696 = vadd.xlane.f32.xlu0 %v1695
      %v1697 = vpop.xlane.xlu0 %1696
      %v1698 = vsel %vm1640, %v1680, 0.0
      %1699 = vadd.xlane.f32.xlu0 %v1698
      %v1700 = vpop.xlane.xlu0 %1699
      %v1701 = vsel %vm1640, %v1682, 0.0
      %1702 = vadd.xlane.f32.xlu0 %v1701
      %v1703 = vpop.xlane.xlu0 %1702
      %v1704 = vsel %vm1640, %v1684, 0.0
      %1705 = vadd.xlane.f32.xlu0 %v1704
      %v1706 = vpop.xlane.xlu0 %1705
      %v1707 = vsel %vm1640, %v1686, 0.0
      %1708 = vadd.xlane.f32.xlu0 %v1707
      %v1709 = vpop.xlane.xlu0 %1708
      %v1710 = vsel %vm1640, %v1688, 0.0
      %1711 = vadd.xlane.f32.xlu0 %v1710
      %v1712 = vpop.xlane.xlu0 %1711
      %v1713 = vrcp.pop %v1691
      %v1714 = vrcp.pop %v1694
      %v1715 = vrcp.pop %v1697
      %v1716 = vrcp.pop %v1700
      %v1717 = vrcp.pop %v1703
      %v1718 = vrcp.pop %v1706
      %v1719 = vrcp.pop %v1709
      %v1720 = vrcp.pop %v1712
      %v1721 = vmul.f32 %v1674, %v1713
      %v1722 = vmul.f32 %v1676, %v1714
      %v1723 = vmul.f32 %v1678, %v1715
      %v1724 = vmul.f32 %v1680, %v1716
      %v1725 = vmul.f32 %v1682, %v1717
      %v1726 = vmul.f32 %v1684, %v1718
      %v1727 = vmul.f32 %v1686, %v1719
      %v1728 = vmul.f32 %v1688, %v1720
      %v1729 = vpack.c.bf16 %v1722, %v1721
      %v1730 = vpack.c.bf16 %v1724, %v1723
      %v1731 = vpack.c.bf16 %v1726, %v1725
      %v1732 = vpack.c.bf16 %v1728, %v1727
      %v1733 = vpack.c.bf16 %v1515, %v1512
      %v1734 = vpack.c.bf16 %v1523, %v1520
      %v1735 = vpack.c.bf16 %v1531, %v1528
      %v1736 = vpack.c.bf16 %v1539, %v1536
      %v1738 = vsel %vm1640, %v1729, 0
      %v1741 = vsel %vm1640, %v1730, 0
      %v1744 = vsel %vm1640, %v1731, 0
      %v1747 = vsel %vm1640, %v1732, 0
      %1749 = vmatprep.subr.bf16.mxu0 0
      %1750 = vmatpush1.bf16.msra.mxu0 %v1733
      %1751 = vmatprep.subr.bf16.mxu0 0
      %1752 = vmatpush1.bf16.msra.mxu0 %v1734
      %1753 = vmatprep.subr.bf16.mxu0 0
      %1754 = vmatpush1.bf16.msra.mxu0 %v1735
      %1755 = vmatprep.subr.bf16.mxu0 0
      %1756 = vmatpush1.bf16.msra.mxu0 %v1736
      %1757 = vmatprep.subr.bf16.mxu0 0
      %1758 = vmatpush1.bf16.msra.mxu0 0
      %1759 = vmatprep.subr.bf16.mxu0 0
      %1760 = vmatpush1.bf16.msra.mxu0 0
      %1761 = vmatprep.subr.bf16.mxu0 0
      %1762 = vmatpush1.bf16.msra.mxu0 0
      %1763 = vmatprep.subr.bf16.mxu0 0
      %1764 = vmatpush1.bf16.msra.mxu0 0
      %1765 = vmatprep.subr.bf16.mxu0 0
      %1766 = vmatpush1.bf16.msra.mxu0 0
      %1767 = vmatprep.subr.bf16.mxu0 0
      %1768 = vmatpush1.bf16.msra.mxu0 0
      %1769 = vmatprep.subr.bf16.mxu0 0
      %1770 = vmatpush1.bf16.msra.mxu0 0
      %1771 = vmatprep.subr.bf16.mxu0 0
      %1772 = vmatpush1.bf16.msra.mxu0 0
      %1773 = vmatprep.subr.bf16.mxu0 0
      %1774 = vmatpush1.bf16.msra.mxu0 0
      %1775 = vmatprep.subr.bf16.mxu0 0
      %1776 = vmatpush1.bf16.msra.mxu0 0
      %1777 = vmatprep.subr.bf16.mxu0 0
      %1778 = vmatpush1.bf16.msra.mxu0 0
      %1779 = vmatprep.subr.bf16.mxu0 0
      %1780 = vmatpush1.bf16.msra.mxu0 0
      %1781 = vmatprep.mubr.bf16.mxu0 0
      %1782 = vmatmul.mubr.bf16.gmra.mrb[0].mxu0 %v1738
      %v1783 = vpop.f32.mrb[0].mxu0
      %v1784 = vadd.f32 0.0, %v1783
      %v1785 = vpop.f32.mrb[0].mxu0
      %v1786 = vpop.f32.mrb[0].mxu0
      %v1787 = vadd.f32 0.0, %v1786
      %v1788 = vpop.f32.mrb[0].mxu0
      %1789 = vmatprep.mubr.bf16.mxu0 0
      %1790 = vmatmul.mubr.bf16.gmra.mrb[0].mxu0 %v1741
      %v1791 = vpop.f32.mrb[0].mxu0
      %v1792 = vadd.f32 0.0, %v1791
      %v1793 = vpop.f32.mrb[0].mxu0
      %v1794 = vpop.f32.mrb[0].mxu0
      %v1795 = vadd.f32 0.0, %v1794
      %v1796 = vpop.f32.mrb[0].mxu0
      %1797 = vmatprep.mubr.bf16.mxu0 0
      %1798 = vmatmul.mubr.bf16.gmra.mrb[0].mxu0 %v1744
      %v1799 = vpop.f32.mrb[0].mxu0
      %v1800 = vadd.f32 0.0, %v1799
      %v1801 = vpop.f32.mrb[0].mxu0
      %v1802 = vpop.f32.mrb[0].mxu0
      %v1803 = vadd.f32 0.0, %v1802
      %v1804 = vpop.f32.mrb[0].mxu0
      %1805 = vmatprep.mubr.bf16.mxu0 0
      %1806 = vmatmul.mubr.bf16.gmra.mrb[0].mxu0 %v1747
      %v1807 = vpop.f32.mrb[0].mxu0
      %v1808 = vadd.f32 0.0, %v1807
      %v1809 = vpop.f32.mrb[0].mxu0
      %v1810 = vpop.f32.mrb[0].mxu0
      %v1811 = vadd.f32 0.0, %v1810
      %v1812 = vpop.f32.mrb[0].mxu0
      %1813 = vdwg.mxu0
      %v1814 = vpack.c.bf16 %v1787, %v1784
      %v1815 = vpack.c.bf16 %v1795, %v1792
      %v1816 = vpack.c.bf16 %v1803, %v1800
      %v1817 = vpack.c.bf16 %v1811, %v1808
      %v1818 = vld [vmem:[%s1079] sm:$0xf]
      %v1819 = vld [vmem:[%s1079 + $0x4] sm:$0xf]
      %s1820 = scalar_lea.vmem %s1052, 16
      %v1821 = vld [vmem:[%s1820] sm:$0xf]
      %v1822 = vld [vmem:[%s1820 + $0x4] sm:$0xf]
      %v1823 = vld [vmem:[%s1820 + $0x8] sm:$0xf]
      %v1824 = vld [vmem:[%s1820 + $0xc] sm:$0xf]
      %s1825 = scalar_lea.vmem %s1056, 1
      %v1826 = vld [vmem:[%s1825] sm:$0x1]
      %v1828 = vlaneseq
      %v1829 = vshrl.u32 %v1828, 7
      %v1830 = vsub.s32 0, %v1829
      %v1831 = vrot.slane %v1826, %v1830
      %v1837 = vunpack.c.l.b16 %v1821
      %v1838 = vunpack.c.l.b16 %v1822
      %v1839 = vunpack.c.l.b16 %v1823
      %v1840 = vunpack.c.l.b16 %v1824
      %v1841 = vpack.c.b16 %v1838, %v1837
      %v1842 = vpack.c.b16 %v1840, %v1839
      %1845 = vmatprep.subr.bf16.mxu0 0
      %1846 = vmatpush1.bf16.msra.mxu0 %v1841
      %1847 = vmatprep.subr.bf16.mxu0 0
      %1848 = vmatpush1.bf16.msra.mxu0 %v1842
      %1849 = vmatprep.subr.bf16.mxu0 0
      %1850 = vmatpush1.bf16.msra.mxu0 0
      %1851 = vmatprep.subr.bf16.mxu0 0
      %1852 = vmatpush1.bf16.msra.mxu0 0
      %1853 = vmatprep.subr.bf16.mxu0 0
      %1854 = vmatpush1.bf16.msra.mxu0 0
      %1855 = vmatprep.subr.bf16.mxu0 0
      %1856 = vmatpush1.bf16.msra.mxu0 0
      %1857 = vmatprep.subr.bf16.mxu0 0
      %1858 = vmatpush1.bf16.msra.mxu0 0
      %1859 = vmatprep.subr.bf16.mxu0 0
      %1860 = vmatpush1.bf16.msra.mxu0 0
      %1861 = vmatprep.subr.bf16.mxu0 0
      %1862 = vmatpush1.bf16.msra.mxu0 0
      %1863 = vmatprep.subr.bf16.mxu0 0
      %1864 = vmatpush1.bf16.msra.mxu0 0
      %1865 = vmatprep.subr.bf16.mxu0 0
      %1866 = vmatpush1.bf16.msra.mxu0 0
      %1867 = vmatprep.subr.bf16.mxu0 0
      %1868 = vmatpush1.bf16.msra.mxu0 0
      %1869 = vmatprep.subr.bf16.mxu0 0
      %1870 = vmatpush1.bf16.msra.mxu0 0
      %1871 = vmatprep.subr.bf16.mxu0 0
      %1872 = vmatpush1.bf16.msra.mxu0 0
      %1873 = vmatprep.subr.bf16.mxu0 0
      %1874 = vmatpush1.bf16.msra.mxu0 0
      %1875 = vmatprep.subr.bf16.mxu0 0
      %1876 = vmatpush1.bf16.msra.mxu0 0
      %1877 = vmatprep.mubr.bf16.mxu0 0
      %1878 = vmatmul.mubr.bf16.gmra.mrb[0].mxu0 %v1290
      %v1879 = vpop.f32.mrb[0].mxu0
      %v1880 = vadd.f32 %v1831, %v1879
      %v1881 = vpop.f32.mrb[0].mxu0
      %v1882 = vpop.f32.mrb[0].mxu0
      %v1883 = vadd.f32 %v1831, %v1882
      %v1884 = vpop.f32.mrb[0].mxu0
      %1885 = vmatprep.mubr.bf16.mxu0 0
      %1886 = vmatmul.mubr.bf16.gmra.mrb[0].mxu0 %v1293
      %v1887 = vpop.f32.mrb[0].mxu0
      %v1888 = vadd.f32 %v1831, %v1887
      %v1889 = vpop.f32.mrb[0].mxu0
      %v1890 = vpop.f32.mrb[0].mxu0
      %v1891 = vadd.f32 %v1831, %v1890
      %v1892 = vpop.f32.mrb[0].mxu0
      %1893 = vmatprep.mubr.bf16.mxu0 0
      %1894 = vmatmul.mubr.bf16.gmra.mrb[0].mxu0 %v1296
      %v1895 = vpop.f32.mrb[0].mxu0
      %v1896 = vadd.f32 %v1831, %v1895
      %v1897 = vpop.f32.mrb[0].mxu0
      %v1898 = vpop.f32.mrb[0].mxu0
      %v1899 = vadd.f32 %v1831, %v1898
      %v1900 = vpop.f32.mrb[0].mxu0
      %1901 = vmatprep.mubr.bf16.mxu0 0
      %1902 = vmatmul.mubr.bf16.gmra.mrb[0].mxu0 %v1299
      %v1903 = vpop.f32.mrb[0].mxu0
      %v1904 = vadd.f32 %v1831, %v1903
      %v1905 = vpop.f32.mrb[0].mxu0
      %v1906 = vpop.f32.mrb[0].mxu0
      %v1907 = vadd.f32 %v1831, %v1906
      %v1908 = vpop.f32.mrb[0].mxu0
      %1909 = vdwg.mxu0
      %s1910 = scalar_lea.vmem %s1061, 16
      %v1911 = vld [vmem:[%s1910] sm:$0xf]
      %v1912 = vld [vmem:[%s1910 + $0x4] sm:$0xf]
      %v1913 = vld [vmem:[%s1910 + $0x8] sm:$0xf]
      %v1914 = vld [vmem:[%s1910 + $0xc] sm:$0xf]
      %s1915 = scalar_lea.vmem %s1065, 1
      %v1916 = vld [vmem:[%s1915] sm:$0x1]
      %v1918 = vlaneseq
      %v1919 = vshrl.u32 %v1918, 7
      %v1920 = vsub.s32 0, %v1919
      %v1921 = vrot.slane %v1916, %v1920
      %v1927 = vunpack.c.l.b16 %v1911
      %v1928 = vunpack.c.l.b16 %v1912
      %v1929 = vunpack.c.l.b16 %v1913
      %v1930 = vunpack.c.l.b16 %v1914
      %v1931 = vpack.c.b16 %v1928, %v1927
      %v1932 = vpack.c.b16 %v1930, %v1929
      %1935 = vmatprep.subr.bf16.mxu0 0
      %1936 = vmatpush1.bf16.msra.mxu0 %v1931
      %1937 = vmatprep.subr.bf16.mxu0 0
      %1938 = vmatpush1.bf16.msra.mxu0 %v1932
      %1939 = vmatprep.subr.bf16.mxu0 0
      %1940 = vmatpush1.bf16.msra.mxu0 0
      %1941 = vmatprep.subr.bf16.mxu0 0
      %1942 = vmatpush1.bf16.msra.mxu0 0
      %1943 = vmatprep.subr.bf16.mxu0 0
      %1944 = vmatpush1.bf16.msra.mxu0 0
      %1945 = vmatprep.subr.bf16.mxu0 0
      %1946 = vmatpush1.bf16.msra.mxu0 0
      %1947 = vmatprep.subr.bf16.mxu0 0
      %1948 = vmatpush1.bf16.msra.mxu0 0
      %1949 = vmatprep.subr.bf16.mxu0 0
      %1950 = vmatpush1.bf16.msra.mxu0 0
      %1951 = vmatprep.subr.bf16.mxu0 0
      %1952 = vmatpush1.bf16.msra.mxu0 0
      %1953 = vmatprep.subr.bf16.mxu0 0
      %1954 = vmatpush1.bf16.msra.mxu0 0
      %1955 = vmatprep.subr.bf16.mxu0 0
      %1956 = vmatpush1.bf16.msra.mxu0 0
      %1957 = vmatprep.subr.bf16.mxu0 0
      %1958 = vmatpush1.bf16.msra.mxu0 0
      %1959 = vmatprep.subr.bf16.mxu0 0
      %1960 = vmatpush1.bf16.msra.mxu0 0
      %1961 = vmatprep.subr.bf16.mxu0 0
      %1962 = vmatpush1.bf16.msra.mxu0 0
      %1963 = vmatprep.subr.bf16.mxu0 0
      %1964 = vmatpush1.bf16.msra.mxu0 0
      %1965 = vmatprep.subr.bf16.mxu0 0
      %1966 = vmatpush1.bf16.msra.mxu0 0
      %1967 = vmatprep.mubr.bf16.mxu0 0
      %1968 = vmatmul.mubr.bf16.gmra.mrb[0].mxu0 %v1290
      %v1969 = vpop.f32.mrb[0].mxu0
      %v1970 = vadd.f32 %v1921, %v1969
      %v1971 = vpop.f32.mrb[0].mxu0
      %v1972 = vpop.f32.mrb[0].mxu0
      %v1973 = vadd.f32 %v1921, %v1972
      %v1974 = vpop.f32.mrb[0].mxu0
      %1975 = vmatprep.mubr.bf16.mxu0 0
      %1976 = vmatmul.mubr.bf16.gmra.mrb[0].mxu0 %v1293
      %v1977 = vpop.f32.mrb[0].mxu0
      %v1978 = vadd.f32 %v1921, %v1977
      %v1979 = vpop.f32.mrb[0].mxu0
      %v1980 = vpop.f32.mrb[0].mxu0
      %v1981 = vadd.f32 %v1921, %v1980
      %v1982 = vpop.f32.mrb[0].mxu0
      %1983 = vmatprep.mubr.bf16.mxu0 0
      %1984 = vmatmul.mubr.bf16.gmra.mrb[0].mxu0 %v1296
      %v1985 = vpop.f32.mrb[0].mxu0
      %v1986 = vadd.f32 %v1921, %v1985
      %v1987 = vpop.f32.mrb[0].mxu0
      %v1988 = vpop.f32.mrb[0].mxu0
      %v1989 = vadd.f32 %v1921, %v1988
      %v1990 = vpop.f32.mrb[0].mxu0
      %1991 = vmatprep.mubr.bf16.mxu0 0
      %1992 = vmatmul.mubr.bf16.gmra.mrb[0].mxu0 %v1299
      %v1993 = vpop.f32.mrb[0].mxu0
      %v1994 = vadd.f32 %v1921, %v1993
      %v1995 = vpop.f32.mrb[0].mxu0
      %v1996 = vpop.f32.mrb[0].mxu0
      %v1997 = vadd.f32 %v1921, %v1996
      %v1998 = vpop.f32.mrb[0].mxu0
      %1999 = vdwg.mxu0
      %s2000 = scalar_lea.vmem %s1070, 16
      %v2001 = vld [vmem:[%s2000] sm:$0xf]
      %v2002 = vld [vmem:[%s2000 + $0x4] sm:$0xf]
      %v2003 = vld [vmem:[%s2000 + $0x8] sm:$0xf]
      %v2004 = vld [vmem:[%s2000 + $0xc] sm:$0xf]
      %s2005 = scalar_lea.vmem %s1074, 1
      %v2006 = vld [vmem:[%s2005] sm:$0x1]
      %v2008 = vlaneseq
      %v2009 = vshrl.u32 %v2008, 7
      %v2010 = vsub.s32 0, %v2009
      %v2011 = vrot.slane %v2006, %v2010
      %v2017 = vunpack.c.l.b16 %v2001
      %v2018 = vunpack.c.l.b16 %v2002
      %v2019 = vunpack.c.l.b16 %v2003
      %v2020 = vunpack.c.l.b16 %v2004
      %v2021 = vpack.c.b16 %v2018, %v2017
      %v2022 = vpack.c.b16 %v2020, %v2019
      %2025 = vmatprep.subr.bf16.mxu0 0
      %2026 = vmatpush1.bf16.msra.mxu0 %v2021
      %2027 = vmatprep.subr.bf16.mxu0 0
      %2028 = vmatpush1.bf16.msra.mxu0 %v2022
      %2029 = vmatprep.subr.bf16.mxu0 0
      %2030 = vmatpush1.bf16.msra.mxu0 0
      %2031 = vmatprep.subr.bf16.mxu0 0
      %2032 = vmatpush1.bf16.msra.mxu0 0
      %2033 = vmatprep.subr.bf16.mxu0 0
      %2034 = vmatpush1.bf16.msra.mxu0 0
      %2035 = vmatprep.subr.bf16.mxu0 0
      %2036 = vmatpush1.bf16.msra.mxu0 0
      %2037 = vmatprep.subr.bf16.mxu0 0
      %2038 = vmatpush1.bf16.msra.mxu0 0
      %2039 = vmatprep.subr.bf16.mxu0 0
      %2040 = vmatpush1.bf16.msra.mxu0 0
      %2041 = vmatprep.subr.bf16.mxu0 0
      %2042 = vmatpush1.bf16.msra.mxu0 0
      %2043 = vmatprep.subr.bf16.mxu0 0
      %2044 = vmatpush1.bf16.msra.mxu0 0
      %2045 = vmatprep.subr.bf16.mxu0 0
      %2046 = vmatpush1.bf16.msra.mxu0 0
      %2047 = vmatprep.subr.bf16.mxu0 0
      %2048 = vmatpush1.bf16.msra.mxu0 0
      %2049 = vmatprep.subr.bf16.mxu0 0
      %2050 = vmatpush1.bf16.msra.mxu0 0
      %2051 = vmatprep.subr.bf16.mxu0 0
      %2052 = vmatpush1.bf16.msra.mxu0 0
      %2053 = vmatprep.subr.bf16.mxu0 0
      %2054 = vmatpush1.bf16.msra.mxu0 0
      %2055 = vmatprep.subr.bf16.mxu0 0
      %2056 = vmatpush1.bf16.msra.mxu0 0
      %2057 = vmatprep.mubr.bf16.mxu0 0
      %2058 = vmatmul.mubr.bf16.gmra.mrb[0].mxu0 %v1290
      %v2059 = vpop.f32.mrb[0].mxu0
      %v2060 = vadd.f32 %v2011, %v2059
      %v2061 = vpop.f32.mrb[0].mxu0
      %v2062 = vpop.f32.mrb[0].mxu0
      %v2063 = vadd.f32 %v2011, %v2062
      %v2064 = vpop.f32.mrb[0].mxu0
      %2065 = vmatprep.mubr.bf16.mxu0 0
      %2066 = vmatmul.mubr.bf16.gmra.mrb[0].mxu0 %v1293
      %v2067 = vpop.f32.mrb[0].mxu0
      %v2068 = vadd.f32 %v2011, %v2067
      %v2069 = vpop.f32.mrb[0].mxu0
      %v2070 = vpop.f32.mrb[0].mxu0
      %v2071 = vadd.f32 %v2011, %v2070
      %v2072 = vpop.f32.mrb[0].mxu0
      %2073 = vmatprep.mubr.bf16.mxu0 0
      %2074 = vmatmul.mubr.bf16.gmra.mrb[0].mxu0 %v1296
      %v2075 = vpop.f32.mrb[0].mxu0
      %v2076 = vadd.f32 %v2011, %v2075
      %v2077 = vpop.f32.mrb[0].mxu0
      %v2078 = vpop.f32.mrb[0].mxu0
      %v2079 = vadd.f32 %v2011, %v2078
      %v2080 = vpop.f32.mrb[0].mxu0
      %2081 = vmatprep.mubr.bf16.mxu0 0
      %2082 = vmatmul.mubr.bf16.gmra.mrb[0].mxu0 %v1299
      %v2083 = vpop.f32.mrb[0].mxu0
      %v2084 = vadd.f32 %v2011, %v2083
      %v2085 = vpop.f32.mrb[0].mxu0
      %v2086 = vpop.f32.mrb[0].mxu0
      %v2087 = vadd.f32 %v2011, %v2086
      %v2088 = vpop.f32.mrb[0].mxu0
      %2089 = vdwg.mxu0
      %v2090 = vpack.c.bf16 %v1883, %v1880
      %v2091 = vpack.c.bf16 %v1891, %v1888
      %v2092 = vpack.c.bf16 %v1899, %v1896
      %v2093 = vpack.c.bf16 %v1907, %v1904
      %v2094 = vpack.c.bf16 %v1973, %v1970
      %v2095 = vpack.c.bf16 %v1981, %v1978
      %v2096 = vpack.c.bf16 %v1989, %v1986
      %v2097 = vpack.c.bf16 %v1997, %v1994
      %v2099 = vsel %vm1550, %v2090, 0
      %v2102 = vsel %vm1550, %v2091, 0
      %v2105 = vsel %vm1550, %v2092, 0
      %v2108 = vsel %vm1550, %v2093, 0
      %v2111 = vsel %vm1550, %v2094, 0
      %v2114 = vsel %vm1550, %v2095, 0
      %v2117 = vsel %vm1550, %v2096, 0
      %v2120 = vsel %vm1550, %v2097, 0
      %2122 = vmatprep.subr.bf16.mxu0 0
      %2123 = vmatpush1.bf16.xpose.msra.mxu0 %v2111
      %2124 = vmatprep.subr.bf16.mxu0 0
      %2125 = vmatpush1.bf16.xpose.msra.mxu0 %v2114
      %2126 = vmatprep.subr.bf16.mxu0 0
      %2127 = vmatpush1.bf16.xpose.msra.mxu0 %v2117
      %2128 = vmatprep.subr.bf16.mxu0 0
      %2129 = vmatpush1.bf16.xpose.msra.mxu0 %v2120
      %2130 = vmatprep.subr.bf16.mxu0 0
      %2131 = vmatpush1.bf16.xpose.msra.mxu0 0
      %2132 = vmatprep.subr.bf16.mxu0 0
      %2133 = vmatpush1.bf16.xpose.msra.mxu0 0
      %2134 = vmatprep.subr.bf16.mxu0 0
      %2135 = vmatpush1.bf16.xpose.msra.mxu0 0
      %2136 = vmatprep.subr.bf16.mxu0 0
      %2137 = vmatpush1.bf16.xpose.msra.mxu0 0
      %2138 = vmatprep.subr.bf16.mxu0 0
      %2139 = vmatpush1.bf16.xpose.msra.mxu0 0
      %2140 = vmatprep.subr.bf16.mxu0 0
      %2141 = vmatpush1.bf16.xpose.msra.mxu0 0
      %2142 = vmatprep.subr.bf16.mxu0 0
      %2143 = vmatpush1.bf16.xpose.msra.mxu0 0
      %2144 = vmatprep.subr.bf16.mxu0 0
      %2145 = vmatpush1.bf16.xpose.msra.mxu0 0
      %2146 = vmatprep.subr.bf16.mxu0 0
      %2147 = vmatpush1.bf16.xpose.msra.mxu0 0
      %2148 = vmatprep.subr.bf16.mxu0 0
      %2149 = vmatpush1.bf16.xpose.msra.mxu0 0
      %2150 = vmatprep.subr.bf16.mxu0 0
      %2151 = vmatpush1.bf16.xpose.msra.mxu0 0
      %2152 = vmatprep.subr.bf16.mxu0 0
      %2153 = vmatpush1.bf16.xpose.msra.mxu0 0
      %2154 = vmatprep.mubr.bf16.mxu0 0
      %2155 = vmatmul.mubr.bf16.gmra.mrb[0].mxu0 %v2099
      %v2156 = vpop.f32.mrb[0].mxu0
      %v2157 = vadd.f32 %v1146, %v2156
      %v2158 = vpop.f32.mrb[0].mxu0
      %v2159 = vpop.f32.mrb[0].mxu0
      %v2160 = vadd.f32 %v1147, %v2159
      %v2161 = vpop.f32.mrb[0].mxu0
      %2162 = vmatprep.mubr.bf16.mxu0 0
      %2163 = vmatmul.mubr.bf16.gmra.mrb[0].mxu0 %v2102
      %v2164 = vpop.f32.mrb[0].mxu0
      %v2165 = vadd.f32 %v1148, %v2164
      %v2166 = vpop.f32.mrb[0].mxu0
      %v2167 = vpop.f32.mrb[0].mxu0
      %v2168 = vadd.f32 %v1149, %v2167
      %v2169 = vpop.f32.mrb[0].mxu0
      %2170 = vmatprep.mubr.bf16.mxu0 0
      %2171 = vmatmul.mubr.bf16.gmra.mrb[0].mxu0 %v2105
      %v2172 = vpop.f32.mrb[0].mxu0
      %v2173 = vadd.f32 %v1150, %v2172
      %v2174 = vpop.f32.mrb[0].mxu0
      %v2175 = vpop.f32.mrb[0].mxu0
      %v2176 = vadd.f32 %v1151, %v2175
      %v2177 = vpop.f32.mrb[0].mxu0
      %2178 = vmatprep.mubr.bf16.mxu0 0
      %2179 = vmatmul.mubr.bf16.gmra.mrb[0].mxu0 %v2108
      %v2180 = vpop.f32.mrb[0].mxu0
      %v2181 = vadd.f32 %v1152, %v2180
      %v2182 = vpop.f32.mrb[0].mxu0
      %v2183 = vpop.f32.mrb[0].mxu0
      %v2184 = vadd.f32 %v1153, %v2183
      %v2185 = vpop.f32.mrb[0].mxu0
      %2186 = vdwg.mxu0
      %v2187 = vsel %vm1640, %v2157, -inf
      %2188 = vmax.xlane.f32.xlu0 %v2187
      %v2189 = vpop.xlane.xlu0 %2188
      %v2190 = vsel %vm1640, %v2160, -inf
      %2191 = vmax.xlane.f32.xlu0 %v2190
      %v2192 = vpop.xlane.xlu0 %2191
      %v2193 = vsel %vm1640, %v2165, -inf
      %2194 = vmax.xlane.f32.xlu0 %v2193
      %v2195 = vpop.xlane.xlu0 %2194
      %v2196 = vsel %vm1640, %v2168, -inf
      %2197 = vmax.xlane.f32.xlu0 %v2196
      %v2198 = vpop.xlane.xlu0 %2197
      %v2199 = vsel %vm1640, %v2173, -inf
      %2200 = vmax.xlane.f32.xlu0 %v2199
      %v2201 = vpop.xlane.xlu0 %2200
      %v2202 = vsel %vm1640, %v2176, -inf
      %2203 = vmax.xlane.f32.xlu0 %v2202
      %v2204 = vpop.xlane.xlu0 %2203
      %v2205 = vsel %vm1640, %v2181, -inf
      %2206 = vmax.xlane.f32.xlu0 %v2205
      %v2207 = vpop.xlane.xlu0 %2206
      %v2208 = vsel %vm1640, %v2184, -inf
      %2209 = vmax.xlane.f32.xlu0 %v2208
      %v2210 = vpop.xlane.xlu0 %2209
      %v2211 = vsub.f32 %v2157, %v2189
      %v2212 = vsub.f32 %v2160, %v2192
      %v2213 = vsub.f32 %v2165, %v2195
      %v2214 = vsub.f32 %v2168, %v2198
      %v2215 = vsub.f32 %v2173, %v2201
      %v2216 = vsub.f32 %v2176, %v2204
      %v2217 = vsub.f32 %v2181, %v2207
      %v2218 = vsub.f32 %v2184, %v2210
      %v2219 = vmul.f32 %v2211, 1.442695
      %v2220 = vpow.pop %v2219
      %v2221 = vmul.f32 %v2212, 1.442695
      %v2222 = vpow.pop %v2221
      %v2223 = vmul.f32 %v2213, 1.442695
      %v2224 = vpow.pop %v2223
      %v2225 = vmul.f32 %v2214, 1.442695
      %v2226 = vpow.pop %v2225
      %v2227 = vmul.f32 %v2215, 1.442695
      %v2228 = vpow.pop %v2227
      %v2229 = vmul.f32 %v2216, 1.442695
      %v2230 = vpow.pop %v2229
      %v2231 = vmul.f32 %v2217, 1.442695
      %v2232 = vpow.pop %v2231
      %v2233 = vmul.f32 %v2218, 1.442695
      %v2234 = vpow.pop %v2233
      %v2235 = vsel %vm1640, %v2220, 0.0
      %2236 = vadd.xlane.f32.xlu0 %v2235
      %v2237 = vpop.xlane.xlu0 %2236
      %v2238 = vsel %vm1640, %v2222, 0.0
      %2239 = vadd.xlane.f32.xlu0 %v2238
      %v2240 = vpop.xlane.xlu0 %2239
      %v2241 = vsel %vm1640, %v2224, 0.0
      %2242 = vadd.xlane.f32.xlu0 %v2241
      %v2243 = vpop.xlane.xlu0 %2242
      %v2244 = vsel %vm1640, %v2226, 0.0
      %2245 = vadd.xlane.f32.xlu0 %v2244
      %v2246 = vpop.xlane.xlu0 %2245
      %v2247 = vsel %vm1640, %v2228, 0.0
      %2248 = vadd.xlane.f32.xlu0 %v2247
      %v2249 = vpop.xlane.xlu0 %2248
      %v2250 = vsel %vm1640, %v2230, 0.0
      %2251 = vadd.xlane.f32.xlu0 %v2250
      %v2252 = vpop.xlane.xlu0 %2251
      %v2253 = vsel %vm1640, %v2232, 0.0
      %2254 = vadd.xlane.f32.xlu0 %v2253
      %v2255 = vpop.xlane.xlu0 %2254
      %v2256 = vsel %vm1640, %v2234, 0.0
      %2257 = vadd.xlane.f32.xlu0 %v2256
      %v2258 = vpop.xlane.xlu0 %2257
      %v2259 = vrcp.pop %v2237
      %v2260 = vrcp.pop %v2240
      %v2261 = vrcp.pop %v2243
      %v2262 = vrcp.pop %v2246
      %v2263 = vrcp.pop %v2249
      %v2264 = vrcp.pop %v2252
      %v2265 = vrcp.pop %v2255
      %v2266 = vrcp.pop %v2258
      %v2267 = vmul.f32 %v2220, %v2259
      %v2268 = vmul.f32 %v2222, %v2260
      %v2269 = vmul.f32 %v2224, %v2261
      %v2270 = vmul.f32 %v2226, %v2262
      %v2271 = vmul.f32 %v2228, %v2263
      %v2272 = vmul.f32 %v2230, %v2264
      %v2273 = vmul.f32 %v2232, %v2265
      %v2274 = vmul.f32 %v2234, %v2266
      %v2275 = vpack.c.bf16 %v2268, %v2267
      %v2276 = vpack.c.bf16 %v2270, %v2269
      %v2277 = vpack.c.bf16 %v2272, %v2271
      %v2278 = vpack.c.bf16 %v2274, %v2273
      %v2279 = vpack.c.bf16 %v2063, %v2060
      %v2280 = vpack.c.bf16 %v2071, %v2068
      %v2281 = vpack.c.bf16 %v2079, %v2076
      %v2282 = vpack.c.bf16 %v2087, %v2084
      %v2284 = vsel %vm1640, %v2275, 0
      %v2287 = vsel %vm1640, %v2276, 0
      %v2290 = vsel %vm1640, %v2277, 0
      %v2293 = vsel %vm1640, %v2278, 0
      %2295 = vmatprep.subr.bf16.mxu0 0
      %2296 = vmatpush1.bf16.msra.mxu0 %v2279
      %2297 = vmatprep.subr.bf16.mxu0 0
      %2298 = vmatpush1.bf16.msra.mxu0 %v2280
      %2299 = vmatprep.subr.bf16.mxu0 0
      %2300 = vmatpush1.bf16.msra.mxu0 %v2281
      %2301 = vmatprep.subr.bf16.mxu0 0
      %2302 = vmatpush1.bf16.msra.mxu0 %v2282
      %2303 = vmatprep.subr.bf16.mxu0 0
      %2304 = vmatpush1.bf16.msra.mxu0 0
      %2305 = vmatprep.subr.bf16.mxu0 0
      %2306 = vmatpush1.bf16.msra.mxu0 0
      %2307 = vmatprep.subr.bf16.mxu0 0
      %2308 = vmatpush1.bf16.msra.mxu0 0
      %2309 = vmatprep.subr.bf16.mxu0 0
      %2310 = vmatpush1.bf16.msra.mxu0 0
      %2311 = vmatprep.subr.bf16.mxu0 0
      %2312 = vmatpush1.bf16.msra.mxu0 0
      %2313 = vmatprep.subr.bf16.mxu0 0
      %2314 = vmatpush1.bf16.msra.mxu0 0
      %2315 = vmatprep.subr.bf16.mxu0 0
      %2316 = vmatpush1.bf16.msra.mxu0 0
      %2317 = vmatprep.subr.bf16.mxu0 0
      %2318 = vmatpush1.bf16.msra.mxu0 0
      %2319 = vmatprep.subr.bf16.mxu0 0
      %2320 = vmatpush1.bf16.msra.mxu0 0
      %2321 = vmatprep.subr.bf16.mxu0 0
      %2322 = vmatpush1.bf16.msra.mxu0 0
      %2323 = vmatprep.subr.bf16.mxu0 0
      %2324 = vmatpush1.bf16.msra.mxu0 0
      %2325 = vmatprep.subr.bf16.mxu0 0
      %2326 = vmatpush1.bf16.msra.mxu0 0
      %2327 = vmatprep.mubr.bf16.mxu0 0
      %2328 = vmatmul.mubr.bf16.gmra.mrb[0].mxu0 %v2284
      %v2329 = vpop.f32.mrb[0].mxu0
      %v2330 = vadd.f32 0.0, %v2329
      %v2331 = vpop.f32.mrb[0].mxu0
      %v2332 = vpop.f32.mrb[0].mxu0
      %v2333 = vadd.f32 0.0, %v2332
      %v2334 = vpop.f32.mrb[0].mxu0
      %2335 = vmatprep.mubr.bf16.mxu0 0
      %2336 = vmatmul.mubr.bf16.gmra.mrb[0].mxu0 %v2287
      %v2337 = vpop.f32.mrb[0].mxu0
      %v2338 = vadd.f32 0.0, %v2337
      %v2339 = vpop.f32.mrb[0].mxu0
      %v2340 = vpop.f32.mrb[0].mxu0
      %v2341 = vadd.f32 0.0, %v2340
      %v2342 = vpop.f32.mrb[0].mxu0
      %2343 = vmatprep.mubr.bf16.mxu0 0
      %2344 = vmatmul.mubr.bf16.gmra.mrb[0].mxu0 %v2290
      %v2345 = vpop.f32.mrb[0].mxu0
      %v2346 = vadd.f32 0.0, %v2345
      %v2347 = vpop.f32.mrb[0].mxu0
      %v2348 = vpop.f32.mrb[0].mxu0
      %v2349 = vadd.f32 0.0, %v2348
      %v2350 = vpop.f32.mrb[0].mxu0
      %2351 = vmatprep.mubr.bf16.mxu0 0
      %2352 = vmatmul.mubr.bf16.gmra.mrb[0].mxu0 %v2293
      %v2353 = vpop.f32.mrb[0].mxu0
      %v2354 = vadd.f32 0.0, %v2353
      %v2355 = vpop.f32.mrb[0].mxu0
      %v2356 = vpop.f32.mrb[0].mxu0
      %v2357 = vadd.f32 0.0, %v2356
      %v2358 = vpop.f32.mrb[0].mxu0
      %2359 = vdwg.mxu0
      %v2360 = vpack.c.bf16 %v2333, %v2330
      %v2361 = vpack.c.bf16 %v2341, %v2338
      %v2362 = vpack.c.bf16 %v2349, %v2346
      %v2363 = vpack.c.bf16 %v2357, %v2354
      %s2364 = scalar_lea.vmem %s1079, 8
      %v2365 = vld [vmem:[%s2364] sm:$0xf]
      %v2366 = vld [vmem:[%s2364 + $0x4] sm:$0xf]
      %v2369 = vunpack.c.l.b16 %v2365
      %v2370 = vunpack.c.l.b16 %v2366
      %v2371 = vpack.c.b16 %v2370, %v2369
      %v2374 = vsel %vm1550, %v2360, 0
      %v2377 = vsel %vm1550, %v2361, 0
      %v2380 = vsel %vm1550, %v2362, 0
      %v2383 = vsel %vm1550, %v2363, 0
      %2385 = vmatprep.subr.bf16.mxu0 0
      %2386 = vmatpush1.bf16.msra.mxu0 %v2371
      %2387 = vmatprep.subr.bf16.mxu0 0
      %2388 = vmatpush1.bf16.msra.mxu0 0
      %2389 = vmatprep.subr.bf16.mxu0 0
      %2390 = vmatpush1.bf16.msra.mxu0 0
      %2391 = vmatprep.subr.bf16.mxu0 0
      %2392 = vmatpush1.bf16.msra.mxu0 0
      %2393 = vmatprep.subr.bf16.mxu0 0
      %2394 = vmatpush1.bf16.msra.mxu0 0
      %2395 = vmatprep.subr.bf16.mxu0 0
      %2396 = vmatpush1.bf16.msra.mxu0 0
      %2397 = vmatprep.subr.bf16.mxu0 0
      %2398 = vmatpush1.bf16.msra.mxu0 0
      %2399 = vmatprep.subr.bf16.mxu0 0
      %2400 = vmatpush1.bf16.msra.mxu0 0
      %2401 = vmatprep.subr.bf16.mxu0 0
      %2402 = vmatpush1.bf16.msra.mxu0 0
      %2403 = vmatprep.subr.bf16.mxu0 0
      %2404 = vmatpush1.bf16.msra.mxu0 0
      %2405 = vmatprep.subr.bf16.mxu0 0
      %2406 = vmatpush1.bf16.msra.mxu0 0
      %2407 = vmatprep.subr.bf16.mxu0 0
      %2408 = vmatpush1.bf16.msra.mxu0 0
      %2409 = vmatprep.subr.bf16.mxu0 0
      %2410 = vmatpush1.bf16.msra.mxu0 0
      %2411 = vmatprep.subr.bf16.mxu0 0
      %2412 = vmatpush1.bf16.msra.mxu0 0
      %2413 = vmatprep.subr.bf16.mxu0 0
      %2414 = vmatpush1.bf16.msra.mxu0 0
      %2415 = vmatprep.subr.bf16.mxu0 0
      %2416 = vmatpush1.bf16.msra.mxu0 0
      %2417 = vmatprep.mubr.bf16.mxu0 0
      %2418 = vmatmul.mubr.bf16.gmra.mrb[0].mxu0 %v2374
      %v2419 = vpop.f32.mrb[0].mxu0
      %v2420 = vadd.f32 0.0, %v2419
      %v2421 = vpop.f32.mrb[0].mxu0
      %v2422 = vpop.f32.mrb[0].mxu0
      %v2423 = vadd.f32 0.0, %v2422
      %v2424 = vpop.f32.mrb[0].mxu0
      %2425 = vmatprep.mubr.bf16.mxu0 0
      %2426 = vmatmul.mubr.bf16.gmra.mrb[0].mxu0 %v2377
      %v2427 = vpop.f32.mrb[0].mxu0
      %v2428 = vadd.f32 0.0, %v2427
      %v2429 = vpop.f32.mrb[0].mxu0
      %v2430 = vpop.f32.mrb[0].mxu0
      %v2431 = vadd.f32 0.0, %v2430
      %v2432 = vpop.f32.mrb[0].mxu0
      %2433 = vmatprep.mubr.bf16.mxu0 0
      %2434 = vmatmul.mubr.bf16.gmra.mrb[0].mxu0 %v2380
      %v2435 = vpop.f32.mrb[0].mxu0
      %v2436 = vadd.f32 0.0, %v2435
      %v2437 = vpop.f32.mrb[0].mxu0
      %v2438 = vpop.f32.mrb[0].mxu0
      %v2439 = vadd.f32 0.0, %v2438
      %v2440 = vpop.f32.mrb[0].mxu0
      %2441 = vmatprep.mubr.bf16.mxu0 0
      %2442 = vmatmul.mubr.bf16.gmra.mrb[0].mxu0 %v2383
      %v2443 = vpop.f32.mrb[0].mxu0
      %v2444 = vadd.f32 0.0, %v2443
      %v2445 = vpop.f32.mrb[0].mxu0
      %v2446 = vpop.f32.mrb[0].mxu0
      %v2447 = vadd.f32 0.0, %v2446
      %v2448 = vpop.f32.mrb[0].mxu0
      %2449 = vdwg.mxu0
      %v2452 = vunpack.c.l.b16 %v1818
      %v2453 = vunpack.c.l.b16 %v1819
      %v2454 = vpack.c.b16 %v2453, %v2452
      %v2457 = vsel %vm1550, %v1814, 0
      %v2460 = vsel %vm1550, %v1815, 0
      %v2463 = vsel %vm1550, %v1816, 0
      %v2466 = vsel %vm1550, %v1817, 0
      %2468 = vmatprep.subr.bf16.mxu0 0
      %2469 = vmatpush1.bf16.msra.mxu0 %v2454
      %2470 = vmatprep.subr.bf16.mxu0 0
      %2471 = vmatpush1.bf16.msra.mxu0 0
      %2472 = vmatprep.subr.bf16.mxu0 0
      %2473 = vmatpush1.bf16.msra.mxu0 0
      %2474 = vmatprep.subr.bf16.mxu0 0
      %2475 = vmatpush1.bf16.msra.mxu0 0
      %2476 = vmatprep.subr.bf16.mxu0 0
      %2477 = vmatpush1.bf16.msra.mxu0 0
      %2478 = vmatprep.subr.bf16.mxu0 0
      %2479 = vmatpush1.bf16.msra.mxu0 0
      %2480 = vmatprep.subr.bf16.mxu0 0
      %2481 = vmatpush1.bf16.msra.mxu0 0
      %2482 = vmatprep.subr.bf16.mxu0 0
      %2483 = vmatpush1.bf16.msra.mxu0 0
      %2484 = vmatprep.subr.bf16.mxu0 0
      %2485 = vmatpush1.bf16.msra.mxu0 0
      %2486 = vmatprep.subr.bf16.mxu0 0
      %2487 = vmatpush1.bf16.msra.mxu0 0
      %2488 = vmatprep.subr.bf16.mxu0 0
      %2489 = vmatpush1.bf16.msra.mxu0 0
      %2490 = vmatprep.subr.bf16.mxu0 0
      %2491 = vmatpush1.bf16.msra.mxu0 0
      %2492 = vmatprep.subr.bf16.mxu0 0
      %2493 = vmatpush1.bf16.msra.mxu0 0
      %2494 = vmatprep.subr.bf16.mxu0 0
      %2495 = vmatpush1.bf16.msra.mxu0 0
      %2496 = vmatprep.subr.bf16.mxu0 0
      %2497 = vmatpush1.bf16.msra.mxu0 0
      %2498 = vmatprep.subr.bf16.mxu0 0
      %2499 = vmatpush1.bf16.msra.mxu0 0
      %2500 = vmatprep.mubr.bf16.mxu0 0
      %2501 = vmatmul.mubr.bf16.gmra.mrb[0].mxu0 %v2457
      %v2502 = vpop.f32.mrb[0].mxu0
      %v2503 = vadd.f32 %v2420, %v2502
      %v2504 = vpop.f32.mrb[0].mxu0
      %v2505 = vpop.f32.mrb[0].mxu0
      %v2506 = vadd.f32 %v2423, %v2505
      %v2507 = vpop.f32.mrb[0].mxu0
      %2508 = vmatprep.mubr.bf16.mxu0 0
      %2509 = vmatmul.mubr.bf16.gmra.mrb[0].mxu0 %v2460
      %v2510 = vpop.f32.mrb[0].mxu0
      %v2511 = vadd.f32 %v2428, %v2510
      %v2512 = vpop.f32.mrb[0].mxu0
      %v2513 = vpop.f32.mrb[0].mxu0
      %v2514 = vadd.f32 %v2431, %v2513
      %v2515 = vpop.f32.mrb[0].mxu0
      %2516 = vmatprep.mubr.bf16.mxu0 0
      %2517 = vmatmul.mubr.bf16.gmra.mrb[0].mxu0 %v2463
      %v2518 = vpop.f32.mrb[0].mxu0
      %v2519 = vadd.f32 %v2436, %v2518
      %v2520 = vpop.f32.mrb[0].mxu0
      %v2521 = vpop.f32.mrb[0].mxu0
      %v2522 = vadd.f32 %v2439, %v2521
      %v2523 = vpop.f32.mrb[0].mxu0
      %2524 = vmatprep.mubr.bf16.mxu0 0
      %2525 = vmatmul.mubr.bf16.gmra.mrb[0].mxu0 %v2466
      %v2526 = vpop.f32.mrb[0].mxu0
      %v2527 = vadd.f32 %v2444, %v2526
      %v2528 = vpop.f32.mrb[0].mxu0
      %v2529 = vpop.f32.mrb[0].mxu0
      %v2530 = vadd.f32 %v2447, %v2529
      %v2531 = vpop.f32.mrb[0].mxu0
      %2532 = vdwg.mxu0
      %v2533 = vld [vmem:[%s1083] sm:$0x1]
      %v2535 = vlaneseq
      %v2536 = vshrl.u32 %v2535, 7
      %v2537 = vsub.s32 0, %v2536
      %v2538 = vrot.slane %v2533, %v2537
      %v2540 = vadd.f32 %v2503, %v2538
      %v2541 = vadd.f32 %v2506, %v2538
      %v2542 = vadd.f32 %v2511, %v2538
      %v2543 = vadd.f32 %v2514, %v2538
      %v2544 = vadd.f32 %v2519, %v2538
      %v2545 = vadd.f32 %v2522, %v2538
      %v2546 = vadd.f32 %v2527, %v2538
      %v2547 = vadd.f32 %v2530, %v2538
      %v2548 = vadd.f32 %v1231, %v2540
      %v2549 = vadd.f32 %v1234, %v2541
      %v2550 = vadd.f32 %v1239, %v2542
      %v2551 = vadd.f32 %v1242, %v2543
      %v2552 = vadd.f32 %v1247, %v2544
      %v2553 = vadd.f32 %v1250, %v2545
      %v2554 = vadd.f32 %v1255, %v2546
      %v2555 = vadd.f32 %v1258, %v2547
      %v2556 = vld [vmem:[%s1087] sm:$0x1]
      %v2557 = vld [vmem:[%s1091] sm:$0x1]
      %v2558 = vsel %vm1288, %v2548, 0.0
      %2559 = vadd.xlane.f32.xlu0 %v2558
      %v2560 = vpop.xlane.xlu0 %2559
      %v2561 = vsel %vm1288, %v2549, 0.0
      %2562 = vadd.xlane.f32.xlu0 %v2561
      %v2563 = vpop.xlane.xlu0 %2562
      %v2564 = vsel %vm1288, %v2550, 0.0
      %2565 = vadd.xlane.f32.xlu0 %v2564
      %v2566 = vpop.xlane.xlu0 %2565
      %v2567 = vsel %vm1288, %v2551, 0.0
      %2568 = vadd.xlane.f32.xlu0 %v2567
      %v2569 = vpop.xlane.xlu0 %2568
      %v2570 = vsel %vm1288, %v2552, 0.0
      %2571 = vadd.xlane.f32.xlu0 %v2570
      %v2572 = vpop.xlane.xlu0 %2571
      %v2573 = vsel %vm1288, %v2553, 0.0
      %2574 = vadd.xlane.f32.xlu0 %v2573
      %v2575 = vpop.xlane.xlu0 %2574
      %v2576 = vsel %vm1288, %v2554, 0.0
      %2577 = vadd.xlane.f32.xlu0 %v2576
      %v2578 = vpop.xlane.xlu0 %2577
      %v2579 = vsel %vm1288, %v2555, 0.0
      %2580 = vadd.xlane.f32.xlu0 %v2579
      %v2581 = vpop.xlane.xlu0 %2580
      %v2582 = vrcp.pop 32.0
      %v2583 = vmul.f32 %v2560, %v2582
      %v2584 = vmul.f32 %v2563, %v2582
      %v2585 = vmul.f32 %v2566, %v2582
      %v2586 = vmul.f32 %v2569, %v2582
      %v2587 = vmul.f32 %v2572, %v2582
      %v2588 = vmul.f32 %v2575, %v2582
      %v2589 = vmul.f32 %v2578, %v2582
      %v2590 = vmul.f32 %v2581, %v2582
      %v2591 = vsub.f32 %v2548, %v2583
      %v2592 = vsub.f32 %v2549, %v2584
      %v2593 = vsub.f32 %v2550, %v2585
      %v2594 = vsub.f32 %v2551, %v2586
      %v2595 = vsub.f32 %v2552, %v2587
      %v2596 = vsub.f32 %v2553, %v2588
      %v2597 = vsub.f32 %v2554, %v2589
      %v2598 = vsub.f32 %v2555, %v2590
      %v2599 = vmul.f32 %v2591, %v2591
      %v2600 = vmul.f32 %v2592, %v2592
      %v2601 = vmul.f32 %v2593, %v2593
      %v2602 = vmul.f32 %v2594, %v2594
      %v2603 = vmul.f32 %v2595, %v2595
      %v2604 = vmul.f32 %v2596, %v2596
      %v2605 = vmul.f32 %v2597, %v2597
      %v2606 = vmul.f32 %v2598, %v2598
      %v2607 = vsel %vm1288, %v2599, 0.0
      %2608 = vadd.xlane.f32.xlu0 %v2607
      %v2609 = vpop.xlane.xlu0 %2608
      %v2610 = vsel %vm1288, %v2600, 0.0
      %2611 = vadd.xlane.f32.xlu0 %v2610
      %v2612 = vpop.xlane.xlu0 %2611
      %v2613 = vsel %vm1288, %v2601, 0.0
      %2614 = vadd.xlane.f32.xlu0 %v2613
      %v2615 = vpop.xlane.xlu0 %2614
      %v2616 = vsel %vm1288, %v2602, 0.0
      %2617 = vadd.xlane.f32.xlu0 %v2616
      %v2618 = vpop.xlane.xlu0 %2617
      %v2619 = vsel %vm1288, %v2603, 0.0
      %2620 = vadd.xlane.f32.xlu0 %v2619
      %v2621 = vpop.xlane.xlu0 %2620
      %v2622 = vsel %vm1288, %v2604, 0.0
      %2623 = vadd.xlane.f32.xlu0 %v2622
      %v2624 = vpop.xlane.xlu0 %2623
      %v2625 = vsel %vm1288, %v2605, 0.0
      %2626 = vadd.xlane.f32.xlu0 %v2625
      %v2627 = vpop.xlane.xlu0 %2626
      %v2628 = vsel %vm1288, %v2606, 0.0
      %2629 = vadd.xlane.f32.xlu0 %v2628
      %v2630 = vpop.xlane.xlu0 %2629
      %v2631 = vmul.f32 %v2609, %v2582
      %v2632 = vmul.f32 %v2612, %v2582
      %v2633 = vmul.f32 %v2615, %v2582
      %v2634 = vmul.f32 %v2618, %v2582
      %v2635 = vmul.f32 %v2621, %v2582
      %v2636 = vmul.f32 %v2624, %v2582
      %v2637 = vmul.f32 %v2627, %v2582
      %v2638 = vmul.f32 %v2630, %v2582
      %v2639 = vadd.f32 %v2631, 1e-05
      %v2640 = vadd.f32 %v2632, 1e-05
      %v2641 = vadd.f32 %v2633, 1e-05
      %v2642 = vadd.f32 %v2634, 1e-05
      %v2643 = vadd.f32 %v2635, 1e-05
      %v2644 = vadd.f32 %v2636, 1e-05
      %v2645 = vadd.f32 %v2637, 1e-05
      %v2646 = vadd.f32 %v2638, 1e-05
      %v2647 = vrsqrt.pop %v2639
      %v2648 = vrsqrt.pop %v2640
      %v2649 = vrsqrt.pop %v2641
      %v2650 = vrsqrt.pop %v2642
      %v2651 = vrsqrt.pop %v2643
      %v2652 = vrsqrt.pop %v2644
      %v2653 = vrsqrt.pop %v2645
      %v2654 = vrsqrt.pop %v2646
      %v2655 = vmul.f32 %v2591, %v2647
      %v2656 = vmul.f32 %v2592, %v2648
      %v2657 = vmul.f32 %v2593, %v2649
      %v2658 = vmul.f32 %v2594, %v2650
      %v2659 = vmul.f32 %v2595, %v2651
      %v2660 = vmul.f32 %v2596, %v2652
      %v2661 = vmul.f32 %v2597, %v2653
      %v2662 = vmul.f32 %v2598, %v2654
      %v2664 = vlaneseq
      %v2665 = vshrl.u32 %v2664, 7
      %v2666 = vsub.s32 0, %v2665
      %v2667 = vrot.slane %v2556, %v2666
      %v2669 = vmul.f32 %v2655, %v2667
      %v2670 = vmul.f32 %v2656, %v2667
      %v2671 = vmul.f32 %v2657, %v2667
      %v2672 = vmul.f32 %v2658, %v2667
      %v2673 = vmul.f32 %v2659, %v2667
      %v2674 = vmul.f32 %v2660, %v2667
      %v2675 = vmul.f32 %v2661, %v2667
      %v2676 = vmul.f32 %v2662, %v2667
      %v2678 = vlaneseq
      %v2679 = vshrl.u32 %v2678, 7
      %v2680 = vsub.s32 0, %v2679
      %v2681 = vrot.slane %v2557, %v2680
      %v2683 = vadd.f32 %v2669, %v2681
      %v2684 = vadd.f32 %v2670, %v2681
      %v2685 = vadd.f32 %v2671, %v2681
      %v2686 = vadd.f32 %v2672, %v2681
      %v2687 = vadd.f32 %v2673, %v2681
      %v2688 = vadd.f32 %v2674, %v2681
      %v2689 = vadd.f32 %v2675, %v2681
      %v2690 = vadd.f32 %v2676, %v2681
      %v2691 = vpack.c.bf16 %v2684, %v2683
      %v2692 = vpack.c.bf16 %v2686, %v2685
      %v2693 = vpack.c.bf16 %v2688, %v2687
      %v2694 = vpack.c.bf16 %v2690, %v2689
      %v2695 = vld [vmem:[%s1096] sm:$0xf]
      %v2696 = vld [vmem:[%s1096 + $0x4] sm:$0xf]
      %v2697 = vld [vmem:[%s1096 + $0x8] sm:$0xf]
      %v2698 = vld [vmem:[%s1096 + $0xc] sm:$0xf]
      %v2699 = vld [vmem:[%s1100] sm:$0x1]
      %v2701 = vlaneseq
      %v2702 = vshrl.u32 %v2701, 7
      %v2703 = vsub.s32 0, %v2702
      %v2704 = vrot.slane %v2699, %v2703
      %v2710 = vunpack.c.l.b16 %v2695
      %v2711 = vunpack.c.l.b16 %v2696
      %v2712 = vunpack.c.l.b16 %v2697
      %v2713 = vunpack.c.l.b16 %v2698
      %v2714 = vpack.c.b16 %v2711, %v2710
      %v2715 = vpack.c.b16 %v2713, %v2712
      %v2719 = vsel %vm1288, %v2691, 0
      %v2722 = vsel %vm1288, %v2692, 0
      %v2725 = vsel %vm1288, %v2693, 0
      %v2728 = vsel %vm1288, %v2694, 0
      %2730 = vmatprep.subr.bf16.mxu0 0
      %2731 = vmatpush1.bf16.msra.mxu0 %v2714
      %2732 = vmatprep.subr.bf16.mxu0 0
      %2733 = vmatpush1.bf16.msra.mxu0 %v2715
      %2734 = vmatprep.subr.bf16.mxu0 0
      %2735 = vmatpush1.bf16.msra.mxu0 0
      %2736 = vmatprep.subr.bf16.mxu0 0
      %2737 = vmatpush1.bf16.msra.mxu0 0
      %2738 = vmatprep.subr.bf16.mxu0 0
      %2739 = vmatpush1.bf16.msra.mxu0 0
      %2740 = vmatprep.subr.bf16.mxu0 0
      %2741 = vmatpush1.bf16.msra.mxu0 0
      %2742 = vmatprep.subr.bf16.mxu0 0
      %2743 = vmatpush1.bf16.msra.mxu0 0
      %2744 = vmatprep.subr.bf16.mxu0 0
      %2745 = vmatpush1.bf16.msra.mxu0 0
      %2746 = vmatprep.subr.bf16.mxu0 0
      %2747 = vmatpush1.bf16.msra.mxu0 0
      %2748 = vmatprep.subr.bf16.mxu0 0
      %2749 = vmatpush1.bf16.msra.mxu0 0
      %2750 = vmatprep.subr.bf16.mxu0 0
      %2751 = vmatpush1.bf16.msra.mxu0 0
      %2752 = vmatprep.subr.bf16.mxu0 0
      %2753 = vmatpush1.bf16.msra.mxu0 0
      %2754 = vmatprep.subr.bf16.mxu0 0
      %2755 = vmatpush1.bf16.msra.mxu0 0
      %2756 = vmatprep.subr.bf16.mxu0 0
      %2757 = vmatpush1.bf16.msra.mxu0 0
      %2758 = vmatprep.subr.bf16.mxu0 0
      %2759 = vmatpush1.bf16.msra.mxu0 0
      %2760 = vmatprep.subr.bf16.mxu0 0
      %2761 = vmatpush1.bf16.msra.mxu0 0
      %2762 = vmatprep.mubr.bf16.mxu0 0
      %2763 = vmatmul.mubr.bf16.gmra.mrb[0].mxu0 %v2719
      %v2764 = vpop.f32.mrb[0].mxu0
      %v2765 = vadd.f32 %v2704, %v2764
      %v2766 = vpop.f32.mrb[0].mxu0
      %v2767 = vpop.f32.mrb[0].mxu0
      %v2768 = vadd.f32 %v2704, %v2767
      %v2769 = vpop.f32.mrb[0].mxu0
      %2770 = vmatprep.mubr.bf16.mxu0 0
      %2771 = vmatmul.mubr.bf16.gmra.mrb[0].mxu0 %v2722
      %v2772 = vpop.f32.mrb[0].mxu0
      %v2773 = vadd.f32 %v2704, %v2772
      %v2774 = vpop.f32.mrb[0].mxu0
      %v2775 = vpop.f32.mrb[0].mxu0
      %v2776 = vadd.f32 %v2704, %v2775
      %v2777 = vpop.f32.mrb[0].mxu0
      %2778 = vmatprep.mubr.bf16.mxu0 0
      %2779 = vmatmul.mubr.bf16.gmra.mrb[0].mxu0 %v2725
      %v2780 = vpop.f32.mrb[0].mxu0
      %v2781 = vadd.f32 %v2704, %v2780
      %v2782 = vpop.f32.mrb[0].mxu0
      %v2783 = vpop.f32.mrb[0].mxu0
      %v2784 = vadd.f32 %v2704, %v2783
      %v2785 = vpop.f32.mrb[0].mxu0
      %2786 = vmatprep.mubr.bf16.mxu0 0
      %2787 = vmatmul.mubr.bf16.gmra.mrb[0].mxu0 %v2728
      %v2788 = vpop.f32.mrb[0].mxu0
      %v2789 = vadd.f32 %v2704, %v2788
      %v2790 = vpop.f32.mrb[0].mxu0
      %v2791 = vpop.f32.mrb[0].mxu0
      %v2792 = vadd.f32 %v2704, %v2791
      %v2793 = vpop.f32.mrb[0].mxu0
      %2794 = vdwg.mxu0
      %v2795 = vmax.f32 %v2765, 0.0
      %v2796 = vmax.f32 %v2768, 0.0
      %v2797 = vmax.f32 %v2773, 0.0
      %v2798 = vmax.f32 %v2776, 0.0
      %v2799 = vmax.f32 %v2781, 0.0
      %v2800 = vmax.f32 %v2784, 0.0
      %v2801 = vmax.f32 %v2789, 0.0
      %v2802 = vmax.f32 %v2792, 0.0
      %v2803 = vpack.c.bf16 %v2796, %v2795
      %v2804 = vpack.c.bf16 %v2798, %v2797
      %v2805 = vpack.c.bf16 %v2800, %v2799
      %v2806 = vpack.c.bf16 %v2802, %v2801
      %v2807 = vld [vmem:[%s1105] sm:$0xf]
      %v2808 = vld [vmem:[%s1105 + $0x4] sm:$0xf]
      %v2809 = vld [vmem:[%s1105 + $0x8] sm:$0xf]
      %v2810 = vld [vmem:[%s1105 + $0xc] sm:$0xf]
      %v2811 = vld [vmem:[%s1105 + $0x10] sm:$0xf]
      %v2812 = vld [vmem:[%s1105 + $0x14] sm:$0xf]
      %v2813 = vld [vmem:[%s1105 + $0x18] sm:$0xf]
      %v2814 = vld [vmem:[%s1105 + $0x1c] sm:$0xf]
      %v2815 = vld [vmem:[%s1109] sm:$0x1]
      %v2817 = vlaneseq
      %v2818 = vshrl.u32 %v2817, 7
      %v2819 = vsub.s32 0, %v2818
      %v2820 = vrot.slane %v2815, %v2819
      %v2830 = vunpack.c.l.b16 %v2807
      %v2831 = vunpack.c.l.b16 %v2808
      %v2832 = vunpack.c.l.b16 %v2809
      %v2833 = vunpack.c.l.b16 %v2810
      %v2834 = vunpack.c.l.b16 %v2811
      %v2835 = vunpack.c.l.b16 %v2812
      %v2836 = vunpack.c.l.b16 %v2813
      %v2837 = vunpack.c.l.b16 %v2814
      %v2838 = vpack.c.b16 %v2831, %v2830
      %v2839 = vpack.c.b16 %v2833, %v2832
      %v2840 = vpack.c.b16 %v2835, %v2834
      %v2841 = vpack.c.b16 %v2837, %v2836
      %v2847 = vsel %vm1640, %v2803, 0
      %v2850 = vsel %vm1640, %v2804, 0
      %v2853 = vsel %vm1640, %v2805, 0
      %v2856 = vsel %vm1640, %v2806, 0
      %2858 = vmatprep.subr.bf16.mxu0 0
      %2859 = vmatpush1.bf16.msra.mxu0 %v2838
      %2860 = vmatprep.subr.bf16.mxu0 0
      %2861 = vmatpush1.bf16.msra.mxu0 %v2839
      %2862 = vmatprep.subr.bf16.mxu0 0
      %2863 = vmatpush1.bf16.msra.mxu0 %v2840
      %2864 = vmatprep.subr.bf16.mxu0 0
      %2865 = vmatpush1.bf16.msra.mxu0 %v2841
      %2866 = vmatprep.subr.bf16.mxu0 0
      %2867 = vmatpush1.bf16.msra.mxu0 0
      %2868 = vmatprep.subr.bf16.mxu0 0
      %2869 = vmatpush1.bf16.msra.mxu0 0
      %2870 = vmatprep.subr.bf16.mxu0 0
      %2871 = vmatpush1.bf16.msra.mxu0 0
      %2872 = vmatprep.subr.bf16.mxu0 0
      %2873 = vmatpush1.bf16.msra.mxu0 0
      %2874 = vmatprep.subr.bf16.mxu0 0
      %2875 = vmatpush1.bf16.msra.mxu0 0
      %2876 = vmatprep.subr.bf16.mxu0 0
      %2877 = vmatpush1.bf16.msra.mxu0 0
      %2878 = vmatprep.subr.bf16.mxu0 0
      %2879 = vmatpush1.bf16.msra.mxu0 0
      %2880 = vmatprep.subr.bf16.mxu0 0
      %2881 = vmatpush1.bf16.msra.mxu0 0
      %2882 = vmatprep.subr.bf16.mxu0 0
      %2883 = vmatpush1.bf16.msra.mxu0 0
      %2884 = vmatprep.subr.bf16.mxu0 0
      %2885 = vmatpush1.bf16.msra.mxu0 0
      %2886 = vmatprep.subr.bf16.mxu0 0
      %2887 = vmatpush1.bf16.msra.mxu0 0
      %2888 = vmatprep.subr.bf16.mxu0 0
      %2889 = vmatpush1.bf16.msra.mxu0 0
      %2890 = vmatprep.mubr.bf16.mxu0 0
      %2891 = vmatmul.mubr.bf16.gmra.mrb[0].mxu0 %v2847
      %v2892 = vpop.f32.mrb[0].mxu0
      %v2893 = vadd.f32 %v2820, %v2892
      %v2894 = vpop.f32.mrb[0].mxu0
      %v2895 = vpop.f32.mrb[0].mxu0
      %v2896 = vadd.f32 %v2820, %v2895
      %v2897 = vpop.f32.mrb[0].mxu0
      %2898 = vmatprep.mubr.bf16.mxu0 0
      %2899 = vmatmul.mubr.bf16.gmra.mrb[0].mxu0 %v2850
      %v2900 = vpop.f32.mrb[0].mxu0
      %v2901 = vadd.f32 %v2820, %v2900
      %v2902 = vpop.f32.mrb[0].mxu0
      %v2903 = vpop.f32.mrb[0].mxu0
      %v2904 = vadd.f32 %v2820, %v2903
      %v2905 = vpop.f32.mrb[0].mxu0
      %2906 = vmatprep.mubr.bf16.mxu0 0
      %2907 = vmatmul.mubr.bf16.gmra.mrb[0].mxu0 %v2853
      %v2908 = vpop.f32.mrb[0].mxu0
      %v2909 = vadd.f32 %v2820, %v2908
      %v2910 = vpop.f32.mrb[0].mxu0
      %v2911 = vpop.f32.mrb[0].mxu0
      %v2912 = vadd.f32 %v2820, %v2911
      %v2913 = vpop.f32.mrb[0].mxu0
      %2914 = vmatprep.mubr.bf16.mxu0 0
      %2915 = vmatmul.mubr.bf16.gmra.mrb[0].mxu0 %v2856
      %v2916 = vpop.f32.mrb[0].mxu0
      %v2917 = vadd.f32 %v2820, %v2916
      %v2918 = vpop.f32.mrb[0].mxu0
      %v2919 = vpop.f32.mrb[0].mxu0
      %v2920 = vadd.f32 %v2820, %v2919
      %v2921 = vpop.f32.mrb[0].mxu0
      %2922 = vdwg.mxu0
      %v2923 = vadd.f32 %v2683, %v2893
      %v2924 = vadd.f32 %v2684, %v2896
      %v2925 = vadd.f32 %v2685, %v2901
      %v2926 = vadd.f32 %v2686, %v2904
      %v2927 = vadd.f32 %v2687, %v2909
      %v2928 = vadd.f32 %v2688, %v2912
      %v2929 = vadd.f32 %v2689, %v2917
      %v2930 = vadd.f32 %v2690, %v2920
      %v2931 = vld [vmem:[%s1113] sm:$0x1]
      %v2932 = vld [vmem:[%s1117] sm:$0x1]
      %v2933 = vsel %vm1288, %v2923, 0.0
      %2934 = vadd.xlane.f32.xlu0 %v2933
      %v2935 = vpop.xlane.xlu0 %2934
      %v2936 = vsel %vm1288, %v2924, 0.0
      %2937 = vadd.xlane.f32.xlu0 %v2936
      %v2938 = vpop.xlane.xlu0 %2937
      %v2939 = vsel %vm1288, %v2925, 0.0
      %2940 = vadd.xlane.f32.xlu0 %v2939
      %v2941 = vpop.xlane.xlu0 %2940
      %v2942 = vsel %vm1288, %v2926, 0.0
      %2943 = vadd.xlane.f32.xlu0 %v2942
      %v2944 = vpop.xlane.xlu0 %2943
      %v2945 = vsel %vm1288, %v2927, 0.0
      %2946 = vadd.xlane.f32.xlu0 %v2945
      %v2947 = vpop.xlane.xlu0 %2946
      %v2948 = vsel %vm1288, %v2928, 0.0
      %2949 = vadd.xlane.f32.xlu0 %v2948
      %v2950 = vpop.xlane.xlu0 %2949
      %v2951 = vsel %vm1288, %v2929, 0.0
      %2952 = vadd.xlane.f32.xlu0 %v2951
      %v2953 = vpop.xlane.xlu0 %2952
      %v2954 = vsel %vm1288, %v2930, 0.0
      %2955 = vadd.xlane.f32.xlu0 %v2954
      %v2956 = vpop.xlane.xlu0 %2955
      %v2957 = vmul.f32 %v2935, %v2582
      %v2958 = vmul.f32 %v2938, %v2582
      %v2959 = vmul.f32 %v2941, %v2582
      %v2960 = vmul.f32 %v2944, %v2582
      %v2961 = vmul.f32 %v2947, %v2582
      %v2962 = vmul.f32 %v2950, %v2582
      %v2963 = vmul.f32 %v2953, %v2582
      %v2964 = vmul.f32 %v2956, %v2582
      %v2965 = vsub.f32 %v2923, %v2957
      %v2966 = vsub.f32 %v2924, %v2958
      %v2967 = vsub.f32 %v2925, %v2959
      %v2968 = vsub.f32 %v2926, %v2960
      %v2969 = vsub.f32 %v2927, %v2961
      %v2970 = vsub.f32 %v2928, %v2962
      %v2971 = vsub.f32 %v2929, %v2963
      %v2972 = vsub.f32 %v2930, %v2964
      %v2973 = vmul.f32 %v2965, %v2965
      %v2974 = vmul.f32 %v2966, %v2966
      %v2975 = vmul.f32 %v2967, %v2967
      %v2976 = vmul.f32 %v2968, %v2968
      %v2977 = vmul.f32 %v2969, %v2969
      %v2978 = vmul.f32 %v2970, %v2970
      %v2979 = vmul.f32 %v2971, %v2971
      %v2980 = vmul.f32 %v2972, %v2972
      %v2981 = vsel %vm1288, %v2973, 0.0
      %2982 = vadd.xlane.f32.xlu0 %v2981
      %v2983 = vpop.xlane.xlu0 %2982
      %v2984 = vsel %vm1288, %v2974, 0.0
      %2985 = vadd.xlane.f32.xlu0 %v2984
      %v2986 = vpop.xlane.xlu0 %2985
      %v2987 = vsel %vm1288, %v2975, 0.0
      %2988 = vadd.xlane.f32.xlu0 %v2987
      %v2989 = vpop.xlane.xlu0 %2988
      %v2990 = vsel %vm1288, %v2976, 0.0
      %2991 = vadd.xlane.f32.xlu0 %v2990
      %v2992 = vpop.xlane.xlu0 %2991
      %v2993 = vsel %vm1288, %v2977, 0.0
      %2994 = vadd.xlane.f32.xlu0 %v2993
      %v2995 = vpop.xlane.xlu0 %2994
      %v2996 = vsel %vm1288, %v2978, 0.0
      %2997 = vadd.xlane.f32.xlu0 %v2996
      %v2998 = vpop.xlane.xlu0 %2997
      %v2999 = vsel %vm1288, %v2979, 0.0
      %3000 = vadd.xlane.f32.xlu0 %v2999
      %v3001 = vpop.xlane.xlu0 %3000
      %v3002 = vsel %vm1288, %v2980, 0.0
      %3003 = vadd.xlane.f32.xlu0 %v3002
      %v3004 = vpop.xlane.xlu0 %3003
      %v3005 = vmul.f32 %v2983, %v2582
      %v3006 = vmul.f32 %v2986, %v2582
      %v3007 = vmul.f32 %v2989, %v2582
      %v3008 = vmul.f32 %v2992, %v2582
      %v3009 = vmul.f32 %v2995, %v2582
      %v3010 = vmul.f32 %v2998, %v2582
      %v3011 = vmul.f32 %v3001, %v2582
      %v3012 = vmul.f32 %v3004, %v2582
      %v3013 = vadd.f32 %v3005, 1e-05
      %v3014 = vadd.f32 %v3006, 1e-05
      %v3015 = vadd.f32 %v3007, 1e-05
      %v3016 = vadd.f32 %v3008, 1e-05
      %v3017 = vadd.f32 %v3009, 1e-05
      %v3018 = vadd.f32 %v3010, 1e-05
      %v3019 = vadd.f32 %v3011, 1e-05
      %v3020 = vadd.f32 %v3012, 1e-05
      %v3021 = vrsqrt.pop %v3013
      %v3022 = vrsqrt.pop %v3014
      %v3023 = vrsqrt.pop %v3015
      %v3024 = vrsqrt.pop %v3016
      %v3025 = vrsqrt.pop %v3017
      %v3026 = vrsqrt.pop %v3018
      %v3027 = vrsqrt.pop %v3019
      %v3028 = vrsqrt.pop %v3020
      %v3029 = vmul.f32 %v2965, %v3021
      %v3030 = vmul.f32 %v2966, %v3022
      %v3031 = vmul.f32 %v2967, %v3023
      %v3032 = vmul.f32 %v2968, %v3024
      %v3033 = vmul.f32 %v2969, %v3025
      %v3034 = vmul.f32 %v2970, %v3026
      %v3035 = vmul.f32 %v2971, %v3027
      %v3036 = vmul.f32 %v2972, %v3028
      %v3038 = vlaneseq
      %v3039 = vshrl.u32 %v3038, 7
      %v3040 = vsub.s32 0, %v3039
      %v3041 = vrot.slane %v2931, %v3040
      %v3043 = vmul.f32 %v3029, %v3041
      %v3044 = vmul.f32 %v3030, %v3041
      %v3045 = vmul.f32 %v3031, %v3041
      %v3046 = vmul.f32 %v3032, %v3041
      %v3047 = vmul.f32 %v3033, %v3041
      %v3048 = vmul.f32 %v3034, %v3041
      %v3049 = vmul.f32 %v3035, %v3041
      %v3050 = vmul.f32 %v3036, %v3041
      %v3052 = vlaneseq
      %v3053 = vshrl.u32 %v3052, 7
      %v3054 = vsub.s32 0, %v3053
      %v3055 = vrot.slane %v2932, %v3054
      %v3057 = vadd.f32 %v3043, %v3055
      %v3058 = vadd.f32 %v3044, %v3055
      %v3059 = vadd.f32 %v3045, %v3055
      %v3060 = vadd.f32 %v3046, %v3055
      %v3061 = vadd.f32 %v3047, %v3055
      %v3062 = vadd.f32 %v3048, %v3055
      %v3063 = vadd.f32 %v3049, %v3055
      %v3064 = vadd.f32 %v3050, %v3055
      %v3065 = vpack.c.bf16 %v3058, %v3057
      %v3066 = vpack.c.bf16 %v3060, %v3059
      %v3067 = vpack.c.bf16 %v3062, %v3061
      %v3068 = vpack.c.bf16 %v3064, %v3063
      %s3069 = scalar_lea.vmem %s1052, 32
      %v3070 = vld [vmem:[%s3069] sm:$0xf]
      %v3071 = vld [vmem:[%s3069 + $0x4] sm:$0xf]
      %v3072 = vld [vmem:[%s3069 + $0x8] sm:$0xf]
      %v3073 = vld [vmem:[%s3069 + $0xc] sm:$0xf]
      %s3074 = scalar_lea.vmem %s1056, 2
      %v3075 = vld [vmem:[%s3074] sm:$0x1]
      %v3077 = vlaneseq
      %v3078 = vshrl.u32 %v3077, 7
      %v3079 = vsub.s32 0, %v3078
      %v3080 = vrot.slane %v3075, %v3079
      %v3086 = vunpack.c.l.b16 %v3070
      %v3087 = vunpack.c.l.b16 %v3071
      %v3088 = vunpack.c.l.b16 %v3072
      %v3089 = vunpack.c.l.b16 %v3073
      %v3090 = vpack.c.b16 %v3087, %v3086
      %v3091 = vpack.c.b16 %v3089, %v3088
      %v3095 = vsel %vm1288, %v3065, 0
      %v3098 = vsel %vm1288, %v3066, 0
      %v3101 = vsel %vm1288, %v3067, 0
      %v3104 = vsel %vm1288, %v3068, 0
      %3106 = vmatprep.subr.bf16.mxu0 0
      %3107 = vmatpush1.bf16.msra.mxu0 %v3090
      %3108 = vmatprep.subr.bf16.mxu0 0
      %3109 = vmatpush1.bf16.msra.mxu0 %v3091
      %3110 = vmatprep.subr.bf16.mxu0 0
      %3111 = vmatpush1.bf16.msra.mxu0 0
      %3112 = vmatprep.subr.bf16.mxu0 0
      %3113 = vmatpush1.bf16.msra.mxu0 0
      %3114 = vmatprep.subr.bf16.mxu0 0
      %3115 = vmatpush1.bf16.msra.mxu0 0
      %3116 = vmatprep.subr.bf16.mxu0 0
      %3117 = vmatpush1.bf16.msra.mxu0 0
      %3118 = vmatprep.subr.bf16.mxu0 0
      %3119 = vmatpush1.bf16.msra.mxu0 0
      %3120 = vmatprep.subr.bf16.mxu0 0
      %3121 = vmatpush1.bf16.msra.mxu0 0
      %3122 = vmatprep.subr.bf16.mxu0 0
      %3123 = vmatpush1.bf16.msra.mxu0 0
      %3124 = vmatprep.subr.bf16.mxu0 0
      %3125 = vmatpush1.bf16.msra.mxu0 0
      %3126 = vmatprep.subr.bf16.mxu0 0
      %3127 = vmatpush1.bf16.msra.mxu0 0
      %3128 = vmatprep.subr.bf16.mxu0 0
      %3129 = vmatpush1.bf16.msra.mxu0 0
      %3130 = vmatprep.subr.bf16.mxu0 0
      %3131 = vmatpush1.bf16.msra.mxu0 0
      %3132 = vmatprep.subr.bf16.mxu0 0
      %3133 = vmatpush1.bf16.msra.mxu0 0
      %3134 = vmatprep.subr.bf16.mxu0 0
      %3135 = vmatpush1.bf16.msra.mxu0 0
      %3136 = vmatprep.subr.bf16.mxu0 0
      %3137 = vmatpush1.bf16.msra.mxu0 0
      %3138 = vmatprep.mubr.bf16.mxu0 0
      %3139 = vmatmul.mubr.bf16.gmra.mrb[0].mxu0 %v3095
      %v3140 = vpop.f32.mrb[0].mxu0
      %v3141 = vadd.f32 %v3080, %v3140
      %v3142 = vpop.f32.mrb[0].mxu0
      %v3143 = vpop.f32.mrb[0].mxu0
      %v3144 = vadd.f32 %v3080, %v3143
      %v3145 = vpop.f32.mrb[0].mxu0
      %3146 = vmatprep.mubr.bf16.mxu0 0
      %3147 = vmatmul.mubr.bf16.gmra.mrb[0].mxu0 %v3098
      %v3148 = vpop.f32.mrb[0].mxu0
      %v3149 = vadd.f32 %v3080, %v3148
      %v3150 = vpop.f32.mrb[0].mxu0
      %v3151 = vpop.f32.mrb[0].mxu0
      %v3152 = vadd.f32 %v3080, %v3151
      %v3153 = vpop.f32.mrb[0].mxu0
      %3154 = vmatprep.mubr.bf16.mxu0 0
      %3155 = vmatmul.mubr.bf16.gmra.mrb[0].mxu0 %v3101
      %v3156 = vpop.f32.mrb[0].mxu0
      %v3157 = vadd.f32 %v3080, %v3156
      %v3158 = vpop.f32.mrb[0].mxu0
      %v3159 = vpop.f32.mrb[0].mxu0
      %v3160 = vadd.f32 %v3080, %v3159
      %v3161 = vpop.f32.mrb[0].mxu0
      %3162 = vmatprep.mubr.bf16.mxu0 0
      %3163 = vmatmul.mubr.bf16.gmra.mrb[0].mxu0 %v3104
      %v3164 = vpop.f32.mrb[0].mxu0
      %v3165 = vadd.f32 %v3080, %v3164
      %v3166 = vpop.f32.mrb[0].mxu0
      %v3167 = vpop.f32.mrb[0].mxu0
      %v3168 = vadd.f32 %v3080, %v3167
      %v3169 = vpop.f32.mrb[0].mxu0
      %3170 = vdwg.mxu0
      %s3171 = scalar_lea.vmem %s1061, 32
      %v3172 = vld [vmem:[%s3171] sm:$0xf]
      %v3173 = vld [vmem:[%s3171 + $0x4] sm:$0xf]
      %v3174 = vld [vmem:[%s3171 + $0x8] sm:$0xf]
      %v3175 = vld [vmem:[%s3171 + $0xc] sm:$0xf]
      %s3176 = scalar_lea.vmem %s1065, 2
      %v3177 = vld [vmem:[%s3176] sm:$0x1]
      %v3179 = vlaneseq
      %v3180 = vshrl.u32 %v3179, 7
      %v3181 = vsub.s32 0, %v3180
      %v3182 = vrot.slane %v3177, %v3181
      %v3188 = vunpack.c.l.b16 %v3172
      %v3189 = vunpack.c.l.b16 %v3173
      %v3190 = vunpack.c.l.b16 %v3174
      %v3191 = vunpack.c.l.b16 %v3175
      %v3192 = vpack.c.b16 %v3189, %v3188
      %v3193 = vpack.c.b16 %v3191, %v3190
      %3196 = vmatprep.subr.bf16.mxu0 0
      %3197 = vmatpush1.bf16.msra.mxu0 %v3192
      %3198 = vmatprep.subr.bf16.mxu0 0
      %3199 = vmatpush1.bf16.msra.mxu0 %v3193
      %3200 = vmatprep.subr.bf16.mxu0 0
      %3201 = vmatpush1.bf16.msra.mxu0 0
      %3202 = vmatprep.subr.bf16.mxu0 0
      %3203 = vmatpush1.bf16.msra.mxu0 0
      %3204 = vmatprep.subr.bf16.mxu0 0
      %3205 = vmatpush1.bf16.msra.mxu0 0
      %3206 = vmatprep.subr.bf16.mxu0 0
      %3207 = vmatpush1.bf16.msra.mxu0 0
      %3208 = vmatprep.subr.bf16.mxu0 0
      %3209 = vmatpush1.bf16.msra.mxu0 0
      %3210 = vmatprep.subr.bf16.mxu0 0
      %3211 = vmatpush1.bf16.msra.mxu0 0
      %3212 = vmatprep.subr.bf16.mxu0 0
      %3213 = vmatpush1.bf16.msra.mxu0 0
      %3214 = vmatprep.subr.bf16.mxu0 0
      %3215 = vmatpush1.bf16.msra.mxu0 0
      %3216 = vmatprep.subr.bf16.mxu0 0
      %3217 = vmatpush1.bf16.msra.mxu0 0
      %3218 = vmatprep.subr.bf16.mxu0 0
      %3219 = vmatpush1.bf16.msra.mxu0 0
      %3220 = vmatprep.subr.bf16.mxu0 0
      %3221 = vmatpush1.bf16.msra.mxu0 0
      %3222 = vmatprep.subr.bf16.mxu0 0
      %3223 = vmatpush1.bf16.msra.mxu0 0
      %3224 = vmatprep.subr.bf16.mxu0 0
      %3225 = vmatpush1.bf16.msra.mxu0 0
      %3226 = vmatprep.subr.bf16.mxu0 0
      %3227 = vmatpush1.bf16.msra.mxu0 0
      %3228 = vmatprep.mubr.bf16.mxu0 0
      %3229 = vmatmul.mubr.bf16.gmra.mrb[0].mxu0 %v3095
      %v3230 = vpop.f32.mrb[0].mxu0
      %v3231 = vadd.f32 %v3182, %v3230
      %v3232 = vpop.f32.mrb[0].mxu0
      %v3233 = vpop.f32.mrb[0].mxu0
      %v3234 = vadd.f32 %v3182, %v3233
      %v3235 = vpop.f32.mrb[0].mxu0
      %3236 = vmatprep.mubr.bf16.mxu0 0
      %3237 = vmatmul.mubr.bf16.gmra.mrb[0].mxu0 %v3098
      %v3238 = vpop.f32.mrb[0].mxu0
      %v3239 = vadd.f32 %v3182, %v3238
      %v3240 = vpop.f32.mrb[0].mxu0
      %v3241 = vpop.f32.mrb[0].mxu0
      %v3242 = vadd.f32 %v3182, %v3241
      %v3243 = vpop.f32.mrb[0].mxu0
      %3244 = vmatprep.mubr.bf16.mxu0 0
      %3245 = vmatmul.mubr.bf16.gmra.mrb[0].mxu0 %v3101
      %v3246 = vpop.f32.mrb[0].mxu0
      %v3247 = vadd.f32 %v3182, %v3246
      %v3248 = vpop.f32.mrb[0].mxu0
      %v3249 = vpop.f32.mrb[0].mxu0
      %v3250 = vadd.f32 %v3182, %v3249
      %v3251 = vpop.f32.mrb[0].mxu0
      %3252 = vmatprep.mubr.bf16.mxu0 0
      %3253 = vmatmul.mubr.bf16.gmra.mrb[0].mxu0 %v3104
      %v3254 = vpop.f32.mrb[0].mxu0
      %v3255 = vadd.f32 %v3182, %v3254
      %v3256 = vpop.f32.mrb[0].mxu0
      %v3257 = vpop.f32.mrb[0].mxu0
      %v3258 = vadd.f32 %v3182, %v3257
      %v3259 = vpop.f32.mrb[0].mxu0
      %3260 = vdwg.mxu0
      %s3261 = scalar_lea.vmem %s1070, 32
      %v3262 = vld [vmem:[%s3261] sm:$0xf]
      %v3263 = vld [vmem:[%s3261 + $0x4] sm:$0xf]
      %v3264 = vld [vmem:[%s3261 + $0x8] sm:$0xf]
      %v3265 = vld [vmem:[%s3261 + $0xc] sm:$0xf]
      %s3266 = scalar_lea.vmem %s1074, 2
      %v3267 = vld [vmem:[%s3266] sm:$0x1]
      %v3269 = vlaneseq
      %v3270 = vshrl.u32 %v3269, 7
      %v3271 = vsub.s32 0, %v3270
      %v3272 = vrot.slane %v3267, %v3271
      %v3278 = vunpack.c.l.b16 %v3262
      %v3279 = vunpack.c.l.b16 %v3263
      %v3280 = vunpack.c.l.b16 %v3264
      %v3281 = vunpack.c.l.b16 %v3265
      %v3282 = vpack.c.b16 %v3279, %v3278
      %v3283 = vpack.c.b16 %v3281, %v3280
      %3286 = vmatprep.subr.bf16.mxu0 0
      %3287 = vmatpush1.bf16.msra.mxu0 %v3282
      %3288 = vmatprep.subr.bf16.mxu0 0
      %3289 = vmatpush1.bf16.msra.mxu0 %v3283
      %3290 = vmatprep.subr.bf16.mxu0 0
      %3291 = vmatpush1.bf16.msra.mxu0 0
      %3292 = vmatprep.subr.bf16.mxu0 0
      %3293 = vmatpush1.bf16.msra.mxu0 0
      %3294 = vmatprep.subr.bf16.mxu0 0
      %3295 = vmatpush1.bf16.msra.mxu0 0
      %3296 = vmatprep.subr.bf16.mxu0 0
      %3297 = vmatpush1.bf16.msra.mxu0 0
      %3298 = vmatprep.subr.bf16.mxu0 0
      %3299 = vmatpush1.bf16.msra.mxu0 0
      %3300 = vmatprep.subr.bf16.mxu0 0
      %3301 = vmatpush1.bf16.msra.mxu0 0
      %3302 = vmatprep.subr.bf16.mxu0 0
      %3303 = vmatpush1.bf16.msra.mxu0 0
      %3304 = vmatprep.subr.bf16.mxu0 0
      %3305 = vmatpush1.bf16.msra.mxu0 0
      %3306 = vmatprep.subr.bf16.mxu0 0
      %3307 = vmatpush1.bf16.msra.mxu0 0
      %3308 = vmatprep.subr.bf16.mxu0 0
      %3309 = vmatpush1.bf16.msra.mxu0 0
      %3310 = vmatprep.subr.bf16.mxu0 0
      %3311 = vmatpush1.bf16.msra.mxu0 0
      %3312 = vmatprep.subr.bf16.mxu0 0
      %3313 = vmatpush1.bf16.msra.mxu0 0
      %3314 = vmatprep.subr.bf16.mxu0 0
      %3315 = vmatpush1.bf16.msra.mxu0 0
      %3316 = vmatprep.subr.bf16.mxu0 0
      %3317 = vmatpush1.bf16.msra.mxu0 0
      %3318 = vmatprep.mubr.bf16.mxu0 0
      %3319 = vmatmul.mubr.bf16.gmra.mrb[0].mxu0 %v3095
      %v3320 = vpop.f32.mrb[0].mxu0
      %v3321 = vadd.f32 %v3272, %v3320
      %v3322 = vpop.f32.mrb[0].mxu0
      %v3323 = vpop.f32.mrb[0].mxu0
      %v3324 = vadd.f32 %v3272, %v3323
      %v3325 = vpop.f32.mrb[0].mxu0
      %3326 = vmatprep.mubr.bf16.mxu0 0
      %3327 = vmatmul.mubr.bf16.gmra.mrb[0].mxu0 %v3098
      %v3328 = vpop.f32.mrb[0].mxu0
      %v3329 = vadd.f32 %v3272, %v3328
      %v3330 = vpop.f32.mrb[0].mxu0
      %v3331 = vpop.f32.mrb[0].mxu0
      %v3332 = vadd.f32 %v3272, %v3331
      %v3333 = vpop.f32.mrb[0].mxu0
      %3334 = vmatprep.mubr.bf16.mxu0 0
      %3335 = vmatmul.mubr.bf16.gmra.mrb[0].mxu0 %v3101
      %v3336 = vpop.f32.mrb[0].mxu0
      %v3337 = vadd.f32 %v3272, %v3336
      %v3338 = vpop.f32.mrb[0].mxu0
      %v3339 = vpop.f32.mrb[0].mxu0
      %v3340 = vadd.f32 %v3272, %v3339
      %v3341 = vpop.f32.mrb[0].mxu0
      %3342 = vmatprep.mubr.bf16.mxu0 0
      %3343 = vmatmul.mubr.bf16.gmra.mrb[0].mxu0 %v3104
      %v3344 = vpop.f32.mrb[0].mxu0
      %v3345 = vadd.f32 %v3272, %v3344
      %v3346 = vpop.f32.mrb[0].mxu0
      %v3347 = vpop.f32.mrb[0].mxu0
      %v3348 = vadd.f32 %v3272, %v3347
      %v3349 = vpop.f32.mrb[0].mxu0
      %3350 = vdwg.mxu0
      %v3351 = vpack.c.bf16 %v3144, %v3141
      %v3352 = vpack.c.bf16 %v3152, %v3149
      %v3353 = vpack.c.bf16 %v3160, %v3157
      %v3354 = vpack.c.bf16 %v3168, %v3165
      %v3355 = vpack.c.bf16 %v3234, %v3231
      %v3356 = vpack.c.bf16 %v3242, %v3239
      %v3357 = vpack.c.bf16 %v3250, %v3247
      %v3358 = vpack.c.bf16 %v3258, %v3255
      %v3360 = vsel %vm1550, %v3351, 0
      %v3363 = vsel %vm1550, %v3352, 0
      %v3366 = vsel %vm1550, %v3353, 0
      %v3369 = vsel %vm1550, %v3354, 0
      %v3372 = vsel %vm1550, %v3355, 0
      %v3375 = vsel %vm1550, %v3356, 0
      %v3378 = vsel %vm1550, %v3357, 0
      %v3381 = vsel %vm1550, %v3358, 0
      %3383 = vmatprep.subr.bf16.mxu0 0
      %3384 = vmatpush1.bf16.xpose.msra.mxu0 %v3372
      %3385 = vmatprep.subr.bf16.mxu0 0
      %3386 = vmatpush1.bf16.xpose.msra.mxu0 %v3375
      %3387 = vmatprep.subr.bf16.mxu0 0
      %3388 = vmatpush1.bf16.xpose.msra.mxu0 %v3378
      %3389 = vmatprep.subr.bf16.mxu0 0
      %3390 = vmatpush1.bf16.xpose.msra.mxu0 %v3381
      %3391 = vmatprep.subr.bf16.mxu0 0
      %3392 = vmatpush1.bf16.xpose.msra.mxu0 0
      %3393 = vmatprep.subr.bf16.mxu0 0
      %3394 = vmatpush1.bf16.xpose.msra.mxu0 0
      %3395 = vmatprep.subr.bf16.mxu0 0
      %3396 = vmatpush1.bf16.xpose.msra.mxu0 0
      %3397 = vmatprep.subr.bf16.mxu0 0
      %3398 = vmatpush1.bf16.xpose.msra.mxu0 0
      %3399 = vmatprep.subr.bf16.mxu0 0
      %3400 = vmatpush1.bf16.xpose.msra.mxu0 0
      %3401 = vmatprep.subr.bf16.mxu0 0
      %3402 = vmatpush1.bf16.xpose.msra.mxu0 0
      %3403 = vmatprep.subr.bf16.mxu0 0
      %3404 = vmatpush1.bf16.xpose.msra.mxu0 0
      %3405 = vmatprep.subr.bf16.mxu0 0
      %3406 = vmatpush1.bf16.xpose.msra.mxu0 0
      %3407 = vmatprep.subr.bf16.mxu0 0
      %3408 = vmatpush1.bf16.xpose.msra.mxu0 0
      %3409 = vmatprep.subr.bf16.mxu0 0
      %3410 = vmatpush1.bf16.xpose.msra.mxu0 0
      %3411 = vmatprep.subr.bf16.mxu0 0
      %3412 = vmatpush1.bf16.xpose.msra.mxu0 0
      %3413 = vmatprep.subr.bf16.mxu0 0
      %3414 = vmatpush1.bf16.xpose.msra.mxu0 0
      %3415 = vmatprep.mubr.bf16.mxu0 0
      %3416 = vmatmul.mubr.bf16.gmra.mrb[0].mxu0 %v3360
      %v3417 = vpop.f32.mrb[0].mxu0
      %v3418 = vadd.f32 %v1146, %v3417
      %v3419 = vpop.f32.mrb[0].mxu0
      %v3420 = vpop.f32.mrb[0].mxu0
      %v3421 = vadd.f32 %v1147, %v3420
      %v3422 = vpop.f32.mrb[0].mxu0
      %3423 = vmatprep.mubr.bf16.mxu0 0
      %3424 = vmatmul.mubr.bf16.gmra.mrb[0].mxu0 %v3363
      %v3425 = vpop.f32.mrb[0].mxu0
      %v3426 = vadd.f32 %v1148, %v3425
      %v3427 = vpop.f32.mrb[0].mxu0
      %v3428 = vpop.f32.mrb[0].mxu0
      %v3429 = vadd.f32 %v1149, %v3428
      %v3430 = vpop.f32.mrb[0].mxu0
      %3431 = vmatprep.mubr.bf16.mxu0 0
      %3432 = vmatmul.mubr.bf16.gmra.mrb[0].mxu0 %v3366
      %v3433 = vpop.f32.mrb[0].mxu0
      %v3434 = vadd.f32 %v1150, %v3433
      %v3435 = vpop.f32.mrb[0].mxu0
      %v3436 = vpop.f32.mrb[0].mxu0
      %v3437 = vadd.f32 %v1151, %v3436
      %v3438 = vpop.f32.mrb[0].mxu0
      %3439 = vmatprep.mubr.bf16.mxu0 0
      %3440 = vmatmul.mubr.bf16.gmra.mrb[0].mxu0 %v3369
      %v3441 = vpop.f32.mrb[0].mxu0
      %v3442 = vadd.f32 %v1152, %v3441
      %v3443 = vpop.f32.mrb[0].mxu0
      %v3444 = vpop.f32.mrb[0].mxu0
      %v3445 = vadd.f32 %v1153, %v3444
      %v3446 = vpop.f32.mrb[0].mxu0
      %3447 = vdwg.mxu0
      %v3448 = vsel %vm1640, %v3418, -inf
      %3449 = vmax.xlane.f32.xlu0 %v3448
      %v3450 = vpop.xlane.xlu0 %3449
      %v3451 = vsel %vm1640, %v3421, -inf
      %3452 = vmax.xlane.f32.xlu0 %v3451
      %v3453 = vpop.xlane.xlu0 %3452
      %v3454 = vsel %vm1640, %v3426, -inf
      %3455 = vmax.xlane.f32.xlu0 %v3454
      %v3456 = vpop.xlane.xlu0 %3455
      %v3457 = vsel %vm1640, %v3429, -inf
      %3458 = vmax.xlane.f32.xlu0 %v3457
      %v3459 = vpop.xlane.xlu0 %3458
      %v3460 = vsel %vm1640, %v3434, -inf
      %3461 = vmax.xlane.f32.xlu0 %v3460
      %v3462 = vpop.xlane.xlu0 %3461
      %v3463 = vsel %vm1640, %v3437, -inf
      %3464 = vmax.xlane.f32.xlu0 %v3463
      %v3465 = vpop.xlane.xlu0 %3464
      %v3466 = vsel %vm1640, %v3442, -inf
      %3467 = vmax.xlane.f32.xlu0 %v3466
      %v3468 = vpop.xlane.xlu0 %3467
      %v3469 = vsel %vm1640, %v3445, -inf
      %3470 = vmax.xlane.f32.xlu0 %v3469
      %v3471 = vpop.xlane.xlu0 %3470
      %v3472 = vsub.f32 %v3418, %v3450
      %v3473 = vsub.f32 %v3421, %v3453
      %v3474 = vsub.f32 %v3426, %v3456
      %v3475 = vsub.f32 %v3429, %v3459
      %v3476 = vsub.f32 %v3434, %v3462
      %v3477 = vsub.f32 %v3437, %v3465
      %v3478 = vsub.f32 %v3442, %v3468
      %v3479 = vsub.f32 %v3445, %v3471
      %v3480 = vmul.f32 %v3472, 1.442695
      %v3481 = vpow.pop %v3480
      %v3482 = vmul.f32 %v3473, 1.442695
      %v3483 = vpow.pop %v3482
      %v3484 = vmul.f32 %v3474, 1.442695
      %v3485 = vpow.pop %v3484
      %v3486 = vmul.f32 %v3475, 1.442695
      %v3487 = vpow.pop %v3486
      %v3488 = vmul.f32 %v3476, 1.442695
      %v3489 = vpow.pop %v3488
      %v3490 = vmul.f32 %v3477, 1.442695
      %v3491 = vpow.pop %v3490
      %v3492 = vmul.f32 %v3478, 1.442695
      %v3493 = vpow.pop %v3492
      %v3494 = vmul.f32 %v3479, 1.442695
      %v3495 = vpow.pop %v3494
      %v3496 = vsel %vm1640, %v3481, 0.0
      %3497 = vadd.xlane.f32.xlu0 %v3496
      %v3498 = vpop.xlane.xlu0 %3497
      %v3499 = vsel %vm1640, %v3483, 0.0
      %3500 = vadd.xlane.f32.xlu0 %v3499
      %v3501 = vpop.xlane.xlu0 %3500
      %v3502 = vsel %vm1640, %v3485, 0.0
      %3503 = vadd.xlane.f32.xlu0 %v3502
      %v3504 = vpop.xlane.xlu0 %3503
      %v3505 = vsel %vm1640, %v3487, 0.0
      %3506 = vadd.xlane.f32.xlu0 %v3505
      %v3507 = vpop.xlane.xlu0 %3506
      %v3508 = vsel %vm1640, %v3489, 0.0
      %3509 = vadd.xlane.f32.xlu0 %v3508
      %v3510 = vpop.xlane.xlu0 %3509
      %v3511 = vsel %vm1640, %v3491, 0.0
      %3512 = vadd.xlane.f32.xlu0 %v3511
      %v3513 = vpop.xlane.xlu0 %3512
      %v3514 = vsel %vm1640, %v3493, 0.0
      %3515 = vadd.xlane.f32.xlu0 %v3514
      %v3516 = vpop.xlane.xlu0 %3515
      %v3517 = vsel %vm1640, %v3495, 0.0
      %3518 = vadd.xlane.f32.xlu0 %v3517
      %v3519 = vpop.xlane.xlu0 %3518
      %v3520 = vrcp.pop %v3498
      %v3521 = vrcp.pop %v3501
      %v3522 = vrcp.pop %v3504
      %v3523 = vrcp.pop %v3507
      %v3524 = vrcp.pop %v3510
      %v3525 = vrcp.pop %v3513
      %v3526 = vrcp.pop %v3516
      %v3527 = vrcp.pop %v3519
      %v3528 = vmul.f32 %v3481, %v3520
      %v3529 = vmul.f32 %v3483, %v3521
      %v3530 = vmul.f32 %v3485, %v3522
      %v3531 = vmul.f32 %v3487, %v3523
      %v3532 = vmul.f32 %v3489, %v3524
      %v3533 = vmul.f32 %v3491, %v3525
      %v3534 = vmul.f32 %v3493, %v3526
      %v3535 = vmul.f32 %v3495, %v3527
      %v3536 = vpack.c.bf16 %v3529, %v3528
      %v3537 = vpack.c.bf16 %v3531, %v3530
      %v3538 = vpack.c.bf16 %v3533, %v3532
      %v3539 = vpack.c.bf16 %v3535, %v3534
      %v3540 = vpack.c.bf16 %v3324, %v3321
      %v3541 = vpack.c.bf16 %v3332, %v3329
      %v3542 = vpack.c.bf16 %v3340, %v3337
      %v3543 = vpack.c.bf16 %v3348, %v3345
      %v3545 = vsel %vm1640, %v3536, 0
      %v3548 = vsel %vm1640, %v3537, 0
      %v3551 = vsel %vm1640, %v3538, 0
      %v3554 = vsel %vm1640, %v3539, 0
      %3556 = vmatprep.subr.bf16.mxu0 0
      %3557 = vmatpush1.bf16.msra.mxu0 %v3540
      %3558 = vmatprep.subr.bf16.mxu0 0
      %3559 = vmatpush1.bf16.msra.mxu0 %v3541
      %3560 = vmatprep.subr.bf16.mxu0 0
      %3561 = vmatpush1.bf16.msra.mxu0 %v3542
      %3562 = vmatprep.subr.bf16.mxu0 0
      %3563 = vmatpush1.bf16.msra.mxu0 %v3543
      %3564 = vmatprep.subr.bf16.mxu0 0
      %3565 = vmatpush1.bf16.msra.mxu0 0
      %3566 = vmatprep.subr.bf16.mxu0 0
      %3567 = vmatpush1.bf16.msra.mxu0 0
      %3568 = vmatprep.subr.bf16.mxu0 0
      %3569 = vmatpush1.bf16.msra.mxu0 0
      %3570 = vmatprep.subr.bf16.mxu0 0
      %3571 = vmatpush1.bf16.msra.mxu0 0
      %3572 = vmatprep.subr.bf16.mxu0 0
      %3573 = vmatpush1.bf16.msra.mxu0 0
      %3574 = vmatprep.subr.bf16.mxu0 0
      %3575 = vmatpush1.bf16.msra.mxu0 0
      %3576 = vmatprep.subr.bf16.mxu0 0
      %3577 = vmatpush1.bf16.msra.mxu0 0
      %3578 = vmatprep.subr.bf16.mxu0 0
      %3579 = vmatpush1.bf16.msra.mxu0 0
      %3580 = vmatprep.subr.bf16.mxu0 0
      %3581 = vmatpush1.bf16.msra.mxu0 0
      %3582 = vmatprep.subr.bf16.mxu0 0
      %3583 = vmatpush1.bf16.msra.mxu0 0
      %3584 = vmatprep.subr.bf16.mxu0 0
      %3585 = vmatpush1.bf16.msra.mxu0 0
      %3586 = vmatprep.subr.bf16.mxu0 0
      %3587 = vmatpush1.bf16.msra.mxu0 0
      %3588 = vmatprep.mubr.bf16.mxu0 0
      %3589 = vmatmul.mubr.bf16.gmra.mrb[0].mxu0 %v3545
      %v3590 = vpop.f32.mrb[0].mxu0
      %v3591 = vadd.f32 0.0, %v3590
      %v3592 = vpop.f32.mrb[0].mxu0
      %v3593 = vpop.f32.mrb[0].mxu0
      %v3594 = vadd.f32 0.0, %v3593
      %v3595 = vpop.f32.mrb[0].mxu0
      %3596 = vmatprep.mubr.bf16.mxu0 0
      %3597 = vmatmul.mubr.bf16.gmra.mrb[0].mxu0 %v3548
      %v3598 = vpop.f32.mrb[0].mxu0
      %v3599 = vadd.f32 0.0, %v3598
      %v3600 = vpop.f32.mrb[0].mxu0
      %v3601 = vpop.f32.mrb[0].mxu0
      %v3602 = vadd.f32 0.0, %v3601
      %v3603 = vpop.f32.mrb[0].mxu0
      %3604 = vmatprep.mubr.bf16.mxu0 0
      %3605 = vmatmul.mubr.bf16.gmra.mrb[0].mxu0 %v3551
      %v3606 = vpop.f32.mrb[0].mxu0
      %v3607 = vadd.f32 0.0, %v3606
      %v3608 = vpop.f32.mrb[0].mxu0
      %v3609 = vpop.f32.mrb[0].mxu0
      %v3610 = vadd.f32 0.0, %v3609
      %v3611 = vpop.f32.mrb[0].mxu0
      %3612 = vmatprep.mubr.bf16.mxu0 0
      %3613 = vmatmul.mubr.bf16.gmra.mrb[0].mxu0 %v3554
      %v3614 = vpop.f32.mrb[0].mxu0
      %v3615 = vadd.f32 0.0, %v3614
      %v3616 = vpop.f32.mrb[0].mxu0
      %v3617 = vpop.f32.mrb[0].mxu0
      %v3618 = vadd.f32 0.0, %v3617
      %v3619 = vpop.f32.mrb[0].mxu0
      %3620 = vdwg.mxu0
      %v3621 = vpack.c.bf16 %v3594, %v3591
      %v3622 = vpack.c.bf16 %v3602, %v3599
      %v3623 = vpack.c.bf16 %v3610, %v3607
      %v3624 = vpack.c.bf16 %v3618, %v3615
      %s3625 = scalar_lea.vmem %s1079, 16
      %v3626 = vld [vmem:[%s3625] sm:$0xf]
      %v3627 = vld [vmem:[%s3625 + $0x4] sm:$0xf]
      %s3628 = scalar_lea.vmem %s1052, 48
      %v3629 = vld [vmem:[%s3628] sm:$0xf]
      %v3630 = vld [vmem:[%s3628 + $0x4] sm:$0xf]
      %v3631 = vld [vmem:[%s3628 + $0x8] sm:$0xf]
      %v3632 = vld [vmem:[%s3628 + $0xc] sm:$0xf]
      %s3633 = scalar_lea.vmem %s1056, 3
      %v3634 = vld [vmem:[%s3633] sm:$0x1]
      %v3636 = vlaneseq
      %v3637 = vshrl.u32 %v3636, 7
      %v3638 = vsub.s32 0, %v3637
      %v3639 = vrot.slane %v3634, %v3638
      %v3645 = vunpack.c.l.b16 %v3629
      %v3646 = vunpack.c.l.b16 %v3630
      %v3647 = vunpack.c.l.b16 %v3631
      %v3648 = vunpack.c.l.b16 %v3632
      %v3649 = vpack.c.b16 %v3646, %v3645
      %v3650 = vpack.c.b16 %v3648, %v3647
      %3653 = vmatprep.subr.bf16.mxu0 0
      %3654 = vmatpush1.bf16.msra.mxu0 %v3649
      %3655 = vmatprep.subr.bf16.mxu0 0
      %3656 = vmatpush1.bf16.msra.mxu0 %v3650
      %3657 = vmatprep.subr.bf16.mxu0 0
      %3658 = vmatpush1.bf16.msra.mxu0 0
      %3659 = vmatprep.subr.bf16.mxu0 0
      %3660 = vmatpush1.bf16.msra.mxu0 0
      %3661 = vmatprep.subr.bf16.mxu0 0
      %3662 = vmatpush1.bf16.msra.mxu0 0
      %3663 = vmatprep.subr.bf16.mxu0 0
      %3664 = vmatpush1.bf16.msra.mxu0 0
      %3665 = vmatprep.subr.bf16.mxu0 0
      %3666 = vmatpush1.bf16.msra.mxu0 0
      %3667 = vmatprep.subr.bf16.mxu0 0
      %3668 = vmatpush1.bf16.msra.mxu0 0
      %3669 = vmatprep.subr.bf16.mxu0 0
      %3670 = vmatpush1.bf16.msra.mxu0 0
      %3671 = vmatprep.subr.bf16.mxu0 0
      %3672 = vmatpush1.bf16.msra.mxu0 0
      %3673 = vmatprep.subr.bf16.mxu0 0
      %3674 = vmatpush1.bf16.msra.mxu0 0
      %3675 = vmatprep.subr.bf16.mxu0 0
      %3676 = vmatpush1.bf16.msra.mxu0 0
      %3677 = vmatprep.subr.bf16.mxu0 0
      %3678 = vmatpush1.bf16.msra.mxu0 0
      %3679 = vmatprep.subr.bf16.mxu0 0
      %3680 = vmatpush1.bf16.msra.mxu0 0
      %3681 = vmatprep.subr.bf16.mxu0 0
      %3682 = vmatpush1.bf16.msra.mxu0 0
      %3683 = vmatprep.subr.bf16.mxu0 0
      %3684 = vmatpush1.bf16.msra.mxu0 0
      %3685 = vmatprep.mubr.bf16.mxu0 0
      %3686 = vmatmul.mubr.bf16.gmra.mrb[0].mxu0 %v3095
      %v3687 = vpop.f32.mrb[0].mxu0
      %v3688 = vadd.f32 %v3639, %v3687
      %v3689 = vpop.f32.mrb[0].mxu0
      %v3690 = vpop.f32.mrb[0].mxu0
      %v3691 = vadd.f32 %v3639, %v3690
      %v3692 = vpop.f32.mrb[0].mxu0
      %3693 = vmatprep.mubr.bf16.mxu0 0
      %3694 = vmatmul.mubr.bf16.gmra.mrb[0].mxu0 %v3098
      %v3695 = vpop.f32.mrb[0].mxu0
      %v3696 = vadd.f32 %v3639, %v3695
      %v3697 = vpop.f32.mrb[0].mxu0
      %v3698 = vpop.f32.mrb[0].mxu0
      %v3699 = vadd.f32 %v3639, %v3698
      %v3700 = vpop.f32.mrb[0].mxu0
      %3701 = vmatprep.mubr.bf16.mxu0 0
      %3702 = vmatmul.mubr.bf16.gmra.mrb[0].mxu0 %v3101
      %v3703 = vpop.f32.mrb[0].mxu0
      %v3704 = vadd.f32 %v3639, %v3703
      %v3705 = vpop.f32.mrb[0].mxu0
      %v3706 = vpop.f32.mrb[0].mxu0
      %v3707 = vadd.f32 %v3639, %v3706
      %v3708 = vpop.f32.mrb[0].mxu0
      %3709 = vmatprep.mubr.bf16.mxu0 0
      %3710 = vmatmul.mubr.bf16.gmra.mrb[0].mxu0 %v3104
      %v3711 = vpop.f32.mrb[0].mxu0
      %v3712 = vadd.f32 %v3639, %v3711
      %v3713 = vpop.f32.mrb[0].mxu0
      %v3714 = vpop.f32.mrb[0].mxu0
      %v3715 = vadd.f32 %v3639, %v3714
      %v3716 = vpop.f32.mrb[0].mxu0
      %3717 = vdwg.mxu0
      %s3718 = scalar_lea.vmem %s1061, 48
      %v3719 = vld [vmem:[%s3718] sm:$0xf]
      %v3720 = vld [vmem:[%s3718 + $0x4] sm:$0xf]
      %v3721 = vld [vmem:[%s3718 + $0x8] sm:$0xf]
      %v3722 = vld [vmem:[%s3718 + $0xc] sm:$0xf]
      %s3723 = scalar_lea.vmem %s1065, 3
      %v3724 = vld [vmem:[%s3723] sm:$0x1]
      %v3726 = vlaneseq
      %v3727 = vshrl.u32 %v3726, 7
      %v3728 = vsub.s32 0, %v3727
      %v3729 = vrot.slane %v3724, %v3728
      %v3735 = vunpack.c.l.b16 %v3719
      %v3736 = vunpack.c.l.b16 %v3720
      %v3737 = vunpack.c.l.b16 %v3721
      %v3738 = vunpack.c.l.b16 %v3722
      %v3739 = vpack.c.b16 %v3736, %v3735
      %v3740 = vpack.c.b16 %v3738, %v3737
      %3743 = vmatprep.subr.bf16.mxu0 0
      %3744 = vmatpush1.bf16.msra.mxu0 %v3739
      %3745 = vmatprep.subr.bf16.mxu0 0
      %3746 = vmatpush1.bf16.msra.mxu0 %v3740
      %3747 = vmatprep.subr.bf16.mxu0 0
      %3748 = vmatpush1.bf16.msra.mxu0 0
      %3749 = vmatprep.subr.bf16.mxu0 0
      %3750 = vmatpush1.bf16.msra.mxu0 0
      %3751 = vmatprep.subr.bf16.mxu0 0
      %3752 = vmatpush1.bf16.msra.mxu0 0
      %3753 = vmatprep.subr.bf16.mxu0 0
      %3754 = vmatpush1.bf16.msra.mxu0 0
      %3755 = vmatprep.subr.bf16.mxu0 0
      %3756 = vmatpush1.bf16.msra.mxu0 0
      %3757 = vmatprep.subr.bf16.mxu0 0
      %3758 = vmatpush1.bf16.msra.mxu0 0
      %3759 = vmatprep.subr.bf16.mxu0 0
      %3760 = vmatpush1.bf16.msra.mxu0 0
      %3761 = vmatprep.subr.bf16.mxu0 0
      %3762 = vmatpush1.bf16.msra.mxu0 0
      %3763 = vmatprep.subr.bf16.mxu0 0
      %3764 = vmatpush1.bf16.msra.mxu0 0
      %3765 = vmatprep.subr.bf16.mxu0 0
      %3766 = vmatpush1.bf16.msra.mxu0 0
      %3767 = vmatprep.subr.bf16.mxu0 0
      %3768 = vmatpush1.bf16.msra.mxu0 0
      %3769 = vmatprep.subr.bf16.mxu0 0
      %3770 = vmatpush1.bf16.msra.mxu0 0
      %3771 = vmatprep.subr.bf16.mxu0 0
      %3772 = vmatpush1.bf16.msra.mxu0 0
      %3773 = vmatprep.subr.bf16.mxu0 0
      %3774 = vmatpush1.bf16.msra.mxu0 0
      %3775 = vmatprep.mubr.bf16.mxu0 0
      %3776 = vmatmul.mubr.bf16.gmra.mrb[0].mxu0 %v3095
      %v3777 = vpop.f32.mrb[0].mxu0
      %v3778 = vadd.f32 %v3729, %v3777
      %v3779 = vpop.f32.mrb[0].mxu0
      %v3780 = vpop.f32.mrb[0].mxu0
      %v3781 = vadd.f32 %v3729, %v3780
      %v3782 = vpop.f32.mrb[0].mxu0
      %3783 = vmatprep.mubr.bf16.mxu0 0
      %3784 = vmatmul.mubr.bf16.gmra.mrb[0].mxu0 %v3098
      %v3785 = vpop.f32.mrb[0].mxu0
      %v3786 = vadd.f32 %v3729, %v3785
      %v3787 = vpop.f32.mrb[0].mxu0
      %v3788 = vpop.f32.mrb[0].mxu0
      %v3789 = vadd.f32 %v3729, %v3788
      %v3790 = vpop.f32.mrb[0].mxu0
      %3791 = vmatprep.mubr.bf16.mxu0 0
      %3792 = vmatmul.mubr.bf16.gmra.mrb[0].mxu0 %v3101
      %v3793 = vpop.f32.mrb[0].mxu0
      %v3794 = vadd.f32 %v3729, %v3793
      %v3795 = vpop.f32.mrb[0].mxu0
      %v3796 = vpop.f32.mrb[0].mxu0
      %v3797 = vadd.f32 %v3729, %v3796
      %v3798 = vpop.f32.mrb[0].mxu0
      %3799 = vmatprep.mubr.bf16.mxu0 0
      %3800 = vmatmul.mubr.bf16.gmra.mrb[0].mxu0 %v3104
      %v3801 = vpop.f32.mrb[0].mxu0
      %v3802 = vadd.f32 %v3729, %v3801
      %v3803 = vpop.f32.mrb[0].mxu0
      %v3804 = vpop.f32.mrb[0].mxu0
      %v3805 = vadd.f32 %v3729, %v3804
      %v3806 = vpop.f32.mrb[0].mxu0
      %3807 = vdwg.mxu0
      %s3808 = scalar_lea.vmem %s1070, 48
      %v3809 = vld [vmem:[%s3808] sm:$0xf]
      %v3810 = vld [vmem:[%s3808 + $0x4] sm:$0xf]
      %v3811 = vld [vmem:[%s3808 + $0x8] sm:$0xf]
      %v3812 = vld [vmem:[%s3808 + $0xc] sm:$0xf]
      %s3813 = scalar_lea.vmem %s1074, 3
      %v3814 = vld [vmem:[%s3813] sm:$0x1]
      %v3816 = vlaneseq
      %v3817 = vshrl.u32 %v3816, 7
      %v3818 = vsub.s32 0, %v3817
      %v3819 = vrot.slane %v3814, %v3818
      %v3825 = vunpack.c.l.b16 %v3809
      %v3826 = vunpack.c.l.b16 %v3810
      %v3827 = vunpack.c.l.b16 %v3811
      %v3828 = vunpack.c.l.b16 %v3812
      %v3829 = vpack.c.b16 %v3826, %v3825
      %v3830 = vpack.c.b16 %v3828, %v3827
      %3833 = vmatprep.subr.bf16.mxu0 0
      %3834 = vmatpush1.bf16.msra.mxu0 %v3829
      %3835 = vmatprep.subr.bf16.mxu0 0
      %3836 = vmatpush1.bf16.msra.mxu0 %v3830
      %3837 = vmatprep.subr.bf16.mxu0 0
      %3838 = vmatpush1.bf16.msra.mxu0 0
      %3839 = vmatprep.subr.bf16.mxu0 0
      %3840 = vmatpush1.bf16.msra.mxu0 0
      %3841 = vmatprep.subr.bf16.mxu0 0
      %3842 = vmatpush1.bf16.msra.mxu0 0
      %3843 = vmatprep.subr.bf16.mxu0 0
      %3844 = vmatpush1.bf16.msra.mxu0 0
      %3845 = vmatprep.subr.bf16.mxu0 0
      %3846 = vmatpush1.bf16.msra.mxu0 0
      %3847 = vmatprep.subr.bf16.mxu0 0
      %3848 = vmatpush1.bf16.msra.mxu0 0
      %3849 = vmatprep.subr.bf16.mxu0 0
      %3850 = vmatpush1.bf16.msra.mxu0 0
      %3851 = vmatprep.subr.bf16.mxu0 0
      %3852 = vmatpush1.bf16.msra.mxu0 0
      %3853 = vmatprep.subr.bf16.mxu0 0
      %3854 = vmatpush1.bf16.msra.mxu0 0
      %3855 = vmatprep.subr.bf16.mxu0 0
      %3856 = vmatpush1.bf16.msra.mxu0 0
      %3857 = vmatprep.subr.bf16.mxu0 0
      %3858 = vmatpush1.bf16.msra.mxu0 0
      %3859 = vmatprep.subr.bf16.mxu0 0
      %3860 = vmatpush1.bf16.msra.mxu0 0
      %3861 = vmatprep.subr.bf16.mxu0 0
      %3862 = vmatpush1.bf16.msra.mxu0 0
      %3863 = vmatprep.subr.bf16.mxu0 0
      %3864 = vmatpush1.bf16.msra.mxu0 0
      %3865 = vmatprep.mubr.bf16.mxu0 0
      %3866 = vmatmul.mubr.bf16.gmra.mrb[0].mxu0 %v3095
      %v3867 = vpop.f32.mrb[0].mxu0
      %v3868 = vadd.f32 %v3819, %v3867
      %v3869 = vpop.f32.mrb[0].mxu0
      %v3870 = vpop.f32.mrb[0].mxu0
      %v3871 = vadd.f32 %v3819, %v3870
      %v3872 = vpop.f32.mrb[0].mxu0
      %3873 = vmatprep.mubr.bf16.mxu0 0
      %3874 = vmatmul.mubr.bf16.gmra.mrb[0].mxu0 %v3098
      %v3875 = vpop.f32.mrb[0].mxu0
      %v3876 = vadd.f32 %v3819, %v3875
      %v3877 = vpop.f32.mrb[0].mxu0
      %v3878 = vpop.f32.mrb[0].mxu0
      %v3879 = vadd.f32 %v3819, %v3878
      %v3880 = vpop.f32.mrb[0].mxu0
      %3881 = vmatprep.mubr.bf16.mxu0 0
      %3882 = vmatmul.mubr.bf16.gmra.mrb[0].mxu0 %v3101
      %v3883 = vpop.f32.mrb[0].mxu0
      %v3884 = vadd.f32 %v3819, %v3883
      %v3885 = vpop.f32.mrb[0].mxu0
      %v3886 = vpop.f32.mrb[0].mxu0
      %v3887 = vadd.f32 %v3819, %v3886
      %v3888 = vpop.f32.mrb[0].mxu0
      %3889 = vmatprep.mubr.bf16.mxu0 0
      %3890 = vmatmul.mubr.bf16.gmra.mrb[0].mxu0 %v3104
      %v3891 = vpop.f32.mrb[0].mxu0
      %v3892 = vadd.f32 %v3819, %v3891
      %v3893 = vpop.f32.mrb[0].mxu0
      %v3894 = vpop.f32.mrb[0].mxu0
      %v3895 = vadd.f32 %v3819, %v3894
      %v3896 = vpop.f32.mrb[0].mxu0
      %3897 = vdwg.mxu0
      %v3898 = vpack.c.bf16 %v3691, %v3688
      %v3899 = vpack.c.bf16 %v3699, %v3696
      %v3900 = vpack.c.bf16 %v3707, %v3704
      %v3901 = vpack.c.bf16 %v3715, %v3712
      %v3902 = vpack.c.bf16 %v3781, %v3778
      %v3903 = vpack.c.bf16 %v3789, %v3786
      %v3904 = vpack.c.bf16 %v3797, %v3794
      %v3905 = vpack.c.bf16 %v3805, %v3802
      %v3907 = vsel %vm1550, %v3898, 0
      %v3910 = vsel %vm1550, %v3899, 0
      %v3913 = vsel %vm1550, %v3900, 0
      %v3916 = vsel %vm1550, %v3901, 0
      %v3919 = vsel %vm1550, %v3902, 0
      %v3922 = vsel %vm1550, %v3903, 0
      %v3925 = vsel %vm1550, %v3904, 0
      %v3928 = vsel %vm1550, %v3905, 0
      %3930 = vmatprep.subr.bf16.mxu0 0
      %3931 = vmatpush1.bf16.xpose.msra.mxu0 %v3919
      %3932 = vmatprep.subr.bf16.mxu0 0
      %3933 = vmatpush1.bf16.xpose.msra.mxu0 %v3922
      %3934 = vmatprep.subr.bf16.mxu0 0
      %3935 = vmatpush1.bf16.xpose.msra.mxu0 %v3925
      %3936 = vmatprep.subr.bf16.mxu0 0
      %3937 = vmatpush1.bf16.xpose.msra.mxu0 %v3928
      %3938 = vmatprep.subr.bf16.mxu0 0
      %3939 = vmatpush1.bf16.xpose.msra.mxu0 0
      %3940 = vmatprep.subr.bf16.mxu0 0
      %3941 = vmatpush1.bf16.xpose.msra.mxu0 0
      %3942 = vmatprep.subr.bf16.mxu0 0
      %3943 = vmatpush1.bf16.xpose.msra.mxu0 0
      %3944 = vmatprep.subr.bf16.mxu0 0
      %3945 = vmatpush1.bf16.xpose.msra.mxu0 0
      %3946 = vmatprep.subr.bf16.mxu0 0
      %3947 = vmatpush1.bf16.xpose.msra.mxu0 0
      %3948 = vmatprep.subr.bf16.mxu0 0
      %3949 = vmatpush1.bf16.xpose.msra.mxu0 0
      %3950 = vmatprep.subr.bf16.mxu0 0
      %3951 = vmatpush1.bf16.xpose.msra.mxu0 0
      %3952 = vmatprep.subr.bf16.mxu0 0
      %3953 = vmatpush1.bf16.xpose.msra.mxu0 0
      %3954 = vmatprep.subr.bf16.mxu0 0
      %3955 = vmatpush1.bf16.xpose.msra.mxu0 0
      %3956 = vmatprep.subr.bf16.mxu0 0
      %3957 = vmatpush1.bf16.xpose.msra.mxu0 0
      %3958 = vmatprep.subr.bf16.mxu0 0
      %3959 = vmatpush1.bf16.xpose.msra.mxu0 0
      %3960 = vmatprep.subr.bf16.mxu0 0
      %3961 = vmatpush1.bf16.xpose.msra.mxu0 0
      %3962 = vmatprep.mubr.bf16.mxu0 0
      %3963 = vmatmul.mubr.bf16.gmra.mrb[0].mxu0 %v3907
      %v3964 = vpop.f32.mrb[0].mxu0
      %v3965 = vadd.f32 %v1146, %v3964
      %v3966 = vpop.f32.mrb[0].mxu0
      %v3967 = vpop.f32.mrb[0].mxu0
      %v3968 = vadd.f32 %v1147, %v3967
      %v3969 = vpop.f32.mrb[0].mxu0
      %3970 = vmatprep.mubr.bf16.mxu0 0
      %3971 = vmatmul.mubr.bf16.gmra.mrb[0].mxu0 %v3910
      %v3972 = vpop.f32.mrb[0].mxu0
      %v3973 = vadd.f32 %v1148, %v3972
      %v3974 = vpop.f32.mrb[0].mxu0
      %v3975 = vpop.f32.mrb[0].mxu0
      %v3976 = vadd.f32 %v1149, %v3975
      %v3977 = vpop.f32.mrb[0].mxu0
      %3978 = vmatprep.mubr.bf16.mxu0 0
      %3979 = vmatmul.mubr.bf16.gmra.mrb[0].mxu0 %v3913
      %v3980 = vpop.f32.mrb[0].mxu0
      %v3981 = vadd.f32 %v1150, %v3980
      %v3982 = vpop.f32.mrb[0].mxu0
      %v3983 = vpop.f32.mrb[0].mxu0
      %v3984 = vadd.f32 %v1151, %v3983
      %v3985 = vpop.f32.mrb[0].mxu0
      %3986 = vmatprep.mubr.bf16.mxu0 0
      %3987 = vmatmul.mubr.bf16.gmra.mrb[0].mxu0 %v3916
      %v3988 = vpop.f32.mrb[0].mxu0
      %v3989 = vadd.f32 %v1152, %v3988
      %v3990 = vpop.f32.mrb[0].mxu0
      %v3991 = vpop.f32.mrb[0].mxu0
      %v3992 = vadd.f32 %v1153, %v3991
      %v3993 = vpop.f32.mrb[0].mxu0
      %3994 = vdwg.mxu0
      %v3995 = vsel %vm1640, %v3965, -inf
      %3996 = vmax.xlane.f32.xlu0 %v3995
      %v3997 = vpop.xlane.xlu0 %3996
      %v3998 = vsel %vm1640, %v3968, -inf
      %3999 = vmax.xlane.f32.xlu0 %v3998
      %v4000 = vpop.xlane.xlu0 %3999
      %v4001 = vsel %vm1640, %v3973, -inf
      %4002 = vmax.xlane.f32.xlu0 %v4001
      %v4003 = vpop.xlane.xlu0 %4002
      %v4004 = vsel %vm1640, %v3976, -inf
      %4005 = vmax.xlane.f32.xlu0 %v4004
      %v4006 = vpop.xlane.xlu0 %4005
      %v4007 = vsel %vm1640, %v3981, -inf
      %4008 = vmax.xlane.f32.xlu0 %v4007
      %v4009 = vpop.xlane.xlu0 %4008
      %v4010 = vsel %vm1640, %v3984, -inf
      %4011 = vmax.xlane.f32.xlu0 %v4010
      %v4012 = vpop.xlane.xlu0 %4011
      %v4013 = vsel %vm1640, %v3989, -inf
      %4014 = vmax.xlane.f32.xlu0 %v4013
      %v4015 = vpop.xlane.xlu0 %4014
      %v4016 = vsel %vm1640, %v3992, -inf
      %4017 = vmax.xlane.f32.xlu0 %v4016
      %v4018 = vpop.xlane.xlu0 %4017
      %v4019 = vsub.f32 %v3965, %v3997
      %v4020 = vsub.f32 %v3968, %v4000
      %v4021 = vsub.f32 %v3973, %v4003
      %v4022 = vsub.f32 %v3976, %v4006
      %v4023 = vsub.f32 %v3981, %v4009
      %v4024 = vsub.f32 %v3984, %v4012
      %v4025 = vsub.f32 %v3989, %v4015
      %v4026 = vsub.f32 %v3992, %v4018
      %v4027 = vmul.f32 %v4019, 1.442695
      %v4028 = vpow.pop %v4027
      %v4029 = vmul.f32 %v4020, 1.442695
      %v4030 = vpow.pop %v4029
      %v4031 = vmul.f32 %v4021, 1.442695
      %v4032 = vpow.pop %v4031
      %v4033 = vmul.f32 %v4022, 1.442695
      %v4034 = vpow.pop %v4033
      %v4035 = vmul.f32 %v4023, 1.442695
      %v4036 = vpow.pop %v4035
      %v4037 = vmul.f32 %v4024, 1.442695
      %v4038 = vpow.pop %v4037
      %v4039 = vmul.f32 %v4025, 1.442695
      %v4040 = vpow.pop %v4039
      %v4041 = vmul.f32 %v4026, 1.442695
      %v4042 = vpow.pop %v4041
      %v4043 = vsel %vm1640, %v4028, 0.0
      %4044 = vadd.xlane.f32.xlu0 %v4043
      %v4045 = vpop.xlane.xlu0 %4044
      %v4046 = vsel %vm1640, %v4030, 0.0
      %4047 = vadd.xlane.f32.xlu0 %v4046
      %v4048 = vpop.xlane.xlu0 %4047
      %v4049 = vsel %vm1640, %v4032, 0.0
      %4050 = vadd.xlane.f32.xlu0 %v4049
      %v4051 = vpop.xlane.xlu0 %4050
      %v4052 = vsel %vm1640, %v4034, 0.0
      %4053 = vadd.xlane.f32.xlu0 %v4052
      %v4054 = vpop.xlane.xlu0 %4053
      %v4055 = vsel %vm1640, %v4036, 0.0
      %4056 = vadd.xlane.f32.xlu0 %v4055
      %v4057 = vpop.xlane.xlu0 %4056
      %v4058 = vsel %vm1640, %v4038, 0.0
      %4059 = vadd.xlane.f32.xlu0 %v4058
      %v4060 = vpop.xlane.xlu0 %4059
      %v4061 = vsel %vm1640, %v4040, 0.0
      %4062 = vadd.xlane.f32.xlu0 %v4061
      %v4063 = vpop.xlane.xlu0 %4062
      %v4064 = vsel %vm1640, %v4042, 0.0
      %4065 = vadd.xlane.f32.xlu0 %v4064
      %v4066 = vpop.xlane.xlu0 %4065
      %v4067 = vrcp.pop %v4045
      %v4068 = vrcp.pop %v4048
      %v4069 = vrcp.pop %v4051
      %v4070 = vrcp.pop %v4054
      %v4071 = vrcp.pop %v4057
      %v4072 = vrcp.pop %v4060
      %v4073 = vrcp.pop %v4063
      %v4074 = vrcp.pop %v4066
      %v4075 = vmul.f32 %v4028, %v4067
      %v4076 = vmul.f32 %v4030, %v4068
      %v4077 = vmul.f32 %v4032, %v4069
      %v4078 = vmul.f32 %v4034, %v4070
      %v4079 = vmul.f32 %v4036, %v4071
      %v4080 = vmul.f32 %v4038, %v4072
      %v4081 = vmul.f32 %v4040, %v4073
      %v4082 = vmul.f32 %v4042, %v4074
      %v4083 = vpack.c.bf16 %v4076, %v4075
      %v4084 = vpack.c.bf16 %v4078, %v4077
      %v4085 = vpack.c.bf16 %v4080, %v4079
      %v4086 = vpack.c.bf16 %v4082, %v4081
      %v4087 = vpack.c.bf16 %v3871, %v3868
      %v4088 = vpack.c.bf16 %v3879, %v3876
      %v4089 = vpack.c.bf16 %v3887, %v3884
      %v4090 = vpack.c.bf16 %v3895, %v3892
      %v4092 = vsel %vm1640, %v4083, 0
      %v4095 = vsel %vm1640, %v4084, 0
      %v4098 = vsel %vm1640, %v4085, 0
      %v4101 = vsel %vm1640, %v4086, 0
      %4103 = vmatprep.subr.bf16.mxu0 0
      %4104 = vmatpush1.bf16.msra.mxu0 %v4087
      %4105 = vmatprep.subr.bf16.mxu0 0
      %4106 = vmatpush1.bf16.msra.mxu0 %v4088
      %4107 = vmatprep.subr.bf16.mxu0 0
      %4108 = vmatpush1.bf16.msra.mxu0 %v4089
      %4109 = vmatprep.subr.bf16.mxu0 0
      %4110 = vmatpush1.bf16.msra.mxu0 %v4090
      %4111 = vmatprep.subr.bf16.mxu0 0
      %4112 = vmatpush1.bf16.msra.mxu0 0
      %4113 = vmatprep.subr.bf16.mxu0 0
      %4114 = vmatpush1.bf16.msra.mxu0 0
      %4115 = vmatprep.subr.bf16.mxu0 0
      %4116 = vmatpush1.bf16.msra.mxu0 0
      %4117 = vmatprep.subr.bf16.mxu0 0
      %4118 = vmatpush1.bf16.msra.mxu0 0
      %4119 = vmatprep.subr.bf16.mxu0 0
      %4120 = vmatpush1.bf16.msra.mxu0 0
      %4121 = vmatprep.subr.bf16.mxu0 0
      %4122 = vmatpush1.bf16.msra.mxu0 0
      %4123 = vmatprep.subr.bf16.mxu0 0
      %4124 = vmatpush1.bf16.msra.mxu0 0
      %4125 = vmatprep.subr.bf16.mxu0 0
      %4126 = vmatpush1.bf16.msra.mxu0 0
      %4127 = vmatprep.subr.bf16.mxu0 0
      %4128 = vmatpush1.bf16.msra.mxu0 0
      %4129 = vmatprep.subr.bf16.mxu0 0
      %4130 = vmatpush1.bf16.msra.mxu0 0
      %4131 = vmatprep.subr.bf16.mxu0 0
      %4132 = vmatpush1.bf16.msra.mxu0 0
      %4133 = vmatprep.subr.bf16.mxu0 0
      %4134 = vmatpush1.bf16.msra.mxu0 0
      %4135 = vmatprep.mubr.bf16.mxu0 0
      %4136 = vmatmul.mubr.bf16.gmra.mrb[0].mxu0 %v4092
      %v4137 = vpop.f32.mrb[0].mxu0
      %v4138 = vadd.f32 0.0, %v4137
      %v4139 = vpop.f32.mrb[0].mxu0
      %v4140 = vpop.f32.mrb[0].mxu0
      %v4141 = vadd.f32 0.0, %v4140
      %v4142 = vpop.f32.mrb[0].mxu0
      %4143 = vmatprep.mubr.bf16.mxu0 0
      %4144 = vmatmul.mubr.bf16.gmra.mrb[0].mxu0 %v4095
      %v4145 = vpop.f32.mrb[0].mxu0
      %v4146 = vadd.f32 0.0, %v4145
      %v4147 = vpop.f32.mrb[0].mxu0
      %v4148 = vpop.f32.mrb[0].mxu0
      %v4149 = vadd.f32 0.0, %v4148
      %v4150 = vpop.f32.mrb[0].mxu0
      %4151 = vmatprep.mubr.bf16.mxu0 0
      %4152 = vmatmul.mubr.bf16.gmra.mrb[0].mxu0 %v4098
      %v4153 = vpop.f32.mrb[0].mxu0
      %v4154 = vadd.f32 0.0, %v4153
      %v4155 = vpop.f32.mrb[0].mxu0
      %v4156 = vpop.f32.mrb[0].mxu0
      %v4157 = vadd.f32 0.0, %v4156
      %v4158 = vpop.f32.mrb[0].mxu0
      %4159 = vmatprep.mubr.bf16.mxu0 0
      %4160 = vmatmul.mubr.bf16.gmra.mrb[0].mxu0 %v4101
      %v4161 = vpop.f32.mrb[0].mxu0
      %v4162 = vadd.f32 0.0, %v4161
      %v4163 = vpop.f32.mrb[0].mxu0
      %v4164 = vpop.f32.mrb[0].mxu0
      %v4165 = vadd.f32 0.0, %v4164
      %v4166 = vpop.f32.mrb[0].mxu0
      %4167 = vdwg.mxu0
      %v4168 = vpack.c.bf16 %v4141, %v4138
      %v4169 = vpack.c.bf16 %v4149, %v4146
      %v4170 = vpack.c.bf16 %v4157, %v4154
      %v4171 = vpack.c.bf16 %v4165, %v4162
      %s4172 = scalar_lea.vmem %s1079, 24
      %v4173 = vld [vmem:[%s4172] sm:$0xf]
      %v4174 = vld [vmem:[%s4172 + $0x4] sm:$0xf]
      %v4177 = vunpack.c.l.b16 %v4173
      %v4178 = vunpack.c.l.b16 %v4174
      %v4179 = vpack.c.b16 %v4178, %v4177
      %v4182 = vsel %vm1550, %v4168, 0
      %v4185 = vsel %vm1550, %v4169, 0
      %v4188 = vsel %vm1550, %v4170, 0
      %v4191 = vsel %vm1550, %v4171, 0
      %4193 = vmatprep.subr.bf16.mxu0 0
      %4194 = vmatpush1.bf16.msra.mxu0 %v4179
      %4195 = vmatprep.subr.bf16.mxu0 0
      %4196 = vmatpush1.bf16.msra.mxu0 0
      %4197 = vmatprep.subr.bf16.mxu0 0
      %4198 = vmatpush1.bf16.msra.mxu0 0
      %4199 = vmatprep.subr.bf16.mxu0 0
      %4200 = vmatpush1.bf16.msra.mxu0 0
      %4201 = vmatprep.subr.bf16.mxu0 0
      %4202 = vmatpush1.bf16.msra.mxu0 0
      %4203 = vmatprep.subr.bf16.mxu0 0
      %4204 = vmatpush1.bf16.msra.mxu0 0
      %4205 = vmatprep.subr.bf16.mxu0 0
      %4206 = vmatpush1.bf16.msra.mxu0 0
      %4207 = vmatprep.subr.bf16.mxu0 0
      %4208 = vmatpush1.bf16.msra.mxu0 0
      %4209 = vmatprep.subr.bf16.mxu0 0
      %4210 = vmatpush1.bf16.msra.mxu0 0
      %4211 = vmatprep.subr.bf16.mxu0 0
      %4212 = vmatpush1.bf16.msra.mxu0 0
      %4213 = vmatprep.subr.bf16.mxu0 0
      %4214 = vmatpush1.bf16.msra.mxu0 0
      %4215 = vmatprep.subr.bf16.mxu0 0
      %4216 = vmatpush1.bf16.msra.mxu0 0
      %4217 = vmatprep.subr.bf16.mxu0 0
      %4218 = vmatpush1.bf16.msra.mxu0 0
      %4219 = vmatprep.subr.bf16.mxu0 0
      %4220 = vmatpush1.bf16.msra.mxu0 0
      %4221 = vmatprep.subr.bf16.mxu0 0
      %4222 = vmatpush1.bf16.msra.mxu0 0
      %4223 = vmatprep.subr.bf16.mxu0 0
      %4224 = vmatpush1.bf16.msra.mxu0 0
      %4225 = vmatprep.mubr.bf16.mxu0 0
      %4226 = vmatmul.mubr.bf16.gmra.mrb[0].mxu0 %v4182
      %v4227 = vpop.f32.mrb[0].mxu0
      %v4228 = vadd.f32 0.0, %v4227
      %v4229 = vpop.f32.mrb[0].mxu0
      %v4230 = vpop.f32.mrb[0].mxu0
      %v4231 = vadd.f32 0.0, %v4230
      %v4232 = vpop.f32.mrb[0].mxu0
      %4233 = vmatprep.mubr.bf16.mxu0 0
      %4234 = vmatmul.mubr.bf16.gmra.mrb[0].mxu0 %v4185
      %v4235 = vpop.f32.mrb[0].mxu0
      %v4236 = vadd.f32 0.0, %v4235
      %v4237 = vpop.f32.mrb[0].mxu0
      %v4238 = vpop.f32.mrb[0].mxu0
      %v4239 = vadd.f32 0.0, %v4238
      %v4240 = vpop.f32.mrb[0].mxu0
      %4241 = vmatprep.mubr.bf16.mxu0 0
      %4242 = vmatmul.mubr.bf16.gmra.mrb[0].mxu0 %v4188
      %v4243 = vpop.f32.mrb[0].mxu0
      %v4244 = vadd.f32 0.0, %v4243
      %v4245 = vpop.f32.mrb[0].mxu0
      %v4246 = vpop.f32.mrb[0].mxu0
      %v4247 = vadd.f32 0.0, %v4246
      %v4248 = vpop.f32.mrb[0].mxu0
      %4249 = vmatprep.mubr.bf16.mxu0 0
      %4250 = vmatmul.mubr.bf16.gmra.mrb[0].mxu0 %v4191
      %v4251 = vpop.f32.mrb[0].mxu0
      %v4252 = vadd.f32 0.0, %v4251
      %v4253 = vpop.f32.mrb[0].mxu0
      %v4254 = vpop.f32.mrb[0].mxu0
      %v4255 = vadd.f32 0.0, %v4254
      %v4256 = vpop.f32.mrb[0].mxu0
      %4257 = vdwg.mxu0
      %v4260 = vunpack.c.l.b16 %v3626
      %v4261 = vunpack.c.l.b16 %v3627
      %v4262 = vpack.c.b16 %v4261, %v4260
      %v4265 = vsel %vm1550, %v3621, 0
      %v4268 = vsel %vm1550, %v3622, 0
      %v4271 = vsel %vm1550, %v3623, 0
      %v4274 = vsel %vm1550, %v3624, 0
      %4276 = vmatprep.subr.bf16.mxu0 0
      %4277 = vmatpush1.bf16.msra.mxu0 %v4262
      %4278 = vmatprep.subr.bf16.mxu0 0
      %4279 = vmatpush1.bf16.msra.mxu0 0
      %4280 = vmatprep.subr.bf16.mxu0 0
      %4281 = vmatpush1.bf16.msra.mxu0 0
      %4282 = vmatprep.subr.bf16.mxu0 0
      %4283 = vmatpush1.bf16.msra.mxu0 0
      %4284 = vmatprep.subr.bf16.mxu0 0
      %4285 = vmatpush1.bf16.msra.mxu0 0
      %4286 = vmatprep.subr.bf16.mxu0 0
      %4287 = vmatpush1.bf16.msra.mxu0 0
      %4288 = vmatprep.subr.bf16.mxu0 0
      %4289 = vmatpush1.bf16.msra.mxu0 0
      %4290 = vmatprep.subr.bf16.mxu0 0
      %4291 = vmatpush1.bf16.msra.mxu0 0
      %4292 = vmatprep.subr.bf16.mxu0 0
      %4293 = vmatpush1.bf16.msra.mxu0 0
      %4294 = vmatprep.subr.bf16.mxu0 0
      %4295 = vmatpush1.bf16.msra.mxu0 0
      %4296 = vmatprep.subr.bf16.mxu0 0
      %4297 = vmatpush1.bf16.msra.mxu0 0
      %4298 = vmatprep.subr.bf16.mxu0 0
      %4299 = vmatpush1.bf16.msra.mxu0 0
      %4300 = vmatprep.subr.bf16.mxu0 0
      %4301 = vmatpush1.bf16.msra.mxu0 0
      %4302 = vmatprep.subr.bf16.mxu0 0
      %4303 = vmatpush1.bf16.msra.mxu0 0
      %4304 = vmatprep.subr.bf16.mxu0 0
      %4305 = vmatpush1.bf16.msra.mxu0 0
      %4306 = vmatprep.subr.bf16.mxu0 0
      %4307 = vmatpush1.bf16.msra.mxu0 0
      %4308 = vmatprep.mubr.bf16.mxu0 0
      %4309 = vmatmul.mubr.bf16.gmra.mrb[0].mxu0 %v4265
      %v4310 = vpop.f32.mrb[0].mxu0
      %v4311 = vadd.f32 %v4228, %v4310
      %v4312 = vpop.f32.mrb[0].mxu0
      %v4313 = vpop.f32.mrb[0].mxu0
      %v4314 = vadd.f32 %v4231, %v4313
      %v4315 = vpop.f32.mrb[0].mxu0
      %4316 = vmatprep.mubr.bf16.mxu0 0
      %4317 = vmatmul.mubr.bf16.gmra.mrb[0].mxu0 %v4268
      %v4318 = vpop.f32.mrb[0].mxu0
      %v4319 = vadd.f32 %v4236, %v4318
      %v4320 = vpop.f32.mrb[0].mxu0
      %v4321 = vpop.f32.mrb[0].mxu0
      %v4322 = vadd.f32 %v4239, %v4321
      %v4323 = vpop.f32.mrb[0].mxu0
      %4324 = vmatprep.mubr.bf16.mxu0 0
      %4325 = vmatmul.mubr.bf16.gmra.mrb[0].mxu0 %v4271
      %v4326 = vpop.f32.mrb[0].mxu0
      %v4327 = vadd.f32 %v4244, %v4326
      %v4328 = vpop.f32.mrb[0].mxu0
      %v4329 = vpop.f32.mrb[0].mxu0
      %v4330 = vadd.f32 %v4247, %v4329
      %v4331 = vpop.f32.mrb[0].mxu0
      %4332 = vmatprep.mubr.bf16.mxu0 0
      %4333 = vmatmul.mubr.bf16.gmra.mrb[0].mxu0 %v4274
      %v4334 = vpop.f32.mrb[0].mxu0
      %v4335 = vadd.f32 %v4252, %v4334
      %v4336 = vpop.f32.mrb[0].mxu0
      %v4337 = vpop.f32.mrb[0].mxu0
      %v4338 = vadd.f32 %v4255, %v4337
      %v4339 = vpop.f32.mrb[0].mxu0
      %4340 = vdwg.mxu0
      %s4341 = scalar_lea.vmem %s1083, 1
      %v4342 = vld [vmem:[%s4341] sm:$0x1]
      %v4344 = vlaneseq
      %v4345 = vshrl.u32 %v4344, 7
      %v4346 = vsub.s32 0, %v4345
      %v4347 = vrot.slane %v4342, %v4346
      %v4349 = vadd.f32 %v4311, %v4347
      %v4350 = vadd.f32 %v4314, %v4347
      %v4351 = vadd.f32 %v4319, %v4347
      %v4352 = vadd.f32 %v4322, %v4347
      %v4353 = vadd.f32 %v4327, %v4347
      %v4354 = vadd.f32 %v4330, %v4347
      %v4355 = vadd.f32 %v4335, %v4347
      %v4356 = vadd.f32 %v4338, %v4347
      %v4357 = vadd.f32 %v3057, %v4349
      %v4358 = vadd.f32 %v3058, %v4350
      %v4359 = vadd.f32 %v3059, %v4351
      %v4360 = vadd.f32 %v3060, %v4352
      %v4361 = vadd.f32 %v3061, %v4353
      %v4362 = vadd.f32 %v3062, %v4354
      %v4363 = vadd.f32 %v3063, %v4355
      %v4364 = vadd.f32 %v3064, %v4356
      %s4365 = scalar_lea.vmem %s1087, 1
      %v4366 = vld [vmem:[%s4365] sm:$0x1]
      %s4367 = scalar_lea.vmem %s1091, 1
      %v4368 = vld [vmem:[%s4367] sm:$0x1]
      %v4369 = vsel %vm1288, %v4357, 0.0
      %4370 = vadd.xlane.f32.xlu0 %v4369
      %v4371 = vpop.xlane.xlu0 %4370
      %v4372 = vsel %vm1288, %v4358, 0.0
      %4373 = vadd.xlane.f32.xlu0 %v4372
      %v4374 = vpop.xlane.xlu0 %4373
      %v4375 = vsel %vm1288, %v4359, 0.0
      %4376 = vadd.xlane.f32.xlu0 %v4375
      %v4377 = vpop.xlane.xlu0 %4376
      %v4378 = vsel %vm1288, %v4360, 0.0
      %4379 = vadd.xlane.f32.xlu0 %v4378
      %v4380 = vpop.xlane.xlu0 %4379
      %v4381 = vsel %vm1288, %v4361, 0.0
      %4382 = vadd.xlane.f32.xlu0 %v4381
      %v4383 = vpop.xlane.xlu0 %4382
      %v4384 = vsel %vm1288, %v4362, 0.0
      %4385 = vadd.xlane.f32.xlu0 %v4384
      %v4386 = vpop.xlane.xlu0 %4385
      %v4387 = vsel %vm1288, %v4363, 0.0
      %4388 = vadd.xlane.f32.xlu0 %v4387
      %v4389 = vpop.xlane.xlu0 %4388
      %v4390 = vsel %vm1288, %v4364, 0.0
      %4391 = vadd.xlane.f32.xlu0 %v4390
      %v4392 = vpop.xlane.xlu0 %4391
      %v4393 = vmul.f32 %v4371, %v2582
      %v4394 = vmul.f32 %v4374, %v2582
      %v4395 = vmul.f32 %v4377, %v2582
      %v4396 = vmul.f32 %v4380, %v2582
      %v4397 = vmul.f32 %v4383, %v2582
      %v4398 = vmul.f32 %v4386, %v2582
      %v4399 = vmul.f32 %v4389, %v2582
      %v4400 = vmul.f32 %v4392, %v2582
      %v4401 = vsub.f32 %v4357, %v4393
      %v4402 = vsub.f32 %v4358, %v4394
      %v4403 = vsub.f32 %v4359, %v4395
      %v4404 = vsub.f32 %v4360, %v4396
      %v4405 = vsub.f32 %v4361, %v4397
      %v4406 = vsub.f32 %v4362, %v4398
      %v4407 = vsub.f32 %v4363, %v4399
      %v4408 = vsub.f32 %v4364, %v4400
      %v4409 = vmul.f32 %v4401, %v4401
      %v4410 = vmul.f32 %v4402, %v4402
      %v4411 = vmul.f32 %v4403, %v4403
      %v4412 = vmul.f32 %v4404, %v4404
      %v4413 = vmul.f32 %v4405, %v4405
      %v4414 = vmul.f32 %v4406, %v4406
      %v4415 = vmul.f32 %v4407, %v4407
      %v4416 = vmul.f32 %v4408, %v4408
      %v4417 = vsel %vm1288, %v4409, 0.0
      %4418 = vadd.xlane.f32.xlu0 %v4417
      %v4419 = vpop.xlane.xlu0 %4418
      %v4420 = vsel %vm1288, %v4410, 0.0
      %4421 = vadd.xlane.f32.xlu0 %v4420
      %v4422 = vpop.xlane.xlu0 %4421
      %v4423 = vsel %vm1288, %v4411, 0.0
      %4424 = vadd.xlane.f32.xlu0 %v4423
      %v4425 = vpop.xlane.xlu0 %4424
      %v4426 = vsel %vm1288, %v4412, 0.0
      %4427 = vadd.xlane.f32.xlu0 %v4426
      %v4428 = vpop.xlane.xlu0 %4427
      %v4429 = vsel %vm1288, %v4413, 0.0
      %4430 = vadd.xlane.f32.xlu0 %v4429
      %v4431 = vpop.xlane.xlu0 %4430
      %v4432 = vsel %vm1288, %v4414, 0.0
      %4433 = vadd.xlane.f32.xlu0 %v4432
      %v4434 = vpop.xlane.xlu0 %4433
      %v4435 = vsel %vm1288, %v4415, 0.0
      %4436 = vadd.xlane.f32.xlu0 %v4435
      %v4437 = vpop.xlane.xlu0 %4436
      %v4438 = vsel %vm1288, %v4416, 0.0
      %4439 = vadd.xlane.f32.xlu0 %v4438
      %v4440 = vpop.xlane.xlu0 %4439
      %v4441 = vmul.f32 %v4419, %v2582
      %v4442 = vmul.f32 %v4422, %v2582
      %v4443 = vmul.f32 %v4425, %v2582
      %v4444 = vmul.f32 %v4428, %v2582
      %v4445 = vmul.f32 %v4431, %v2582
      %v4446 = vmul.f32 %v4434, %v2582
      %v4447 = vmul.f32 %v4437, %v2582
      %v4448 = vmul.f32 %v4440, %v2582
      %v4449 = vadd.f32 %v4441, 1e-05
      %v4450 = vadd.f32 %v4442, 1e-05
      %v4451 = vadd.f32 %v4443, 1e-05
      %v4452 = vadd.f32 %v4444, 1e-05
      %v4453 = vadd.f32 %v4445, 1e-05
      %v4454 = vadd.f32 %v4446, 1e-05
      %v4455 = vadd.f32 %v4447, 1e-05
      %v4456 = vadd.f32 %v4448, 1e-05
      %v4457 = vrsqrt.pop %v4449
      %v4458 = vrsqrt.pop %v4450
      %v4459 = vrsqrt.pop %v4451
      %v4460 = vrsqrt.pop %v4452
      %v4461 = vrsqrt.pop %v4453
      %v4462 = vrsqrt.pop %v4454
      %v4463 = vrsqrt.pop %v4455
      %v4464 = vrsqrt.pop %v4456
      %v4465 = vmul.f32 %v4401, %v4457
      %v4466 = vmul.f32 %v4402, %v4458
      %v4467 = vmul.f32 %v4403, %v4459
      %v4468 = vmul.f32 %v4404, %v4460
      %v4469 = vmul.f32 %v4405, %v4461
      %v4470 = vmul.f32 %v4406, %v4462
      %v4471 = vmul.f32 %v4407, %v4463
      %v4472 = vmul.f32 %v4408, %v4464
      %v4474 = vlaneseq
      %v4475 = vshrl.u32 %v4474, 7
      %v4476 = vsub.s32 0, %v4475
      %v4477 = vrot.slane %v4366, %v4476
      %v4479 = vmul.f32 %v4465, %v4477
      %v4480 = vmul.f32 %v4466, %v4477
      %v4481 = vmul.f32 %v4467, %v4477
      %v4482 = vmul.f32 %v4468, %v4477
      %v4483 = vmul.f32 %v4469, %v4477
      %v4484 = vmul.f32 %v4470, %v4477
      %v4485 = vmul.f32 %v4471, %v4477
      %v4486 = vmul.f32 %v4472, %v4477
      %v4488 = vlaneseq
      %v4489 = vshrl.u32 %v4488, 7
      %v4490 = vsub.s32 0, %v4489
      %v4491 = vrot.slane %v4368, %v4490
      %v4493 = vadd.f32 %v4479, %v4491
      %v4494 = vadd.f32 %v4480, %v4491
      %v4495 = vadd.f32 %v4481, %v4491
      %v4496 = vadd.f32 %v4482, %v4491
      %v4497 = vadd.f32 %v4483, %v4491
      %v4498 = vadd.f32 %v4484, %v4491
      %v4499 = vadd.f32 %v4485, %v4491
      %v4500 = vadd.f32 %v4486, %v4491
      %v4501 = vpack.c.bf16 %v4494, %v4493
      %v4502 = vpack.c.bf16 %v4496, %v4495
      %v4503 = vpack.c.bf16 %v4498, %v4497
      %v4504 = vpack.c.bf16 %v4500, %v4499
      %s4505 = scalar_lea.vmem %s1096, 16
      %v4506 = vld [vmem:[%s4505] sm:$0xf]
      %v4507 = vld [vmem:[%s4505 + $0x4] sm:$0xf]
      %v4508 = vld [vmem:[%s4505 + $0x8] sm:$0xf]
      %v4509 = vld [vmem:[%s4505 + $0xc] sm:$0xf]
      %s4510 = scalar_lea.vmem %s1100, 1
      %v4511 = vld [vmem:[%s4510] sm:$0x1]
      %v4513 = vlaneseq
      %v4514 = vshrl.u32 %v4513, 7
      %v4515 = vsub.s32 0, %v4514
      %v4516 = vrot.slane %v4511, %v4515
      %v4522 = vunpack.c.l.b16 %v4506
      %v4523 = vunpack.c.l.b16 %v4507
      %v4524 = vunpack.c.l.b16 %v4508
      %v4525 = vunpack.c.l.b16 %v4509
      %v4526 = vpack.c.b16 %v4523, %v4522
      %v4527 = vpack.c.b16 %v4525, %v4524
      %v4531 = vsel %vm1288, %v4501, 0
      %v4534 = vsel %vm1288, %v4502, 0
      %v4537 = vsel %vm1288, %v4503, 0
      %v4540 = vsel %vm1288, %v4504, 0
      %4542 = vmatprep.subr.bf16.mxu0 0
      %4543 = vmatpush1.bf16.msra.mxu0 %v4526
      %4544 = vmatprep.subr.bf16.mxu0 0
      %4545 = vmatpush1.bf16.msra.mxu0 %v4527
      %4546 = vmatprep.subr.bf16.mxu0 0
      %4547 = vmatpush1.bf16.msra.mxu0 0
      %4548 = vmatprep.subr.bf16.mxu0 0
      %4549 = vmatpush1.bf16.msra.mxu0 0
      %4550 = vmatprep.subr.bf16.mxu0 0
      %4551 = vmatpush1.bf16.msra.mxu0 0
      %4552 = vmatprep.subr.bf16.mxu0 0
      %4553 = vmatpush1.bf16.msra.mxu0 0
      %4554 = vmatprep.subr.bf16.mxu0 0
      %4555 = vmatpush1.bf16.msra.mxu0 0
      %4556 = vmatprep.subr.bf16.mxu0 0
      %4557 = vmatpush1.bf16.msra.mxu0 0
      %4558 = vmatprep.subr.bf16.mxu0 0
      %4559 = vmatpush1.bf16.msra.mxu0 0
      %4560 = vmatprep.subr.bf16.mxu0 0
      %4561 = vmatpush1.bf16.msra.mxu0 0
      %4562 = vmatprep.subr.bf16.mxu0 0
      %4563 = vmatpush1.bf16.msra.mxu0 0
      %4564 = vmatprep.subr.bf16.mxu0 0
      %4565 = vmatpush1.bf16.msra.mxu0 0
      %4566 = vmatprep.subr.bf16.mxu0 0
      %4567 = vmatpush1.bf16.msra.mxu0 0
      %4568 = vmatprep.subr.bf16.mxu0 0
      %4569 = vmatpush1.bf16.msra.mxu0 0
      %4570 = vmatprep.subr.bf16.mxu0 0
      %4571 = vmatpush1.bf16.msra.mxu0 0
      %4572 = vmatprep.subr.bf16.mxu0 0
      %4573 = vmatpush1.bf16.msra.mxu0 0
      %4574 = vmatprep.mubr.bf16.mxu0 0
      %4575 = vmatmul.mubr.bf16.gmra.mrb[0].mxu0 %v4531
      %v4576 = vpop.f32.mrb[0].mxu0
      %v4577 = vadd.f32 %v4516, %v4576
      %v4578 = vpop.f32.mrb[0].mxu0
      %v4579 = vpop.f32.mrb[0].mxu0
      %v4580 = vadd.f32 %v4516, %v4579
      %v4581 = vpop.f32.mrb[0].mxu0
      %4582 = vmatprep.mubr.bf16.mxu0 0
      %4583 = vmatmul.mubr.bf16.gmra.mrb[0].mxu0 %v4534
      %v4584 = vpop.f32.mrb[0].mxu0
      %v4585 = vadd.f32 %v4516, %v4584
      %v4586 = vpop.f32.mrb[0].mxu0
      %v4587 = vpop.f32.mrb[0].mxu0
      %v4588 = vadd.f32 %v4516, %v4587
      %v4589 = vpop.f32.mrb[0].mxu0
      %4590 = vmatprep.mubr.bf16.mxu0 0
      %4591 = vmatmul.mubr.bf16.gmra.mrb[0].mxu0 %v4537
      %v4592 = vpop.f32.mrb[0].mxu0
      %v4593 = vadd.f32 %v4516, %v4592
      %v4594 = vpop.f32.mrb[0].mxu0
      %v4595 = vpop.f32.mrb[0].mxu0
      %v4596 = vadd.f32 %v4516, %v4595
      %v4597 = vpop.f32.mrb[0].mxu0
      %4598 = vmatprep.mubr.bf16.mxu0 0
      %4599 = vmatmul.mubr.bf16.gmra.mrb[0].mxu0 %v4540
      %v4600 = vpop.f32.mrb[0].mxu0
      %v4601 = vadd.f32 %v4516, %v4600
      %v4602 = vpop.f32.mrb[0].mxu0
      %v4603 = vpop.f32.mrb[0].mxu0
      %v4604 = vadd.f32 %v4516, %v4603
      %v4605 = vpop.f32.mrb[0].mxu0
      %4606 = vdwg.mxu0
      %v4607 = vmax.f32 %v4577, 0.0
      %v4608 = vmax.f32 %v4580, 0.0
      %v4609 = vmax.f32 %v4585, 0.0
      %v4610 = vmax.f32 %v4588, 0.0
      %v4611 = vmax.f32 %v4593, 0.0
      %v4612 = vmax.f32 %v4596, 0.0
      %v4613 = vmax.f32 %v4601, 0.0
      %v4614 = vmax.f32 %v4604, 0.0
      %v4615 = vpack.c.bf16 %v4608, %v4607
      %v4616 = vpack.c.bf16 %v4610, %v4609
      %v4617 = vpack.c.bf16 %v4612, %v4611
      %v4618 = vpack.c.bf16 %v4614, %v4613
      %s4619 = scalar_lea.vmem %s1105, 32
      %v4620 = vld [vmem:[%s4619] sm:$0xf]
      %v4621 = vld [vmem:[%s4619 + $0x4] sm:$0xf]
      %v4622 = vld [vmem:[%s4619 + $0x8] sm:$0xf]
      %v4623 = vld [vmem:[%s4619 + $0xc] sm:$0xf]
      %v4624 = vld [vmem:[%s4619 + $0x10] sm:$0xf]
      %v4625 = vld [vmem:[%s4619 + $0x14] sm:$0xf]
      %v4626 = vld [vmem:[%s4619 + $0x18] sm:$0xf]
      %v4627 = vld [vmem:[%s4619 + $0x1c] sm:$0xf]
      %s4628 = scalar_lea.vmem %s1109, 1
      %v4629 = vld [vmem:[%s4628] sm:$0x1]
      %v4631 = vlaneseq
      %v4632 = vshrl.u32 %v4631, 7
      %v4633 = vsub.s32 0, %v4632
      %v4634 = vrot.slane %v4629, %v4633
      %v4644 = vunpack.c.l.b16 %v4620
      %v4645 = vunpack.c.l.b16 %v4621
      %v4646 = vunpack.c.l.b16 %v4622
      %v4647 = vunpack.c.l.b16 %v4623
      %v4648 = vunpack.c.l.b16 %v4624
      %v4649 = vunpack.c.l.b16 %v4625
      %v4650 = vunpack.c.l.b16 %v4626
      %v4651 = vunpack.c.l.b16 %v4627
      %v4652 = vpack.c.b16 %v4645, %v4644
      %v4653 = vpack.c.b16 %v4647, %v4646
      %v4654 = vpack.c.b16 %v4649, %v4648
      %v4655 = vpack.c.b16 %v4651, %v4650
      %v4661 = vsel %vm1640, %v4615, 0
      %v4664 = vsel %vm1640, %v4616, 0
      %v4667 = vsel %vm1640, %v4617, 0
      %v4670 = vsel %vm1640, %v4618, 0
      %4672 = vmatprep.subr.bf16.mxu0 0
      %4673 = vmatpush1.bf16.msra.mxu0 %v4652
      %4674 = vmatprep.subr.bf16.mxu0 0
      %4675 = vmatpush1.bf16.msra.mxu0 %v4653
      %4676 = vmatprep.subr.bf16.mxu0 0
      %4677 = vmatpush1.bf16.msra.mxu0 %v4654
      %4678 = vmatprep.subr.bf16.mxu0 0
      %4679 = vmatpush1.bf16.msra.mxu0 %v4655
      %4680 = vmatprep.subr.bf16.mxu0 0
      %4681 = vmatpush1.bf16.msra.mxu0 0
      %4682 = vmatprep.subr.bf16.mxu0 0
      %4683 = vmatpush1.bf16.msra.mxu0 0
      %4684 = vmatprep.subr.bf16.mxu0 0
      %4685 = vmatpush1.bf16.msra.mxu0 0
      %4686 = vmatprep.subr.bf16.mxu0 0
      %4687 = vmatpush1.bf16.msra.mxu0 0
      %4688 = vmatprep.subr.bf16.mxu0 0
      %4689 = vmatpush1.bf16.msra.mxu0 0
      %4690 = vmatprep.subr.bf16.mxu0 0
      %4691 = vmatpush1.bf16.msra.mxu0 0
      %4692 = vmatprep.subr.bf16.mxu0 0
      %4693 = vmatpush1.bf16.msra.mxu0 0
      %4694 = vmatprep.subr.bf16.mxu0 0
      %4695 = vmatpush1.bf16.msra.mxu0 0
      %4696 = vmatprep.subr.bf16.mxu0 0
      %4697 = vmatpush1.bf16.msra.mxu0 0
      %4698 = vmatprep.subr.bf16.mxu0 0
      %4699 = vmatpush1.bf16.msra.mxu0 0
      %4700 = vmatprep.subr.bf16.mxu0 0
      %4701 = vmatpush1.bf16.msra.mxu0 0
      %4702 = vmatprep.subr.bf16.mxu0 0
      %4703 = vmatpush1.bf16.msra.mxu0 0
      %4704 = vmatprep.mubr.bf16.mxu0 0
      %4705 = vmatmul.mubr.bf16.gmra.mrb[0].mxu0 %v4661
      %v4706 = vpop.f32.mrb[0].mxu0
      %v4707 = vadd.f32 %v4634, %v4706
      %v4708 = vpop.f32.mrb[0].mxu0
      %v4709 = vpop.f32.mrb[0].mxu0
      %v4710 = vadd.f32 %v4634, %v4709
      %v4711 = vpop.f32.mrb[0].mxu0
      %4712 = vmatprep.mubr.bf16.mxu0 0
      %4713 = vmatmul.mubr.bf16.gmra.mrb[0].mxu0 %v4664
      %v4714 = vpop.f32.mrb[0].mxu0
      %v4715 = vadd.f32 %v4634, %v4714
      %v4716 = vpop.f32.mrb[0].mxu0
      %v4717 = vpop.f32.mrb[0].mxu0
      %v4718 = vadd.f32 %v4634, %v4717
      %v4719 = vpop.f32.mrb[0].mxu0
      %4720 = vmatprep.mubr.bf16.mxu0 0
      %4721 = vmatmul.mubr.bf16.gmra.mrb[0].mxu0 %v4667
      %v4722 = vpop.f32.mrb[0].mxu0
      %v4723 = vadd.f32 %v4634, %v4722
      %v4724 = vpop.f32.mrb[0].mxu0
      %v4725 = vpop.f32.mrb[0].mxu0
      %v4726 = vadd.f32 %v4634, %v4725
      %v4727 = vpop.f32.mrb[0].mxu0
      %4728 = vmatprep.mubr.bf16.mxu0 0
      %4729 = vmatmul.mubr.bf16.gmra.mrb[0].mxu0 %v4670
      %v4730 = vpop.f32.mrb[0].mxu0
      %v4731 = vadd.f32 %v4634, %v4730
      %v4732 = vpop.f32.mrb[0].mxu0
      %v4733 = vpop.f32.mrb[0].mxu0
      %v4734 = vadd.f32 %v4634, %v4733
      %v4735 = vpop.f32.mrb[0].mxu0
      %4736 = vdwg.mxu0
      %v4737 = vadd.f32 %v4493, %v4707
      %v4738 = vadd.f32 %v4494, %v4710
      %v4739 = vadd.f32 %v4495, %v4715
      %v4740 = vadd.f32 %v4496, %v4718
      %v4741 = vadd.f32 %v4497, %v4723
      %v4742 = vadd.f32 %v4498, %v4726
      %v4743 = vadd.f32 %v4499, %v4731
      %v4744 = vadd.f32 %v4500, %v4734
      %s4745 = scalar_lea.vmem %s1113, 1
      %v4746 = vld [vmem:[%s4745] sm:$0x1]
      %s4747 = scalar_lea.vmem %s1117, 1
      %v4748 = vld [vmem:[%s4747] sm:$0x1]
      %v4749 = vsel %vm1288, %v4737, 0.0
      %4750 = vadd.xlane.f32.xlu0 %v4749
      %v4751 = vpop.xlane.xlu0 %4750
      %v4752 = vsel %vm1288, %v4738, 0.0
      %4753 = vadd.xlane.f32.xlu0 %v4752
      %v4754 = vpop.xlane.xlu0 %4753
      %v4755 = vsel %vm1288, %v4739, 0.0
      %4756 = vadd.xlane.f32.xlu0 %v4755
      %v4757 = vpop.xlane.xlu0 %4756
      %v4758 = vsel %vm1288, %v4740, 0.0
      %4759 = vadd.xlane.f32.xlu0 %v4758
      %v4760 = vpop.xlane.xlu0 %4759
      %v4761 = vsel %vm1288, %v4741, 0.0
      %4762 = vadd.xlane.f32.xlu0 %v4761
      %v4763 = vpop.xlane.xlu0 %4762
      %v4764 = vsel %vm1288, %v4742, 0.0
      %4765 = vadd.xlane.f32.xlu0 %v4764
      %v4766 = vpop.xlane.xlu0 %4765
      %v4767 = vsel %vm1288, %v4743, 0.0
      %4768 = vadd.xlane.f32.xlu0 %v4767
      %v4769 = vpop.xlane.xlu0 %4768
      %v4770 = vsel %vm1288, %v4744, 0.0
      %4771 = vadd.xlane.f32.xlu0 %v4770
      %v4772 = vpop.xlane.xlu0 %4771
      %v4773 = vmul.f32 %v4751, %v2582
      %v4774 = vmul.f32 %v4754, %v2582
      %v4775 = vmul.f32 %v4757, %v2582
      %v4776 = vmul.f32 %v4760, %v2582
      %v4777 = vmul.f32 %v4763, %v2582
      %v4778 = vmul.f32 %v4766, %v2582
      %v4779 = vmul.f32 %v4769, %v2582
      %v4780 = vmul.f32 %v4772, %v2582
      %v4781 = vsub.f32 %v4737, %v4773
      %v4782 = vsub.f32 %v4738, %v4774
      %v4783 = vsub.f32 %v4739, %v4775
      %v4784 = vsub.f32 %v4740, %v4776
      %v4785 = vsub.f32 %v4741, %v4777
      %v4786 = vsub.f32 %v4742, %v4778
      %v4787 = vsub.f32 %v4743, %v4779
      %v4788 = vsub.f32 %v4744, %v4780
      %v4789 = vmul.f32 %v4781, %v4781
      %v4790 = vmul.f32 %v4782, %v4782
      %v4791 = vmul.f32 %v4783, %v4783
      %v4792 = vmul.f32 %v4784, %v4784
      %v4793 = vmul.f32 %v4785, %v4785
      %v4794 = vmul.f32 %v4786, %v4786
      %v4795 = vmul.f32 %v4787, %v4787
      %v4796 = vmul.f32 %v4788, %v4788
      %v4797 = vsel %vm1288, %v4789, 0.0
      %4798 = vadd.xlane.f32.xlu0 %v4797
      %v4799 = vpop.xlane.xlu0 %4798
      %v4800 = vsel %vm1288, %v4790, 0.0
      %4801 = vadd.xlane.f32.xlu0 %v4800
      %v4802 = vpop.xlane.xlu0 %4801
      %v4803 = vsel %vm1288, %v4791, 0.0
      %4804 = vadd.xlane.f32.xlu0 %v4803
      %v4805 = vpop.xlane.xlu0 %4804
      %v4806 = vsel %vm1288, %v4792, 0.0
      %4807 = vadd.xlane.f32.xlu0 %v4806
      %v4808 = vpop.xlane.xlu0 %4807
      %v4809 = vsel %vm1288, %v4793, 0.0
      %4810 = vadd.xlane.f32.xlu0 %v4809
      %v4811 = vpop.xlane.xlu0 %4810
      %v4812 = vsel %vm1288, %v4794, 0.0
      %4813 = vadd.xlane.f32.xlu0 %v4812
      %v4814 = vpop.xlane.xlu0 %4813
      %v4815 = vsel %vm1288, %v4795, 0.0
      %4816 = vadd.xlane.f32.xlu0 %v4815
      %v4817 = vpop.xlane.xlu0 %4816
      %v4818 = vsel %vm1288, %v4796, 0.0
      %4819 = vadd.xlane.f32.xlu0 %v4818
      %v4820 = vpop.xlane.xlu0 %4819
      %v4821 = vmul.f32 %v4799, %v2582
      %v4822 = vmul.f32 %v4802, %v2582
      %v4823 = vmul.f32 %v4805, %v2582
      %v4824 = vmul.f32 %v4808, %v2582
      %v4825 = vmul.f32 %v4811, %v2582
      %v4826 = vmul.f32 %v4814, %v2582
      %v4827 = vmul.f32 %v4817, %v2582
      %v4828 = vmul.f32 %v4820, %v2582
      %v4829 = vadd.f32 %v4821, 1e-05
      %v4830 = vadd.f32 %v4822, 1e-05
      %v4831 = vadd.f32 %v4823, 1e-05
      %v4832 = vadd.f32 %v4824, 1e-05
      %v4833 = vadd.f32 %v4825, 1e-05
      %v4834 = vadd.f32 %v4826, 1e-05
      %v4835 = vadd.f32 %v4827, 1e-05
      %v4836 = vadd.f32 %v4828, 1e-05
      %v4837 = vrsqrt.pop %v4829
      %v4838 = vrsqrt.pop %v4830
      %v4839 = vrsqrt.pop %v4831
      %v4840 = vrsqrt.pop %v4832
      %v4841 = vrsqrt.pop %v4833
      %v4842 = vrsqrt.pop %v4834
      %v4843 = vrsqrt.pop %v4835
      %v4844 = vrsqrt.pop %v4836
      %v4845 = vmul.f32 %v4781, %v4837
      %v4846 = vmul.f32 %v4782, %v4838
      %v4847 = vmul.f32 %v4783, %v4839
      %v4848 = vmul.f32 %v4784, %v4840
      %v4849 = vmul.f32 %v4785, %v4841
      %v4850 = vmul.f32 %v4786, %v4842
      %v4851 = vmul.f32 %v4787, %v4843
      %v4852 = vmul.f32 %v4788, %v4844
      %v4854 = vlaneseq
      %v4855 = vshrl.u32 %v4854, 7
      %v4856 = vsub.s32 0, %v4855
      %v4857 = vrot.slane %v4746, %v4856
      %v4859 = vmul.f32 %v4845, %v4857
      %v4860 = vmul.f32 %v4846, %v4857
      %v4861 = vmul.f32 %v4847, %v4857
      %v4862 = vmul.f32 %v4848, %v4857
      %v4863 = vmul.f32 %v4849, %v4857
      %v4864 = vmul.f32 %v4850, %v4857
      %v4865 = vmul.f32 %v4851, %v4857
      %v4866 = vmul.f32 %v4852, %v4857
      %v4868 = vlaneseq
      %v4869 = vshrl.u32 %v4868, 7
      %v4870 = vsub.s32 0, %v4869
      %v4871 = vrot.slane %v4748, %v4870
      %v4873 = vadd.f32 %v4859, %v4871
      %v4874 = vadd.f32 %v4860, %v4871
      %v4875 = vadd.f32 %v4861, %v4871
      %v4876 = vadd.f32 %v4862, %v4871
      %v4877 = vadd.f32 %v4863, %v4871
      %v4878 = vadd.f32 %v4864, %v4871
      %v4879 = vadd.f32 %v4865, %v4871
      %v4880 = vadd.f32 %v4866, %v4871
      %v4881 = vld [vmem:[%s1120] sm:$0x1]
      %v4882 = vld [vmem:[%s1123] sm:$0x1]
      %v4883 = vsel %vm1288, %v4873, 0.0
      %4884 = vadd.xlane.f32.xlu0 %v4883
      %v4885 = vpop.xlane.xlu0 %4884
      %v4886 = vsel %vm1288, %v4874, 0.0
      %4887 = vadd.xlane.f32.xlu0 %v4886
      %v4888 = vpop.xlane.xlu0 %4887
      %v4889 = vsel %vm1288, %v4875, 0.0
      %4890 = vadd.xlane.f32.xlu0 %v4889
      %v4891 = vpop.xlane.xlu0 %4890
      %v4892 = vsel %vm1288, %v4876, 0.0
      %4893 = vadd.xlane.f32.xlu0 %v4892
      %v4894 = vpop.xlane.xlu0 %4893
      %v4895 = vsel %vm1288, %v4877, 0.0
      %4896 = vadd.xlane.f32.xlu0 %v4895
      %v4897 = vpop.xlane.xlu0 %4896
      %v4898 = vsel %vm1288, %v4878, 0.0
      %4899 = vadd.xlane.f32.xlu0 %v4898
      %v4900 = vpop.xlane.xlu0 %4899
      %v4901 = vsel %vm1288, %v4879, 0.0
      %4902 = vadd.xlane.f32.xlu0 %v4901
      %v4903 = vpop.xlane.xlu0 %4902
      %v4904 = vsel %vm1288, %v4880, 0.0
      %4905 = vadd.xlane.f32.xlu0 %v4904
      %v4906 = vpop.xlane.xlu0 %4905
      %v4907 = vmul.f32 %v4885, %v2582
      %v4908 = vmul.f32 %v4888, %v2582
      %v4909 = vmul.f32 %v4891, %v2582
      %v4910 = vmul.f32 %v4894, %v2582
      %v4911 = vmul.f32 %v4897, %v2582
      %v4912 = vmul.f32 %v4900, %v2582
      %v4913 = vmul.f32 %v4903, %v2582
      %v4914 = vmul.f32 %v4906, %v2582
      %v4915 = vsub.f32 %v4873, %v4907
      %v4916 = vsub.f32 %v4874, %v4908
      %v4917 = vsub.f32 %v4875, %v4909
      %v4918 = vsub.f32 %v4876, %v4910
      %v4919 = vsub.f32 %v4877, %v4911
      %v4920 = vsub.f32 %v4878, %v4912
      %v4921 = vsub.f32 %v4879, %v4913
      %v4922 = vsub.f32 %v4880, %v4914
      %v4923 = vmul.f32 %v4915, %v4915
      %v4924 = vmul.f32 %v4916, %v4916
      %v4925 = vmul.f32 %v4917, %v4917
      %v4926 = vmul.f32 %v4918, %v4918
      %v4927 = vmul.f32 %v4919, %v4919
      %v4928 = vmul.f32 %v4920, %v4920
      %v4929 = vmul.f32 %v4921, %v4921
      %v4930 = vmul.f32 %v4922, %v4922
      %v4931 = vsel %vm1288, %v4923, 0.0
      %4932 = vadd.xlane.f32.xlu0 %v4931
      %v4933 = vpop.xlane.xlu0 %4932
      %v4934 = vsel %vm1288, %v4924, 0.0
      %4935 = vadd.xlane.f32.xlu0 %v4934
      %v4936 = vpop.xlane.xlu0 %4935
      %v4937 = vsel %vm1288, %v4925, 0.0
      %4938 = vadd.xlane.f32.xlu0 %v4937
      %v4939 = vpop.xlane.xlu0 %4938
      %v4940 = vsel %vm1288, %v4926, 0.0
      %4941 = vadd.xlane.f32.xlu0 %v4940
      %v4942 = vpop.xlane.xlu0 %4941
      %v4943 = vsel %vm1288, %v4927, 0.0
      %4944 = vadd.xlane.f32.xlu0 %v4943
      %v4945 = vpop.xlane.xlu0 %4944
      %v4946 = vsel %vm1288, %v4928, 0.0
      %4947 = vadd.xlane.f32.xlu0 %v4946
      %v4948 = vpop.xlane.xlu0 %4947
      %v4949 = vsel %vm1288, %v4929, 0.0
      %4950 = vadd.xlane.f32.xlu0 %v4949
      %v4951 = vpop.xlane.xlu0 %4950
      %v4952 = vsel %vm1288, %v4930, 0.0
      %4953 = vadd.xlane.f32.xlu0 %v4952
      %v4954 = vpop.xlane.xlu0 %4953
      %v4955 = vmul.f32 %v4933, %v2582
      %v4956 = vmul.f32 %v4936, %v2582
      %v4957 = vmul.f32 %v4939, %v2582
      %v4958 = vmul.f32 %v4942, %v2582
      %v4959 = vmul.f32 %v4945, %v2582
      %v4960 = vmul.f32 %v4948, %v2582
      %v4961 = vmul.f32 %v4951, %v2582
      %v4962 = vmul.f32 %v4954, %v2582
      %v4963 = vadd.f32 %v4955, 1e-05
      %v4964 = vadd.f32 %v4956, 1e-05
      %v4965 = vadd.f32 %v4957, 1e-05
      %v4966 = vadd.f32 %v4958, 1e-05
      %v4967 = vadd.f32 %v4959, 1e-05
      %v4968 = vadd.f32 %v4960, 1e-05
      %v4969 = vadd.f32 %v4961, 1e-05
      %v4970 = vadd.f32 %v4962, 1e-05
      %v4971 = vrsqrt.pop %v4963
      %v4972 = vrsqrt.pop %v4964
      %v4973 = vrsqrt.pop %v4965
      %v4974 = vrsqrt.pop %v4966
      %v4975 = vrsqrt.pop %v4967
      %v4976 = vrsqrt.pop %v4968
      %v4977 = vrsqrt.pop %v4969
      %v4978 = vrsqrt.pop %v4970
      %v4979 = vmul.f32 %v4915, %v4971
      %v4980 = vmul.f32 %v4916, %v4972
      %v4981 = vmul.f32 %v4917, %v4973
      %v4982 = vmul.f32 %v4918, %v4974
      %v4983 = vmul.f32 %v4919, %v4975
      %v4984 = vmul.f32 %v4920, %v4976
      %v4985 = vmul.f32 %v4921, %v4977
      %v4986 = vmul.f32 %v4922, %v4978
      %v4988 = vlaneseq
      %v4989 = vshrl.u32 %v4988, 7
      %v4990 = vsub.s32 0, %v4989
      %v4991 = vrot.slane %v4881, %v4990
      %v4993 = vmul.f32 %v4979, %v4991
      %v4994 = vmul.f32 %v4980, %v4991
      %v4995 = vmul.f32 %v4981, %v4991
      %v4996 = vmul.f32 %v4982, %v4991
      %v4997 = vmul.f32 %v4983, %v4991
      %v4998 = vmul.f32 %v4984, %v4991
      %v4999 = vmul.f32 %v4985, %v4991
      %v5000 = vmul.f32 %v4986, %v4991
      %v5002 = vlaneseq
      %v5003 = vshrl.u32 %v5002, 7
      %v5004 = vsub.s32 0, %v5003
      %v5005 = vrot.slane %v4882, %v5004
      %v5007 = vadd.f32 %v4993, %v5005
      %v5008 = vadd.f32 %v4994, %v5005
      %v5009 = vadd.f32 %v4995, %v5005
      %v5010 = vadd.f32 %v4996, %v5005
      %v5011 = vadd.f32 %v4997, %v5005
      %v5012 = vadd.f32 %v4998, %v5005
      %v5013 = vadd.f32 %v4999, %v5005
      %v5014 = vadd.f32 %v5000, %v5005
      %v5015 = vld [vmem:[%s1126] sm:$0x1]
      %v5017 = vlaneseq
      %v5018 = vshrl.u32 %v5017, 7
      %v5019 = vsub.s32 0, %v5018
      %v5020 = vrot.slane %v5015, %v5019
      %v5022 = vmul.f32 %v5007, %v5020
      %v5023 = vmul.f32 %v5008, %v5020
      %v5024 = vmul.f32 %v5009, %v5020
      %v5025 = vmul.f32 %v5010, %v5020
      %v5026 = vmul.f32 %v5011, %v5020
      %v5027 = vmul.f32 %v5012, %v5020
      %v5028 = vmul.f32 %v5013, %v5020
      %v5029 = vmul.f32 %v5014, %v5020
      %v5030 = vsel %vm1288, %v5022, 0.0
      %5031 = vadd.xlane.f32.xlu0 %v5030
      %v5032 = vpop.xlane.xlu0 %5031
      %v5033 = vsel %vm1288, %v5023, 0.0
      %5034 = vadd.xlane.f32.xlu0 %v5033
      %v5035 = vpop.xlane.xlu0 %5034
      %v5036 = vsel %vm1288, %v5024, 0.0
      %5037 = vadd.xlane.f32.xlu0 %v5036
      %v5038 = vpop.xlane.xlu0 %5037
      %v5039 = vsel %vm1288, %v5025, 0.0
      %5040 = vadd.xlane.f32.xlu0 %v5039
      %v5041 = vpop.xlane.xlu0 %5040
      %v5042 = vsel %vm1288, %v5026, 0.0
      %5043 = vadd.xlane.f32.xlu0 %v5042
      %v5044 = vpop.xlane.xlu0 %5043
      %v5045 = vsel %vm1288, %v5027, 0.0
      %5046 = vadd.xlane.f32.xlu0 %v5045
      %v5047 = vpop.xlane.xlu0 %5046
      %v5048 = vsel %vm1288, %v5028, 0.0
      %5049 = vadd.xlane.f32.xlu0 %v5048
      %v5050 = vpop.xlane.xlu0 %5049
      %v5051 = vsel %vm1288, %v5029, 0.0
      %5052 = vadd.xlane.f32.xlu0 %v5051
      %v5053 = vpop.xlane.xlu0 %5052
      %v5054 = vld [vmem:[%s1129] sm:$0x1]
      %v5056 = vlaneseq
      %v5057 = vshrl.u32 %v5056, 7
      %v5058 = vsub.s32 0, %v5057
      %v5059 = vrot.slane %v5054, %v5058
      %v5061 = vmul.f32 %v1138, %v5059
      %v5062 = vmul.f32 %v1139, %v5059
      %v5063 = vmul.f32 %v1140, %v5059
      %v5064 = vmul.f32 %v1141, %v5059
      %v5065 = vmul.f32 %v1142, %v5059
      %v5066 = vmul.f32 %v1143, %v5059
      %v5067 = vmul.f32 %v1144, %v5059
      %v5068 = vmul.f32 %v1145, %v5059
      %v5069 = vsel %vm1177, %v5061, 0.0
      %5070 = vadd.xlane.f32.xlu0 %v5069
      %v5071 = vpop.xlane.xlu0 %5070
      %v5072 = vsel %vm1177, %v5062, 0.0
      %5073 = vadd.xlane.f32.xlu0 %v5072
      %v5074 = vpop.xlane.xlu0 %5073
      %v5075 = vsel %vm1177, %v5063, 0.0
      %5076 = vadd.xlane.f32.xlu0 %v5075
      %v5077 = vpop.xlane.xlu0 %5076
      %v5078 = vsel %vm1177, %v5064, 0.0
      %5079 = vadd.xlane.f32.xlu0 %v5078
      %v5080 = vpop.xlane.xlu0 %5079
      %v5081 = vsel %vm1177, %v5065, 0.0
      %5082 = vadd.xlane.f32.xlu0 %v5081
      %v5083 = vpop.xlane.xlu0 %5082
      %v5084 = vsel %vm1177, %v5066, 0.0
      %5085 = vadd.xlane.f32.xlu0 %v5084
      %v5086 = vpop.xlane.xlu0 %5085
      %v5087 = vsel %vm1177, %v5067, 0.0
      %5088 = vadd.xlane.f32.xlu0 %v5087
      %v5089 = vpop.xlane.xlu0 %5088
      %v5090 = vsel %vm1177, %v5068, 0.0
      %5091 = vadd.xlane.f32.xlu0 %v5090
      %v5092 = vpop.xlane.xlu0 %5091
      %v5093 = vadd.f32 %v5032, %v5071
      %v5094 = vadd.f32 %v5035, %v5074
      %v5095 = vadd.f32 %v5038, %v5077
      %v5096 = vadd.f32 %v5041, %v5080
      %v5097 = vadd.f32 %v5044, %v5083
      %v5098 = vadd.f32 %v5047, %v5086
      %v5099 = vadd.f32 %v5050, %v5089
      %v5100 = vadd.f32 %v5053, %v5092
      %v5101 = vld [vmem:[%s1132] sm:$0x1]
      %v5103 = vlaneseq
      %v5104 = vshrl.u32 %v5103, 7
      %v5105 = vsub.s32 0, %v5104
      %v5106 = vrot.slane %v5101, %v5105
      %5107 = vset.pattern.permute.xlu0 0
      %5108 = vperm.xlu0 %5107, %v5106
      %v5109 = vpop.permute.xlu0 %5108
      %v5111 = vadd.f32 %v5093, %v5109
      %v5112 = vadd.f32 %v5094, %v5109
      %v5113 = vadd.f32 %v5095, %v5109
      %v5114 = vadd.f32 %v5096, %v5109
      %v5115 = vadd.f32 %v5097, %v5109
      %v5116 = vadd.f32 %v5098, %v5109
      %v5117 = vadd.f32 %v5099, %v5109
      %v5118 = vadd.f32 %v5100, %v5109
      %v5127 = vlaneseq
      %v5128 = vand.u32 %v5127, 127
      %v5129 = vlaneseq
      %v5130 = vshrl.u32 %v5129, 7
      %v5131 = vsub.s32 %v5128, %v5130
      %v5132 = vrot.slane %v5111, %v5131
      %v5133 = vlaneseq
      %v5134 = vshrl.u32 %v5133, 7
      %v5135 = vsub.s32 %v5128, %v5134
      %v5136 = vrot.slane %v5112, %v5135
      %v5137 = vlaneseq
      %v5138 = vshrl.u32 %v5137, 7
      %v5139 = vsub.s32 %v5128, %v5138
      %v5140 = vrot.slane %v5113, %v5139
      %v5141 = vlaneseq
      %v5142 = vshrl.u32 %v5141, 7
      %v5143 = vsub.s32 %v5128, %v5142
      %v5144 = vrot.slane %v5114, %v5143
      %v5145 = vlaneseq
      %v5146 = vshrl.u32 %v5145, 7
      %v5147 = vsub.s32 %v5128, %v5146
      %v5148 = vrot.slane %v5115, %v5147
      %v5149 = vlaneseq
      %v5150 = vshrl.u32 %v5149, 7
      %v5151 = vsub.s32 %v5128, %v5150
      %v5152 = vrot.slane %v5116, %v5151
      %v5153 = vlaneseq
      %v5154 = vshrl.u32 %v5153, 7
      %v5155 = vsub.s32 %v5128, %v5154
      %v5156 = vrot.slane %v5117, %v5155
      %v5157 = vlaneseq
      %v5158 = vshrl.u32 %v5157, 7
      %v5159 = vsub.s32 %v5128, %v5158
      %v5160 = vrot.slane %v5118, %v5159
      %vm5161 = vcmask 1041409
      %v5162 = vsel %vm5161, %v5136, %v5132
      %vm5163 = vcmask 1042434
      %v5164 = vsel %vm5163, %v5140, %v5162
      %vm5165 = vcmask 1043459
      %v5166 = vsel %vm5165, %v5144, %v5164
      %vm5167 = vcmask 1044484
      %v5168 = vsel %vm5167, %v5148, %v5166
      %vm5169 = vcmask 1045509
      %v5170 = vsel %vm5169, %v5152, %v5168
      %vm5171 = vcmask 1046534
      %v5172 = vsel %vm5171, %v5156, %v5170
      %vm5173 = vcmask 1047559
      %v5174 = vsel %vm5173, %v5160, %v5172
      %vm5176 = vcmask 64512
      %5177 = vst.msk [vmem:[%s1136] sm:$0xff] %vm5176, %v5174
      %p5178 = scmp.lt.s32.totalorder %s36, 1
      %s5179 = scalar_select %p5178, %s36, 1
      %s5180 = smul.addr %s5179, 8
      %s5181 = scalar_lea.vmem %s25, %s5180
      // Predicated region
      $region121: #{critic_transformer_policy_forward.1} parent=119 // pred_check
        %p5182 = pneg %p694
      $region122: #{critic_transformer_policy_forward.1} parent=119 // pred_check_branch
        %5184 = sbr.rel (%p5182) target = $region124
      $region123: #{critic_transformer_policy_forward.1} parent=119 // pred_region
        _
      $region124: #{critic_transformer_policy_forward.1} parent=119 // pred_fallthru
        _
    $region120: #{critic_transformer_policy_forward.1} parent=5 // pred_fallthru
      _
    %p5185 = scmp.le.s32.totalorder 2, %s31
    // Predicated region
    $region125: #{critic_transformer_policy_forward.1} parent=5 // pred_check
      %p5186 = pneg %p5185
    $region126: #{critic_transformer_policy_forward.1} parent=5 // pred_check_branch
      %5188 = sbr.rel (%p5186) target = $region128
    $region127: #{critic_transformer_policy_forward.1} parent=5 // pred_region
      %s5189 = ssub.s32 %s31, 2
      // Predicated region
      $region129: #{critic_transformer_policy_forward.1} parent=127 // pred_check
        %p5190 = pneg %p700
      $region130: #{critic_transformer_policy_forward.1} parent=127 // pred_check_branch
        %5192 = sbr.rel (%p5190) target = $region132
      $region131: #{critic_transformer_policy_forward.1} parent=127 // pred_region
        %p5193 = scmp.lt.s32.totalorder %s37, 1
        %s5194 = scalar_select %p5193, %s37, 1
        %s5195 = smul.addr %s5194, 8
        %s5196 = scalar_lea.vmem %s25, %s5195
      $region132: #{critic_transformer_policy_forward.1} parent=127 // pred_fallthru
        _
    $region128: #{critic_transformer_policy_forward.1} parent=5 // pred_fallthru
      _
  $region6: #{critic_transformer_policy_forward.1} parent=0 // loop_footer
    %s35 = sadd.s32 1, %s31
  $region7: #{critic_transformer_policy_forward.1} parent=0 // loop_footer_branch
    %30 = sbr.rel target = $region3
  $region8: #{critic_transformer_policy_forward.1} parent=0 // loop_exit
    _

</llo_original>
